<compile_context>
chip_gen: v7x
topology: tpu7x:2x2x1
jax: 0.10.0
libtpu: 0.0.40
codegen_flags: <defaults>
</compile_context>

<pallas_src>
import math
from functools import partial

import jax
import jax.numpy as jnp
from jax.experimental import pallas as pl
from jax.experimental.pallas import tpu as pltpu


# ----------------------------------------------------------------------------
# Fused Pallas kernel: entire MultiBERT forward, VMEM-resident.
# ----------------------------------------------------------------------------
def _multibert_kernel(cfg, *refs):
    B, S, Din, nheads = cfg["B"], cfg["S"], cfg["Din"], cfg["nheads"]
    half = Din // 2
    out_ref = refs[-1]
    refs = refs[:-1]

    idx = 0
    x = refs[idx][...].astype(jnp.float32); idx += 1           # (B*S, Din)
    visual = x[:, :half]
    audio = x[:, half:]
    if cfg["use_pe"]:
        pe = refs[idx][...].astype(jnp.float32); idx += 1       # (B*S, half)
        visual = visual + pe
        audio = audio + pe

    def mm(a, w_bf16):
        # MXU matmul: bf16 inputs, f32 accumulation.
        return jnp.dot(a.astype(jnp.bfloat16), w_bf16,
                       preferred_element_type=jnp.float32)

    def layernorm(v, g, b):
        mu = jnp.mean(v, axis=-1, keepdims=True)
        d = v - mu
        var = jnp.mean(d * d, axis=-1, keepdims=True)
        return d * jax.lax.rsqrt(var + 1e-5) * g + b

    def encoder_block(src, q, k, v, i0):
        # weights loaded exactly once per block (hoisted out of all loops)
        (wqkv, bqkv, wo, bo, w1, b1, w2, b2,
         g1, be1, g2, be2) = [refs[i0 + j][...] for j in range(12)]
        D = src.shape[-1]
        hd = D // nheads
        scale = 1.0 / math.sqrt(hd)

        # fused QKV projection on the batch-flattened (B*S, D) activations
        if (q is k) and (k is v):
            qkv = mm(q, wqkv) + bqkv
            Q, K, V = qkv[:, :D], qkv[:, D:2 * D], qkv[:, 2 * D:]
        elif k is v:
            Q = mm(q, wqkv[:, :D]) + bqkv[:, :D]
            kv = mm(k, wqkv[:, D:]) + bqkv[:, D:]
            K, V = kv[:, :D], kv[:, D:]
        else:
            Q = mm(q, wqkv[:, :D]) + bqkv[:, :D]
            K = mm(k, wqkv[:, D:2 * D]) + bqkv[:, D:2 * D]
            V = mm(v, wqkv[:, 2 * D:]) + bqkv[:, 2 * D:]

        # attention core per (batch, head); heads go into a lane-concat buffer
        # so the output projection is one full-K matmul with Wo.
        batch_rows = []
        for b in range(B):                       # static, tiny batch
            r0 = b * S
            head_outs = []
            for h in range(nheads):              # static, tiny head count
                c0 = h * hd
                qh = Q[r0:r0 + S, c0:c0 + hd].astype(jnp.bfloat16)
                kh = K[r0:r0 + S, c0:c0 + hd].astype(jnp.bfloat16)
                vh = V[r0:r0 + S, c0:c0 + hd].astype(jnp.bfloat16)
                s = jax.lax.dot_general(qh, kh, (((1,), (1,)), ((), ())),
                                        preferred_element_type=jnp.float32)
                s = s * scale
                s = s - jnp.max(s, axis=-1, keepdims=True)
                p = jnp.exp(s)
                p = p * pl.reciprocal(jnp.sum(p, axis=-1, keepdims=True),
                                      approx=True)
                head_outs.append(jnp.dot(p.astype(jnp.bfloat16), vh,
                                         preferred_element_type=jnp.float32))
            ho = head_outs[0] if nheads == 1 else jnp.concatenate(head_outs, axis=1)
            batch_rows.append(ho)
        attn = batch_rows[0] if B == 1 else jnp.concatenate(batch_rows, axis=0)
        attn = mm(attn, wo) + bo                 # single (B*S,D)@(D,D) dot

        # residual + norm1, FFN + residual + norm2 (post-norm, ReLU)
        x1 = layernorm(src + attn, g1, be1)
        h1 = jnp.maximum(mm(x1, w1) + b1, 0.0)
        ff = mm(h1, w2) + b2
        return layernorm(x1 + ff, g2, be2)

    # CrossFormer: visual attends with q=audio, audio attends with q=(new) visual
    for _ in range(cfg["n_cross"]):
        visual = encoder_block(visual, audio, visual, visual, idx); idx += 12
        audio = encoder_block(audio, visual, audio, audio, idx); idx += 12

    enc = jnp.concatenate([visual, audio], axis=1)             # (B*S, Din)

    # shared self-attention transformer encoder
    for _ in range(cfg["n_trans"]):
        enc = encoder_block(enc, enc, enc, enc, idx); idx += 12

    # regressor head(s): Linear -> ReLU -> ... -> Linear [-> tanh]
    def run_head(xv, i0, has_tanh):
        nl = cfg["n_head_layers"]
        for i in range(nl):
            w = refs[i0 + 2 * i][...]
            b = refs[i0 + 2 * i + 1][...]
            xv = mm(xv, w) + b
            if i < nl - 1:
                xv = jnp.maximum(xv, 0.0)
        if has_tanh:
            xv = jnp.tanh(xv)
        return xv

    if cfg["task"] == "va":
        off = 2 * cfg["n_head_layers"]
        v_out = run_head(enc, idx, True)
        a_out = run_head(enc, idx + off, True)
        result = jnp.concatenate([v_out, a_out], axis=1)       # lane-dense slab
    else:
        result = run_head(enc, idx, False)

    out_ref[...] = result.astype(out_ref.dtype)


# ----------------------------------------------------------------------------
# JAX wrapper: packs all weights into a flat ref list, one pallas_call.
# ----------------------------------------------------------------------------
def _pack_block(p):
    """wq|wk|wv fused to (D, 3D); matmul weights cast to bf16; rest f32."""
    wqkv = jnp.concatenate([p["wq"], p["wk"], p["wv"]], axis=1).astype(jnp.bfloat16)
    bqkv = jnp.concatenate([p["bq"], p["bk"], p["bv"]], axis=1)
    return [wqkv, bqkv,
            p["wo"].astype(jnp.bfloat16), p["bo"],
            p["w1"].astype(jnp.bfloat16), p["b1"],
            p["w2"].astype(jnp.bfloat16), p["b2"],
            p["g1"], p["beta1"], p["g2"], p["beta2"]]


def multibert_forward(x, params, nheads, use_pe=True, task="exp"):
    """x: (S, B, input_dim) -> (S, B, out_dim)  [or (S, B, 2*out_dim) for 'va']."""
    S, B, Din = x.shape
    half = Din // 2
    xb = jnp.transpose(x, (1, 0, 2)).reshape(B * S, Din)       # one layout change

    flat = [xb]
    if use_pe:
        flat.append(jnp.tile(params["pe"][:S], (B, 1)))         # (B*S, half)

    for vp, ap in zip(params["cf_visual"], params["cf_audio"]):
        flat += _pack_block(vp)
        flat += _pack_block(ap)
    for tp in params["trans"]:
        flat += _pack_block(tp)

    head_list = ([params["v_head"], params["a_head"]] if task == "va"
                 else [params["head"]])
    n_head_layers = len(head_list[0])
    for hl in head_list:
        for w, b in hl:
            flat += [w.astype(jnp.bfloat16), b]

    out_dim = head_list[0][-1][0].shape[1]
    out_cols = out_dim * (2 if task == "va" else 1)

    cfg = dict(B=B, S=S, Din=Din, nheads=nheads,
               n_cross=len(params["cf_visual"]),
               n_trans=len(params["trans"]),
               n_head_layers=n_head_layers,
               use_pe=use_pe, task=task)

    out = pl.pallas_call(
        partial(_multibert_kernel, cfg),
        out_shape=jax.ShapeDtypeStruct((B * S, out_cols), x.dtype),
        in_specs=[pl.BlockSpec(memory_space=pltpu.MemorySpace.VMEM)] * len(flat),
        out_specs=pl.BlockSpec(memory_space=pltpu.MemorySpace.VMEM),
        compiler_params=pltpu.CompilerParams(vmem_limit_bytes=32 * 1024 * 1024),
    )(*flat)
    return jnp.transpose(out.reshape(B, S, out_cols), (1, 0, 2))


# ----------------------------------------------------------------------------
# Sinusoid PE table + deterministic synthetic parameter init
# ----------------------------------------------------------------------------
def get_sinusoid_encoding_table(n_position, d_hid):
    pos = jnp.arange(n_position, dtype=jnp.float32)[:, None]
    i = jnp.arange(d_hid)[None, :]
    angle = pos / jnp.power(10000.0, (2 * (i // 2)).astype(jnp.float32) / d_hid)
    return jnp.where(i % 2 == 0, jnp.sin(angle), jnp.cos(angle))  # (n_position, d_hid)


def _init_linear(key, din, dout):
    w = jax.random.normal(key, (din, dout), jnp.float32) * 0.02
    b = jnp.zeros((1, dout), jnp.float32)
    return w, b


def init_block_params(key, d_model, dff):
    ks = jax.random.split(key, 6)
    wq, bq = _init_linear(ks[0], d_model, d_model)
    wk, bk = _init_linear(ks[1], d_model, d_model)
    wv, bv = _init_linear(ks[2], d_model, d_model)
    wo, bo = _init_linear(ks[3], d_model, d_model)
    w1, b1 = _init_linear(ks[4], d_model, dff)
    w2, b2 = _init_linear(ks[5], dff, d_model)
    return dict(wq=wq, wk=wk, wv=wv, bq=bq, bk=bk, bv=bv, wo=wo, bo=bo,
                w1=w1, b1=b1, w2=w2, b2=b2,
                g1=jnp.ones((1, d_model), jnp.float32),
                beta1=jnp.zeros((1, d_model), jnp.float32),
                g2=jnp.ones((1, d_model), jnp.float32),
                beta2=jnp.zeros((1, d_model), jnp.float32))


def init_head_params(key, inc, dims_list, out_dim):
    dims = [inc] + list(dims_list) + [out_dim]
    layers = []
    for a, b in zip(dims[:-1], dims[1:]):
        key, sub = jax.random.split(key)
        layers.append(_init_linear(sub, a, b))
    return layers


def init_multibert_params(key, input_dim, feedforward_dim, nlayers, seq_len,
                          head_dims, out_dim, use_pe=True, task="exp"):
    half = input_dim // 2
    n_cross = nlayers // 2
    n_trans = nlayers // 2
    keys = jax.random.split(key, 2 * n_cross + n_trans + 2)
    params = dict(
        cf_visual=[init_block_params(keys[i], half, feedforward_dim)
                   for i in range(n_cross)],
        cf_audio=[init_block_params(keys[n_cross + i], half, feedforward_dim)
                  for i in range(n_cross)],
        trans=[init_block_params(keys[2 * n_cross + i], input_dim, feedforward_dim)
               for i in range(n_trans)],
    )
    if task == "va":
        params["v_head"] = init_head_params(keys[-2], input_dim, head_dims, out_dim)
        params["a_head"] = init_head_params(keys[-1], input_dim, head_dims, out_dim)
    else:
        params["head"] = init_head_params(keys[-1], input_dim, head_dims, out_dim)
    if use_pe:
        params["pe"] = get_sinusoid_encoding_table(seq_len, half)
    return params


# ----------------------------------------------------------------------------
if __name__ == "__main__":
    # Small, module-consistent config:
    #   input_dim=32 (crossformer d_model=16), nheads=2, feedforward_dim=64,
    #   nlayers=2 (-> 1 crossformer layer pair + 1 transformer layer),
    #   seq_len=8, batch=2, head_dims=[16], out_dim=4, task != 'va'.
    S, B = 8, 2
    input_dim = 32
    feedforward_dim = 64
    nheads = 2
    nlayers = 2
    head_dims = [16]
    out_dim = 4
    task = "exp"
    use_pe = True

    key = jax.random.PRNGKey(0)
    kparam, kx = jax.random.split(key)
    params = init_multibert_params(kparam, input_dim, feedforward_dim, nlayers,
                                   S, head_dims, out_dim, use_pe=use_pe, task=task)
    x = jax.random.normal(kx, (S, B, input_dim), jnp.float32)

    fwd = jax.jit(lambda xx, pp: multibert_forward(xx, pp, nheads,
                                                   use_pe=use_pe, task=task))
    out = jax.block_until_ready(fwd(x, params))
    assert out.shape == (S, B, out_dim), out.shape
    assert bool(jnp.all(jnp.isfinite(out)))
    print("KERNEL_OK")
</pallas_src>

<mosaic_0001>
module attributes {stable_mosaic.version = 11 : i64} {
  func.func @_multibert_kernel(%arg0: memref<16x32xf32, #tpu.memory_space<vmem>>, %arg1: memref<16x16xf32, #tpu.memory_space<vmem>>, %arg2: memref<16x48xbf16, #tpu.memory_space<vmem>>, %arg3: memref<1x48xf32, #tpu.memory_space<vmem>>, %arg4: memref<16x16xbf16, #tpu.memory_space<vmem>>, %arg5: memref<1x16xf32, #tpu.memory_space<vmem>>, %arg6: memref<16x64xbf16, #tpu.memory_space<vmem>>, %arg7: memref<1x64xf32, #tpu.memory_space<vmem>>, %arg8: memref<64x16xbf16, #tpu.memory_space<vmem>>, %arg9: memref<1x16xf32, #tpu.memory_space<vmem>>, %arg10: memref<1x16xf32, #tpu.memory_space<vmem>>, %arg11: memref<1x16xf32, #tpu.memory_space<vmem>>, %arg12: memref<1x16xf32, #tpu.memory_space<vmem>>, %arg13: memref<1x16xf32, #tpu.memory_space<vmem>>, %arg14: memref<16x48xbf16, #tpu.memory_space<vmem>>, %arg15: memref<1x48xf32, #tpu.memory_space<vmem>>, %arg16: memref<16x16xbf16, #tpu.memory_space<vmem>>, %arg17: memref<1x16xf32, #tpu.memory_space<vmem>>, %arg18: memref<16x64xbf16, #tpu.memory_space<vmem>>, %arg19: memref<1x64xf32, #tpu.memory_space<vmem>>, %arg20: memref<64x16xbf16, #tpu.memory_space<vmem>>, %arg21: memref<1x16xf32, #tpu.memory_space<vmem>>, %arg22: memref<1x16xf32, #tpu.memory_space<vmem>>, %arg23: memref<1x16xf32, #tpu.memory_space<vmem>>, %arg24: memref<1x16xf32, #tpu.memory_space<vmem>>, %arg25: memref<1x16xf32, #tpu.memory_space<vmem>>, %arg26: memref<32x96xbf16, #tpu.memory_space<vmem>>, %arg27: memref<1x96xf32, #tpu.memory_space<vmem>>, %arg28: memref<32x32xbf16, #tpu.memory_space<vmem>>, %arg29: memref<1x32xf32, #tpu.memory_space<vmem>>, %arg30: memref<32x64xbf16, #tpu.memory_space<vmem>>, %arg31: memref<1x64xf32, #tpu.memory_space<vmem>>, %arg32: memref<64x32xbf16, #tpu.memory_space<vmem>>, %arg33: memref<1x32xf32, #tpu.memory_space<vmem>>, %arg34: memref<1x32xf32, #tpu.memory_space<vmem>>, %arg35: memref<1x32xf32, #tpu.memory_space<vmem>>, %arg36: memref<1x32xf32, #tpu.memory_space<vmem>>, %arg37: memref<1x32xf32, #tpu.memory_space<vmem>>, %arg38: memref<32x16xbf16, #tpu.memory_space<vmem>>, %arg39: memref<1x16xf32, #tpu.memory_space<vmem>>, %arg40: memref<16x4xbf16, #tpu.memory_space<vmem>>, %arg41: memref<1x4xf32, #tpu.memory_space<vmem>>, %arg42: memref<16x4xf32, #tpu.memory_space<vmem>>) attributes {dimension_semantics = [], scalar_prefetch = 0 : i64, scratch_operands = 0 : i64, tpu.core_type = #tpu.core_type<tc>} {
    %c0 = arith.constant 0 : index
    %c0_0 = arith.constant 0 : index
    %0 = vector.load %arg0[%c0, %c0_0] : memref<16x32xf32, #tpu.memory_space<vmem>>, vector<16x32xf32>
    %1 = vector.extract_strided_slice %0 {offsets = [0, 0], sizes = [16, 16], strides = [1, 1]} : vector<16x32xf32> to vector<16x16xf32>
    %2 = vector.extract_strided_slice %0 {offsets = [0, 16], sizes = [16, 16], strides = [1, 1]} : vector<16x32xf32> to vector<16x16xf32>
    %c0_1 = arith.constant 0 : index
    %c0_2 = arith.constant 0 : index
    %3 = vector.load %arg1[%c0_1, %c0_2] : memref<16x16xf32, #tpu.memory_space<vmem>>, vector<16x16xf32>
    %4 = arith.addf %1, %3 : vector<16x16xf32>
    %5 = arith.addf %2, %3 : vector<16x16xf32>
    %c0_3 = arith.constant 0 : index
    %c0_4 = arith.constant 0 : index
    %6 = vector.load %arg2[%c0_3, %c0_4] : memref<16x48xbf16, #tpu.memory_space<vmem>>, vector<16x48xbf16>
    %c0_5 = arith.constant 0 : index
    %c0_6 = arith.constant 0 : index
    %7 = vector.load %arg3[%c0_5, %c0_6] : memref<1x48xf32, #tpu.memory_space<vmem>>, vector<1x48xf32>
    %c0_7 = arith.constant 0 : index
    %c0_8 = arith.constant 0 : index
    %8 = vector.load %arg4[%c0_7, %c0_8] : memref<16x16xbf16, #tpu.memory_space<vmem>>, vector<16x16xbf16>
    %c0_9 = arith.constant 0 : index
    %c0_10 = arith.constant 0 : index
    %9 = vector.load %arg5[%c0_9, %c0_10] : memref<1x16xf32, #tpu.memory_space<vmem>>, vector<1x16xf32>
    %c0_11 = arith.constant 0 : index
    %c0_12 = arith.constant 0 : index
    %10 = vector.load %arg6[%c0_11, %c0_12] : memref<16x64xbf16, #tpu.memory_space<vmem>>, vector<16x64xbf16>
    %c0_13 = arith.constant 0 : index
    %c0_14 = arith.constant 0 : index
    %11 = vector.load %arg7[%c0_13, %c0_14] : memref<1x64xf32, #tpu.memory_space<vmem>>, vector<1x64xf32>
    %c0_15 = arith.constant 0 : index
    %c0_16 = arith.constant 0 : index
    %12 = vector.load %arg8[%c0_15, %c0_16] : memref<64x16xbf16, #tpu.memory_space<vmem>>, vector<64x16xbf16>
    %c0_17 = arith.constant 0 : index
    %c0_18 = arith.constant 0 : index
    %13 = vector.load %arg9[%c0_17, %c0_18] : memref<1x16xf32, #tpu.memory_space<vmem>>, vector<1x16xf32>
    %c0_19 = arith.constant 0 : index
    %c0_20 = arith.constant 0 : index
    %14 = vector.load %arg10[%c0_19, %c0_20] : memref<1x16xf32, #tpu.memory_space<vmem>>, vector<1x16xf32>
    %c0_21 = arith.constant 0 : index
    %c0_22 = arith.constant 0 : index
    %15 = vector.load %arg11[%c0_21, %c0_22] : memref<1x16xf32, #tpu.memory_space<vmem>>, vector<1x16xf32>
    %c0_23 = arith.constant 0 : index
    %c0_24 = arith.constant 0 : index
    %16 = vector.load %arg12[%c0_23, %c0_24] : memref<1x16xf32, #tpu.memory_space<vmem>>, vector<1x16xf32>
    %c0_25 = arith.constant 0 : index
    %c0_26 = arith.constant 0 : index
    %17 = vector.load %arg13[%c0_25, %c0_26] : memref<1x16xf32, #tpu.memory_space<vmem>>, vector<1x16xf32>
    %18 = vector.extract_strided_slice %6 {offsets = [0, 0], sizes = [16, 16], strides = [1, 1]} : vector<16x48xbf16> to vector<16x16xbf16>
    %19 = arith.truncf %5 : vector<16x16xf32> to vector<16x16xbf16>
    %cst = arith.constant dense<0.000000e+00> : vector<16x16xf32>
    %20 = tpu.matmul %19, %18, %cst {dimension_numbers = #tpu.dot_dimension_numbers<[1], [0], [0], [1], [0, 0, 1, 1], [], []>} : vector<16x16xbf16>, vector<16x16xbf16>, vector<16x16xf32> -> vector<16x16xf32>
    %21 = vector.extract_strided_slice %7 {offsets = [0, 0], sizes = [1, 16], strides = [1, 1]} : vector<1x48xf32> to vector<1x16xf32>
    %22 = vector.broadcast %21 : vector<1x16xf32> to vector<16x16xf32>
    %23 = arith.addf %20, %22 : vector<16x16xf32>
    %24 = vector.extract_strided_slice %6 {offsets = [0, 16], sizes = [16, 32], strides = [1, 1]} : vector<16x48xbf16> to vector<16x32xbf16>
    %25 = arith.truncf %4 : vector<16x16xf32> to vector<16x16xbf16>
    %cst_27 = arith.constant dense<0.000000e+00> : vector<16x32xf32>
    %26 = tpu.matmul %25, %24, %cst_27 {dimension_numbers = #tpu.dot_dimension_numbers<[1], [0], [0], [1], [0, 0, 1, 1], [], []>} : vector<16x16xbf16>, vector<16x32xbf16>, vector<16x32xf32> -> vector<16x32xf32>
    %27 = vector.extract_strided_slice %7 {offsets = [0, 16], sizes = [1, 32], strides = [1, 1]} : vector<1x48xf32> to vector<1x32xf32>
    %28 = vector.broadcast %27 : vector<1x32xf32> to vector<16x32xf32>
    %29 = arith.addf %26, %28 : vector<16x32xf32>
    %30 = vector.extract_strided_slice %29 {offsets = [0, 0], sizes = [16, 16], strides = [1, 1]} : vector<16x32xf32> to vector<16x16xf32>
    %31 = vector.extract_strided_slice %29 {offsets = [0, 16], sizes = [16, 16], strides = [1, 1]} : vector<16x32xf32> to vector<16x16xf32>
    %32 = vector.extract_strided_slice %23 {offsets = [0, 0], sizes = [8, 8], strides = [1, 1]} : vector<16x16xf32> to vector<8x8xf32>
    %33 = arith.truncf %32 : vector<8x8xf32> to vector<8x8xbf16>
    %34 = vector.extract_strided_slice %30 {offsets = [0, 0], sizes = [8, 8], strides = [1, 1]} : vector<16x16xf32> to vector<8x8xf32>
    %35 = arith.truncf %34 : vector<8x8xf32> to vector<8x8xbf16>
    %36 = vector.extract_strided_slice %31 {offsets = [0, 0], sizes = [8, 8], strides = [1, 1]} : vector<16x16xf32> to vector<8x8xf32>
    %37 = arith.truncf %36 : vector<8x8xf32> to vector<8x8xbf16>
    %cst_28 = arith.constant dense<0.000000e+00> : vector<8x8xf32>
    %38 = tpu.matmul %33, %35, %cst_28 {dimension_numbers = #tpu.dot_dimension_numbers<[1], [1], [0], [0], [0, 0, 1, 0], [], []>} : vector<8x8xbf16>, vector<8x8xbf16>, vector<8x8xf32> -> vector<8x8xf32>
    %cst_29 = arith.constant 0.353553385 : f32
    %39 = vector.broadcast %cst_29 : f32 to vector<8x8xf32>
    %40 = arith.mulf %38, %39 : vector<8x8xf32>
    %cst_30 = arith.constant dense<0xFF800000> : vector<8xf32>
    %41 = vector.multi_reduction <maximumf>, %40, %cst_30 [1] : vector<8x8xf32> to vector<8xf32>
    %42 = vector.shape_cast %41 : vector<8xf32> to vector<8x1xf32>
    %43 = vector.broadcast %42 : vector<8x1xf32> to vector<8x8xf32>
    %44 = arith.subf %40, %43 : vector<8x8xf32>
    %45 = math.exp %44 : vector<8x8xf32>
    %cst_31 = arith.constant dense<0.000000e+00> : vector<8xf32>
    %46 = vector.multi_reduction <add>, %45, %cst_31 [1] : vector<8x8xf32> to vector<8xf32>
    %47 = vector.shape_cast %46 : vector<8xf32> to vector<8x1xf32>
    %48 = tpu.reciprocal %47 {approx = true} : vector<8x1xf32> -> vector<8x1xf32>
    %49 = vector.broadcast %48 : vector<8x1xf32> to vector<8x8xf32>
    %50 = arith.mulf %45, %49 : vector<8x8xf32>
    %51 = arith.truncf %50 : vector<8x8xf32> to vector<8x8xbf16>
    %cst_32 = arith.constant dense<0.000000e+00> : vector<8x8xf32>
    %52 = tpu.matmul %51, %37, %cst_32 {dimension_numbers = #tpu.dot_dimension_numbers<[1], [0], [0], [1], [0, 0, 1, 1], [], []>} : vector<8x8xbf16>, vector<8x8xbf16>, vector<8x8xf32> -> vector<8x8xf32>
    %53 = vector.extract_strided_slice %23 {offsets = [0, 8], sizes = [8, 8], strides = [1, 1]} : vector<16x16xf32> to vector<8x8xf32>
    %54 = arith.truncf %53 : vector<8x8xf32> to vector<8x8xbf16>
    %55 = vector.extract_strided_slice %30 {offsets = [0, 8], sizes = [8, 8], strides = [1, 1]} : vector<16x16xf32> to vector<8x8xf32>
    %56 = arith.truncf %55 : vector<8x8xf32> to vector<8x8xbf16>
    %57 = vector.extract_strided_slice %31 {offsets = [0, 8], sizes = [8, 8], strides = [1, 1]} : vector<16x16xf32> to vector<8x8xf32>
    %58 = arith.truncf %57 : vector<8x8xf32> to vector<8x8xbf16>
    %cst_33 = arith.constant dense<0.000000e+00> : vector<8x8xf32>
    %59 = tpu.matmul %54, %56, %cst_33 {dimension_numbers = #tpu.dot_dimension_numbers<[1], [1], [0], [0], [0, 0, 1, 0], [], []>} : vector<8x8xbf16>, vector<8x8xbf16>, vector<8x8xf32> -> vector<8x8xf32>
    %cst_34 = arith.constant 0.353553385 : f32
    %60 = vector.broadcast %cst_34 : f32 to vector<8x8xf32>
    %61 = arith.mulf %59, %60 : vector<8x8xf32>
    %cst_35 = arith.constant dense<0xFF800000> : vector<8xf32>
    %62 = vector.multi_reduction <maximumf>, %61, %cst_35 [1] : vector<8x8xf32> to vector<8xf32>
    %63 = vector.shape_cast %62 : vector<8xf32> to vector<8x1xf32>
    %64 = vector.broadcast %63 : vector<8x1xf32> to vector<8x8xf32>
    %65 = arith.subf %61, %64 : vector<8x8xf32>
    %66 = math.exp %65 : vector<8x8xf32>
    %cst_36 = arith.constant dense<0.000000e+00> : vector<8xf32>
    %67 = vector.multi_reduction <add>, %66, %cst_36 [1] : vector<8x8xf32> to vector<8xf32>
    %68 = vector.shape_cast %67 : vector<8xf32> to vector<8x1xf32>
    %69 = tpu.reciprocal %68 {approx = true} : vector<8x1xf32> -> vector<8x1xf32>
    %70 = vector.broadcast %69 : vector<8x1xf32> to vector<8x8xf32>
    %71 = arith.mulf %66, %70 : vector<8x8xf32>
    %72 = arith.truncf %71 : vector<8x8xf32> to vector<8x8xbf16>
    %cst_37 = arith.constant dense<0.000000e+00> : vector<8x8xf32>
    %73 = tpu.matmul %72, %58, %cst_37 {dimension_numbers = #tpu.dot_dimension_numbers<[1], [0], [0], [1], [0, 0, 1, 1], [], []>} : vector<8x8xbf16>, vector<8x8xbf16>, vector<8x8xf32> -> vector<8x8xf32>
    %74 = tpu.concatenate %52, %73 in 1 : vector<8x8xf32>, vector<8x8xf32> -> vector<8x16xf32>
    %75 = vector.extract_strided_slice %23 {offsets = [8, 0], sizes = [8, 8], strides = [1, 1]} : vector<16x16xf32> to vector<8x8xf32>
    %76 = arith.truncf %75 : vector<8x8xf32> to vector<8x8xbf16>
    %77 = vector.extract_strided_slice %30 {offsets = [8, 0], sizes = [8, 8], strides = [1, 1]} : vector<16x16xf32> to vector<8x8xf32>
    %78 = arith.truncf %77 : vector<8x8xf32> to vector<8x8xbf16>
    %79 = vector.extract_strided_slice %31 {offsets = [8, 0], sizes = [8, 8], strides = [1, 1]} : vector<16x16xf32> to vector<8x8xf32>
    %80 = arith.truncf %79 : vector<8x8xf32> to vector<8x8xbf16>
    %cst_38 = arith.constant dense<0.000000e+00> : vector<8x8xf32>
    %81 = tpu.matmul %76, %78, %cst_38 {dimension_numbers = #tpu.dot_dimension_numbers<[1], [1], [0], [0], [0, 0, 1, 0], [], []>} : vector<8x8xbf16>, vector<8x8xbf16>, vector<8x8xf32> -> vector<8x8xf32>
    %cst_39 = arith.constant 0.353553385 : f32
    %82 = vector.broadcast %cst_39 : f32 to vector<8x8xf32>
    %83 = arith.mulf %81, %82 : vector<8x8xf32>
    %cst_40 = arith.constant dense<0xFF800000> : vector<8xf32>
    %84 = vector.multi_reduction <maximumf>, %83, %cst_40 [1] : vector<8x8xf32> to vector<8xf32>
    %85 = vector.shape_cast %84 : vector<8xf32> to vector<8x1xf32>
    %86 = vector.broadcast %85 : vector<8x1xf32> to vector<8x8xf32>
    %87 = arith.subf %83, %86 : vector<8x8xf32>
    %88 = math.exp %87 : vector<8x8xf32>
    %cst_41 = arith.constant dense<0.000000e+00> : vector<8xf32>
    %89 = vector.multi_reduction <add>, %88, %cst_41 [1] : vector<8x8xf32> to vector<8xf32>
    %90 = vector.shape_cast %89 : vector<8xf32> to vector<8x1xf32>
    %91 = tpu.reciprocal %90 {approx = true} : vector<8x1xf32> -> vector<8x1xf32>
    %92 = vector.broadcast %91 : vector<8x1xf32> to vector<8x8xf32>
    %93 = arith.mulf %88, %92 : vector<8x8xf32>
    %94 = arith.truncf %93 : vector<8x8xf32> to vector<8x8xbf16>
    %cst_42 = arith.constant dense<0.000000e+00> : vector<8x8xf32>
    %95 = tpu.matmul %94, %80, %cst_42 {dimension_numbers = #tpu.dot_dimension_numbers<[1], [0], [0], [1], [0, 0, 1, 1], [], []>} : vector<8x8xbf16>, vector<8x8xbf16>, vector<8x8xf32> -> vector<8x8xf32>
    %96 = vector.extract_strided_slice %23 {offsets = [8, 8], sizes = [8, 8], strides = [1, 1]} : vector<16x16xf32> to vector<8x8xf32>
    %97 = arith.truncf %96 : vector<8x8xf32> to vector<8x8xbf16>
    %98 = vector.extract_strided_slice %30 {offsets = [8, 8], sizes = [8, 8], strides = [1, 1]} : vector<16x16xf32> to vector<8x8xf32>
    %99 = arith.truncf %98 : vector<8x8xf32> to vector<8x8xbf16>
    %100 = vector.extract_strided_slice %31 {offsets = [8, 8], sizes = [8, 8], strides = [1, 1]} : vector<16x16xf32> to vector<8x8xf32>
    %101 = arith.truncf %100 : vector<8x8xf32> to vector<8x8xbf16>
    %cst_43 = arith.constant dense<0.000000e+00> : vector<8x8xf32>
    %102 = tpu.matmul %97, %99, %cst_43 {dimension_numbers = #tpu.dot_dimension_numbers<[1], [1], [0], [0], [0, 0, 1, 0], [], []>} : vector<8x8xbf16>, vector<8x8xbf16>, vector<8x8xf32> -> vector<8x8xf32>
    %cst_44 = arith.constant 0.353553385 : f32
    %103 = vector.broadcast %cst_44 : f32 to vector<8x8xf32>
    %104 = arith.mulf %102, %103 : vector<8x8xf32>
    %cst_45 = arith.constant dense<0xFF800000> : vector<8xf32>
    %105 = vector.multi_reduction <maximumf>, %104, %cst_45 [1] : vector<8x8xf32> to vector<8xf32>
    %106 = vector.shape_cast %105 : vector<8xf32> to vector<8x1xf32>
    %107 = vector.broadcast %106 : vector<8x1xf32> to vector<8x8xf32>
    %108 = arith.subf %104, %107 : vector<8x8xf32>
    %109 = math.exp %108 : vector<8x8xf32>
    %cst_46 = arith.constant dense<0.000000e+00> : vector<8xf32>
    %110 = vector.multi_reduction <add>, %109, %cst_46 [1] : vector<8x8xf32> to vector<8xf32>
    %111 = vector.shape_cast %110 : vector<8xf32> to vector<8x1xf32>
    %112 = tpu.reciprocal %111 {approx = true} : vector<8x1xf32> -> vector<8x1xf32>
    %113 = vector.broadcast %112 : vector<8x1xf32> to vector<8x8xf32>
    %114 = arith.mulf %109, %113 : vector<8x8xf32>
    %115 = arith.truncf %114 : vector<8x8xf32> to vector<8x8xbf16>
    %cst_47 = arith.constant dense<0.000000e+00> : vector<8x8xf32>
    %116 = tpu.matmul %115, %101, %cst_47 {dimension_numbers = #tpu.dot_dimension_numbers<[1], [0], [0], [1], [0, 0, 1, 1], [], []>} : vector<8x8xbf16>, vector<8x8xbf16>, vector<8x8xf32> -> vector<8x8xf32>
    %117 = tpu.concatenate %95, %116 in 1 : vector<8x8xf32>, vector<8x8xf32> -> vector<8x16xf32>
    %118 = tpu.concatenate %74, %117 in 0 : vector<8x16xf32>, vector<8x16xf32> -> vector<16x16xf32>
    %119 = arith.truncf %118 : vector<16x16xf32> to vector<16x16xbf16>
    %cst_48 = arith.constant dense<0.000000e+00> : vector<16x16xf32>
    %120 = tpu.matmul %119, %8, %cst_48 {dimension_numbers = #tpu.dot_dimension_numbers<[1], [0], [0], [1], [0, 0, 1, 1], [], []>} : vector<16x16xbf16>, vector<16x16xbf16>, vector<16x16xf32> -> vector<16x16xf32>
    %121 = vector.broadcast %9 : vector<1x16xf32> to vector<16x16xf32>
    %122 = arith.addf %120, %121 : vector<16x16xf32>
    %123 = arith.addf %4, %122 : vector<16x16xf32>
    %cst_49 = arith.constant dense<0.000000e+00> : vector<16xf32>
    %124 = vector.multi_reduction <add>, %123, %cst_49 [1] : vector<16x16xf32> to vector<16xf32>
    %125 = vector.shape_cast %124 : vector<16xf32> to vector<16x1xf32>
    %cst_50 = arith.constant 1.600000e+01 : f32
    %126 = vector.broadcast %cst_50 : f32 to vector<16x1xf32>
    %127 = arith.divf %125, %126 : vector<16x1xf32>
    %128 = vector.broadcast %127 : vector<16x1xf32> to vector<16x16xf32>
    %129 = arith.subf %123, %128 : vector<16x16xf32>
    %130 = arith.mulf %129, %129 : vector<16x16xf32>
    %cst_51 = arith.constant dense<0.000000e+00> : vector<16xf32>
    %131 = vector.multi_reduction <add>, %130, %cst_51 [1] : vector<16x16xf32> to vector<16xf32>
    %132 = vector.shape_cast %131 : vector<16xf32> to vector<16x1xf32>
    %cst_52 = arith.constant 1.600000e+01 : f32
    %133 = vector.broadcast %cst_52 : f32 to vector<16x1xf32>
    %134 = arith.divf %132, %133 : vector<16x1xf32>
    %cst_53 = arith.constant 9.99999974E-6 : f32
    %135 = vector.broadcast %cst_53 : f32 to vector<16x1xf32>
    %136 = arith.addf %134, %135 : vector<16x1xf32>
    %137 = math.rsqrt %136 : vector<16x1xf32>
    %138 = vector.broadcast %137 : vector<16x1xf32> to vector<16x16xf32>
    %139 = arith.mulf %129, %138 : vector<16x16xf32>
    %140 = vector.broadcast %14 : vector<1x16xf32> to vector<16x16xf32>
    %141 = arith.mulf %139, %140 : vector<16x16xf32>
    %142 = vector.broadcast %15 : vector<1x16xf32> to vector<16x16xf32>
    %143 = arith.addf %141, %142 : vector<16x16xf32>
    %144 = arith.truncf %143 : vector<16x16xf32> to vector<16x16xbf16>
    %cst_54 = arith.constant dense<0.000000e+00> : vector<16x64xf32>
    %145 = tpu.matmul %144, %10, %cst_54 {dimension_numbers = #tpu.dot_dimension_numbers<[1], [0], [0], [1], [0, 0, 1, 1], [], []>} : vector<16x16xbf16>, vector<16x64xbf16>, vector<16x64xf32> -> vector<16x64xf32>
    %146 = vector.broadcast %11 : vector<1x64xf32> to vector<16x64xf32>
    %147 = arith.addf %145, %146 : vector<16x64xf32>
    %cst_55 = arith.constant 0.000000e+00 : f32
    %148 = vector.broadcast %cst_55 : f32 to vector<16x64xf32>
    %149 = arith.maximumf %147, %148 : vector<16x64xf32>
    %150 = arith.truncf %149 : vector<16x64xf32> to vector<16x64xbf16>
    %cst_56 = arith.constant dense<0.000000e+00> : vector<16x16xf32>
    %151 = tpu.matmul %150, %12, %cst_56 {dimension_numbers = #tpu.dot_dimension_numbers<[1], [0], [0], [1], [0, 0, 1, 1], [], []>} : vector<16x64xbf16>, vector<64x16xbf16>, vector<16x16xf32> -> vector<16x16xf32>
    %152 = vector.broadcast %13 : vector<1x16xf32> to vector<16x16xf32>
    %153 = arith.addf %151, %152 : vector<16x16xf32>
    %154 = arith.addf %143, %153 : vector<16x16xf32>
    %cst_57 = arith.constant dense<0.000000e+00> : vector<16xf32>
    %155 = vector.multi_reduction <add>, %154, %cst_57 [1] : vector<16x16xf32> to vector<16xf32>
    %156 = vector.shape_cast %155 : vector<16xf32> to vector<16x1xf32>
    %cst_58 = arith.constant 1.600000e+01 : f32
    %157 = vector.broadcast %cst_58 : f32 to vector<16x1xf32>
    %158 = arith.divf %156, %157 : vector<16x1xf32>
    %159 = vector.broadcast %158 : vector<16x1xf32> to vector<16x16xf32>
    %160 = arith.subf %154, %159 : vector<16x16xf32>
    %161 = arith.mulf %160, %160 : vector<16x16xf32>
    %cst_59 = arith.constant dense<0.000000e+00> : vector<16xf32>
    %162 = vector.multi_reduction <add>, %161, %cst_59 [1] : vector<16x16xf32> to vector<16xf32>
    %163 = vector.shape_cast %162 : vector<16xf32> to vector<16x1xf32>
    %cst_60 = arith.constant 1.600000e+01 : f32
    %164 = vector.broadcast %cst_60 : f32 to vector<16x1xf32>
    %165 = arith.divf %163, %164 : vector<16x1xf32>
    %cst_61 = arith.constant 9.99999974E-6 : f32
    %166 = vector.broadcast %cst_61 : f32 to vector<16x1xf32>
    %167 = arith.addf %165, %166 : vector<16x1xf32>
    %168 = math.rsqrt %167 : vector<16x1xf32>
    %169 = vector.broadcast %168 : vector<16x1xf32> to vector<16x16xf32>
    %170 = arith.mulf %160, %169 : vector<16x16xf32>
    %171 = vector.broadcast %16 : vector<1x16xf32> to vector<16x16xf32>
    %172 = arith.mulf %170, %171 : vector<16x16xf32>
    %173 = vector.broadcast %17 : vector<1x16xf32> to vector<16x16xf32>
    %174 = arith.addf %172, %173 : vector<16x16xf32>
    %c0_62 = arith.constant 0 : index
    %c0_63 = arith.constant 0 : index
    %175 = vector.load %arg14[%c0_62, %c0_63] : memref<16x48xbf16, #tpu.memory_space<vmem>>, vector<16x48xbf16>
    %c0_64 = arith.constant 0 : index
    %c0_65 = arith.constant 0 : index
    %176 = vector.load %arg15[%c0_64, %c0_65] : memref<1x48xf32, #tpu.memory_space<vmem>>, vector<1x48xf32>
    %c0_66 = arith.constant 0 : index
    %c0_67 = arith.constant 0 : index
    %177 = vector.load %arg16[%c0_66, %c0_67] : memref<16x16xbf16, #tpu.memory_space<vmem>>, vector<16x16xbf16>
    %c0_68 = arith.constant 0 : index
    %c0_69 = arith.constant 0 : index
    %178 = vector.load %arg17[%c0_68, %c0_69] : memref<1x16xf32, #tpu.memory_space<vmem>>, vector<1x16xf32>
    %c0_70 = arith.constant 0 : index
    %c0_71 = arith.constant 0 : index
    %179 = vector.load %arg18[%c0_70, %c0_71] : memref<16x64xbf16, #tpu.memory_space<vmem>>, vector<16x64xbf16>
    %c0_72 = arith.constant 0 : index
    %c0_73 = arith.constant 0 : index
    %180 = vector.load %arg19[%c0_72, %c0_73] : memref<1x64xf32, #tpu.memory_space<vmem>>, vector<1x64xf32>
    %c0_74 = arith.constant 0 : index
    %c0_75 = arith.constant 0 : index
    %181 = vector.load %arg20[%c0_74, %c0_75] : memref<64x16xbf16, #tpu.memory_space<vmem>>, vector<64x16xbf16>
    %c0_76 = arith.constant 0 : index
    %c0_77 = arith.constant 0 : index
    %182 = vector.load %arg21[%c0_76, %c0_77] : memref<1x16xf32, #tpu.memory_space<vmem>>, vector<1x16xf32>
    %c0_78 = arith.constant 0 : index
    %c0_79 = arith.constant 0 : index
    %183 = vector.load %arg22[%c0_78, %c0_79] : memref<1x16xf32, #tpu.memory_space<vmem>>, vector<1x16xf32>
    %c0_80 = arith.constant 0 : index
    %c0_81 = arith.constant 0 : index
    %184 = vector.load %arg23[%c0_80, %c0_81] : memref<1x16xf32, #tpu.memory_space<vmem>>, vector<1x16xf32>
    %c0_82 = arith.constant 0 : index
    %c0_83 = arith.constant 0 : index
    %185 = vector.load %arg24[%c0_82, %c0_83] : memref<1x16xf32, #tpu.memory_space<vmem>>, vector<1x16xf32>
    %c0_84 = arith.constant 0 : index
    %c0_85 = arith.constant 0 : index
    %186 = vector.load %arg25[%c0_84, %c0_85] : memref<1x16xf32, #tpu.memory_space<vmem>>, vector<1x16xf32>
    %187 = vector.extract_strided_slice %175 {offsets = [0, 0], sizes = [16, 16], strides = [1, 1]} : vector<16x48xbf16> to vector<16x16xbf16>
    %188 = arith.truncf %174 : vector<16x16xf32> to vector<16x16xbf16>
    %cst_86 = arith.constant dense<0.000000e+00> : vector<16x16xf32>
    %189 = tpu.matmul %188, %187, %cst_86 {dimension_numbers = #tpu.dot_dimension_numbers<[1], [0], [0], [1], [0, 0, 1, 1], [], []>} : vector<16x16xbf16>, vector<16x16xbf16>, vector<16x16xf32> -> vector<16x16xf32>
    %190 = vector.extract_strided_slice %176 {offsets = [0, 0], sizes = [1, 16], strides = [1, 1]} : vector<1x48xf32> to vector<1x16xf32>
    %191 = vector.broadcast %190 : vector<1x16xf32> to vector<16x16xf32>
    %192 = arith.addf %189, %191 : vector<16x16xf32>
    %193 = vector.extract_strided_slice %175 {offsets = [0, 16], sizes = [16, 32], strides = [1, 1]} : vector<16x48xbf16> to vector<16x32xbf16>
    %194 = arith.truncf %5 : vector<16x16xf32> to vector<16x16xbf16>
    %cst_87 = arith.constant dense<0.000000e+00> : vector<16x32xf32>
    %195 = tpu.matmul %194, %193, %cst_87 {dimension_numbers = #tpu.dot_dimension_numbers<[1], [0], [0], [1], [0, 0, 1, 1], [], []>} : vector<16x16xbf16>, vector<16x32xbf16>, vector<16x32xf32> -> vector<16x32xf32>
    %196 = vector.extract_strided_slice %176 {offsets = [0, 16], sizes = [1, 32], strides = [1, 1]} : vector<1x48xf32> to vector<1x32xf32>
    %197 = vector.broadcast %196 : vector<1x32xf32> to vector<16x32xf32>
    %198 = arith.addf %195, %197 : vector<16x32xf32>
    %199 = vector.extract_strided_slice %198 {offsets = [0, 0], sizes = [16, 16], strides = [1, 1]} : vector<16x32xf32> to vector<16x16xf32>
    %200 = vector.extract_strided_slice %198 {offsets = [0, 16], sizes = [16, 16], strides = [1, 1]} : vector<16x32xf32> to vector<16x16xf32>
    %201 = vector.extract_strided_slice %192 {offsets = [0, 0], sizes = [8, 8], strides = [1, 1]} : vector<16x16xf32> to vector<8x8xf32>
    %202 = arith.truncf %201 : vector<8x8xf32> to vector<8x8xbf16>
    %203 = vector.extract_strided_slice %199 {offsets = [0, 0], sizes = [8, 8], strides = [1, 1]} : vector<16x16xf32> to vector<8x8xf32>
    %204 = arith.truncf %203 : vector<8x8xf32> to vector<8x8xbf16>
    %205 = vector.extract_strided_slice %200 {offsets = [0, 0], sizes = [8, 8], strides = [1, 1]} : vector<16x16xf32> to vector<8x8xf32>
    %206 = arith.truncf %205 : vector<8x8xf32> to vector<8x8xbf16>
    %cst_88 = arith.constant dense<0.000000e+00> : vector<8x8xf32>
    %207 = tpu.matmul %202, %204, %cst_88 {dimension_numbers = #tpu.dot_dimension_numbers<[1], [1], [0], [0], [0, 0, 1, 0], [], []>} : vector<8x8xbf16>, vector<8x8xbf16>, vector<8x8xf32> -> vector<8x8xf32>
    %cst_89 = arith.constant 0.353553385 : f32
    %208 = vector.broadcast %cst_89 : f32 to vector<8x8xf32>
    %209 = arith.mulf %207, %208 : vector<8x8xf32>
    %cst_90 = arith.constant dense<0xFF800000> : vector<8xf32>
    %210 = vector.multi_reduction <maximumf>, %209, %cst_90 [1] : vector<8x8xf32> to vector<8xf32>
    %211 = vector.shape_cast %210 : vector<8xf32> to vector<8x1xf32>
    %212 = vector.broadcast %211 : vector<8x1xf32> to vector<8x8xf32>
    %213 = arith.subf %209, %212 : vector<8x8xf32>
    %214 = math.exp %213 : vector<8x8xf32>
    %cst_91 = arith.constant dense<0.000000e+00> : vector<8xf32>
    %215 = vector.multi_reduction <add>, %214, %cst_91 [1] : vector<8x8xf32> to vector<8xf32>
    %216 = vector.shape_cast %215 : vector<8xf32> to vector<8x1xf32>
    %217 = tpu.reciprocal %216 {approx = true} : vector<8x1xf32> -> vector<8x1xf32>
    %218 = vector.broadcast %217 : vector<8x1xf32> to vector<8x8xf32>
    %219 = arith.mulf %214, %218 : vector<8x8xf32>
    %220 = arith.truncf %219 : vector<8x8xf32> to vector<8x8xbf16>
    %cst_92 = arith.constant dense<0.000000e+00> : vector<8x8xf32>
    %221 = tpu.matmul %220, %206, %cst_92 {dimension_numbers = #tpu.dot_dimension_numbers<[1], [0], [0], [1], [0, 0, 1, 1], [], []>} : vector<8x8xbf16>, vector<8x8xbf16>, vector<8x8xf32> -> vector<8x8xf32>
    %222 = vector.extract_strided_slice %192 {offsets = [0, 8], sizes = [8, 8], strides = [1, 1]} : vector<16x16xf32> to vector<8x8xf32>
    %223 = arith.truncf %222 : vector<8x8xf32> to vector<8x8xbf16>
    %224 = vector.extract_strided_slice %199 {offsets = [0, 8], sizes = [8, 8], strides = [1, 1]} : vector<16x16xf32> to vector<8x8xf32>
    %225 = arith.truncf %224 : vector<8x8xf32> to vector<8x8xbf16>
    %226 = vector.extract_strided_slice %200 {offsets = [0, 8], sizes = [8, 8], strides = [1, 1]} : vector<16x16xf32> to vector<8x8xf32>
    %227 = arith.truncf %226 : vector<8x8xf32> to vector<8x8xbf16>
    %cst_93 = arith.constant dense<0.000000e+00> : vector<8x8xf32>
    %228 = tpu.matmul %223, %225, %cst_93 {dimension_numbers = #tpu.dot_dimension_numbers<[1], [1], [0], [0], [0, 0, 1, 0], [], []>} : vector<8x8xbf16>, vector<8x8xbf16>, vector<8x8xf32> -> vector<8x8xf32>
    %cst_94 = arith.constant 0.353553385 : f32
    %229 = vector.broadcast %cst_94 : f32 to vector<8x8xf32>
    %230 = arith.mulf %228, %229 : vector<8x8xf32>
    %cst_95 = arith.constant dense<0xFF800000> : vector<8xf32>
    %231 = vector.multi_reduction <maximumf>, %230, %cst_95 [1] : vector<8x8xf32> to vector<8xf32>
    %232 = vector.shape_cast %231 : vector<8xf32> to vector<8x1xf32>
    %233 = vector.broadcast %232 : vector<8x1xf32> to vector<8x8xf32>
    %234 = arith.subf %230, %233 : vector<8x8xf32>
    %235 = math.exp %234 : vector<8x8xf32>
    %cst_96 = arith.constant dense<0.000000e+00> : vector<8xf32>
    %236 = vector.multi_reduction <add>, %235, %cst_96 [1] : vector<8x8xf32> to vector<8xf32>
    %237 = vector.shape_cast %236 : vector<8xf32> to vector<8x1xf32>
    %238 = tpu.reciprocal %237 {approx = true} : vector<8x1xf32> -> vector<8x1xf32>
    %239 = vector.broadcast %238 : vector<8x1xf32> to vector<8x8xf32>
    %240 = arith.mulf %235, %239 : vector<8x8xf32>
    %241 = arith.truncf %240 : vector<8x8xf32> to vector<8x8xbf16>
    %cst_97 = arith.constant dense<0.000000e+00> : vector<8x8xf32>
    %242 = tpu.matmul %241, %227, %cst_97 {dimension_numbers = #tpu.dot_dimension_numbers<[1], [0], [0], [1], [0, 0, 1, 1], [], []>} : vector<8x8xbf16>, vector<8x8xbf16>, vector<8x8xf32> -> vector<8x8xf32>
    %243 = tpu.concatenate %221, %242 in 1 : vector<8x8xf32>, vector<8x8xf32> -> vector<8x16xf32>
    %244 = vector.extract_strided_slice %192 {offsets = [8, 0], sizes = [8, 8], strides = [1, 1]} : vector<16x16xf32> to vector<8x8xf32>
    %245 = arith.truncf %244 : vector<8x8xf32> to vector<8x8xbf16>
    %246 = vector.extract_strided_slice %199 {offsets = [8, 0], sizes = [8, 8], strides = [1, 1]} : vector<16x16xf32> to vector<8x8xf32>
    %247 = arith.truncf %246 : vector<8x8xf32> to vector<8x8xbf16>
    %248 = vector.extract_strided_slice %200 {offsets = [8, 0], sizes = [8, 8], strides = [1, 1]} : vector<16x16xf32> to vector<8x8xf32>
    %249 = arith.truncf %248 : vector<8x8xf32> to vector<8x8xbf16>
    %cst_98 = arith.constant dense<0.000000e+00> : vector<8x8xf32>
    %250 = tpu.matmul %245, %247, %cst_98 {dimension_numbers = #tpu.dot_dimension_numbers<[1], [1], [0], [0], [0, 0, 1, 0], [], []>} : vector<8x8xbf16>, vector<8x8xbf16>, vector<8x8xf32> -> vector<8x8xf32>
    %cst_99 = arith.constant 0.353553385 : f32
    %251 = vector.broadcast %cst_99 : f32 to vector<8x8xf32>
    %252 = arith.mulf %250, %251 : vector<8x8xf32>
    %cst_100 = arith.constant dense<0xFF800000> : vector<8xf32>
    %253 = vector.multi_reduction <maximumf>, %252, %cst_100 [1] : vector<8x8xf32> to vector<8xf32>
    %254 = vector.shape_cast %253 : vector<8xf32> to vector<8x1xf32>
    %255 = vector.broadcast %254 : vector<8x1xf32> to vector<8x8xf32>
    %256 = arith.subf %252, %255 : vector<8x8xf32>
    %257 = math.exp %256 : vector<8x8xf32>
    %cst_101 = arith.constant dense<0.000000e+00> : vector<8xf32>
    %258 = vector.multi_reduction <add>, %257, %cst_101 [1] : vector<8x8xf32> to vector<8xf32>
    %259 = vector.shape_cast %258 : vector<8xf32> to vector<8x1xf32>
    %260 = tpu.reciprocal %259 {approx = true} : vector<8x1xf32> -> vector<8x1xf32>
    %261 = vector.broadcast %260 : vector<8x1xf32> to vector<8x8xf32>
    %262 = arith.mulf %257, %261 : vector<8x8xf32>
    %263 = arith.truncf %262 : vector<8x8xf32> to vector<8x8xbf16>
    %cst_102 = arith.constant dense<0.000000e+00> : vector<8x8xf32>
    %264 = tpu.matmul %263, %249, %cst_102 {dimension_numbers = #tpu.dot_dimension_numbers<[1], [0], [0], [1], [0, 0, 1, 1], [], []>} : vector<8x8xbf16>, vector<8x8xbf16>, vector<8x8xf32> -> vector<8x8xf32>
    %265 = vector.extract_strided_slice %192 {offsets = [8, 8], sizes = [8, 8], strides = [1, 1]} : vector<16x16xf32> to vector<8x8xf32>
    %266 = arith.truncf %265 : vector<8x8xf32> to vector<8x8xbf16>
    %267 = vector.extract_strided_slice %199 {offsets = [8, 8], sizes = [8, 8], strides = [1, 1]} : vector<16x16xf32> to vector<8x8xf32>
    %268 = arith.truncf %267 : vector<8x8xf32> to vector<8x8xbf16>
    %269 = vector.extract_strided_slice %200 {offsets = [8, 8], sizes = [8, 8], strides = [1, 1]} : vector<16x16xf32> to vector<8x8xf32>
    %270 = arith.truncf %269 : vector<8x8xf32> to vector<8x8xbf16>
    %cst_103 = arith.constant dense<0.000000e+00> : vector<8x8xf32>
    %271 = tpu.matmul %266, %268, %cst_103 {dimension_numbers = #tpu.dot_dimension_numbers<[1], [1], [0], [0], [0, 0, 1, 0], [], []>} : vector<8x8xbf16>, vector<8x8xbf16>, vector<8x8xf32> -> vector<8x8xf32>
    %cst_104 = arith.constant 0.353553385 : f32
    %272 = vector.broadcast %cst_104 : f32 to vector<8x8xf32>
    %273 = arith.mulf %271, %272 : vector<8x8xf32>
    %cst_105 = arith.constant dense<0xFF800000> : vector<8xf32>
    %274 = vector.multi_reduction <maximumf>, %273, %cst_105 [1] : vector<8x8xf32> to vector<8xf32>
    %275 = vector.shape_cast %274 : vector<8xf32> to vector<8x1xf32>
    %276 = vector.broadcast %275 : vector<8x1xf32> to vector<8x8xf32>
    %277 = arith.subf %273, %276 : vector<8x8xf32>
    %278 = math.exp %277 : vector<8x8xf32>
    %cst_106 = arith.constant dense<0.000000e+00> : vector<8xf32>
    %279 = vector.multi_reduction <add>, %278, %cst_106 [1] : vector<8x8xf32> to vector<8xf32>
    %280 = vector.shape_cast %279 : vector<8xf32> to vector<8x1xf32>
    %281 = tpu.reciprocal %280 {approx = true} : vector<8x1xf32> -> vector<8x1xf32>
    %282 = vector.broadcast %281 : vector<8x1xf32> to vector<8x8xf32>
    %283 = arith.mulf %278, %282 : vector<8x8xf32>
    %284 = arith.truncf %283 : vector<8x8xf32> to vector<8x8xbf16>
    %cst_107 = arith.constant dense<0.000000e+00> : vector<8x8xf32>
    %285 = tpu.matmul %284, %270, %cst_107 {dimension_numbers = #tpu.dot_dimension_numbers<[1], [0], [0], [1], [0, 0, 1, 1], [], []>} : vector<8x8xbf16>, vector<8x8xbf16>, vector<8x8xf32> -> vector<8x8xf32>
    %286 = tpu.concatenate %264, %285 in 1 : vector<8x8xf32>, vector<8x8xf32> -> vector<8x16xf32>
    %287 = tpu.concatenate %243, %286 in 0 : vector<8x16xf32>, vector<8x16xf32> -> vector<16x16xf32>
    %288 = arith.truncf %287 : vector<16x16xf32> to vector<16x16xbf16>
    %cst_108 = arith.constant dense<0.000000e+00> : vector<16x16xf32>
    %289 = tpu.matmul %288, %177, %cst_108 {dimension_numbers = #tpu.dot_dimension_numbers<[1], [0], [0], [1], [0, 0, 1, 1], [], []>} : vector<16x16xbf16>, vector<16x16xbf16>, vector<16x16xf32> -> vector<16x16xf32>
    %290 = vector.broadcast %178 : vector<1x16xf32> to vector<16x16xf32>
    %291 = arith.addf %289, %290 : vector<16x16xf32>
    %292 = arith.addf %5, %291 : vector<16x16xf32>
    %cst_109 = arith.constant dense<0.000000e+00> : vector<16xf32>
    %293 = vector.multi_reduction <add>, %292, %cst_109 [1] : vector<16x16xf32> to vector<16xf32>
    %294 = vector.shape_cast %293 : vector<16xf32> to vector<16x1xf32>
    %cst_110 = arith.constant 1.600000e+01 : f32
    %295 = vector.broadcast %cst_110 : f32 to vector<16x1xf32>
    %296 = arith.divf %294, %295 : vector<16x1xf32>
    %297 = vector.broadcast %296 : vector<16x1xf32> to vector<16x16xf32>
    %298 = arith.subf %292, %297 : vector<16x16xf32>
    %299 = arith.mulf %298, %298 : vector<16x16xf32>
    %cst_111 = arith.constant dense<0.000000e+00> : vector<16xf32>
    %300 = vector.multi_reduction <add>, %299, %cst_111 [1] : vector<16x16xf32> to vector<16xf32>
    %301 = vector.shape_cast %300 : vector<16xf32> to vector<16x1xf32>
    %cst_112 = arith.constant 1.600000e+01 : f32
    %302 = vector.broadcast %cst_112 : f32 to vector<16x1xf32>
    %303 = arith.divf %301, %302 : vector<16x1xf32>
    %cst_113 = arith.constant 9.99999974E-6 : f32
    %304 = vector.broadcast %cst_113 : f32 to vector<16x1xf32>
    %305 = arith.addf %303, %304 : vector<16x1xf32>
    %306 = math.rsqrt %305 : vector<16x1xf32>
    %307 = vector.broadcast %306 : vector<16x1xf32> to vector<16x16xf32>
    %308 = arith.mulf %298, %307 : vector<16x16xf32>
    %309 = vector.broadcast %183 : vector<1x16xf32> to vector<16x16xf32>
    %310 = arith.mulf %308, %309 : vector<16x16xf32>
    %311 = vector.broadcast %184 : vector<1x16xf32> to vector<16x16xf32>
    %312 = arith.addf %310, %311 : vector<16x16xf32>
    %313 = arith.truncf %312 : vector<16x16xf32> to vector<16x16xbf16>
    %cst_114 = arith.constant dense<0.000000e+00> : vector<16x64xf32>
    %314 = tpu.matmul %313, %179, %cst_114 {dimension_numbers = #tpu.dot_dimension_numbers<[1], [0], [0], [1], [0, 0, 1, 1], [], []>} : vector<16x16xbf16>, vector<16x64xbf16>, vector<16x64xf32> -> vector<16x64xf32>
    %315 = vector.broadcast %180 : vector<1x64xf32> to vector<16x64xf32>
    %316 = arith.addf %314, %315 : vector<16x64xf32>
    %cst_115 = arith.constant 0.000000e+00 : f32
    %317 = vector.broadcast %cst_115 : f32 to vector<16x64xf32>
    %318 = arith.maximumf %316, %317 : vector<16x64xf32>
    %319 = arith.truncf %318 : vector<16x64xf32> to vector<16x64xbf16>
    %cst_116 = arith.constant dense<0.000000e+00> : vector<16x16xf32>
    %320 = tpu.matmul %319, %181, %cst_116 {dimension_numbers = #tpu.dot_dimension_numbers<[1], [0], [0], [1], [0, 0, 1, 1], [], []>} : vector<16x64xbf16>, vector<64x16xbf16>, vector<16x16xf32> -> vector<16x16xf32>
    %321 = vector.broadcast %182 : vector<1x16xf32> to vector<16x16xf32>
    %322 = arith.addf %320, %321 : vector<16x16xf32>
    %323 = arith.addf %312, %322 : vector<16x16xf32>
    %cst_117 = arith.constant dense<0.000000e+00> : vector<16xf32>
    %324 = vector.multi_reduction <add>, %323, %cst_117 [1] : vector<16x16xf32> to vector<16xf32>
    %325 = vector.shape_cast %324 : vector<16xf32> to vector<16x1xf32>
    %cst_118 = arith.constant 1.600000e+01 : f32
    %326 = vector.broadcast %cst_118 : f32 to vector<16x1xf32>
    %327 = arith.divf %325, %326 : vector<16x1xf32>
    %328 = vector.broadcast %327 : vector<16x1xf32> to vector<16x16xf32>
    %329 = arith.subf %323, %328 : vector<16x16xf32>
    %330 = arith.mulf %329, %329 : vector<16x16xf32>
    %cst_119 = arith.constant dense<0.000000e+00> : vector<16xf32>
    %331 = vector.multi_reduction <add>, %330, %cst_119 [1] : vector<16x16xf32> to vector<16xf32>
    %332 = vector.shape_cast %331 : vector<16xf32> to vector<16x1xf32>
    %cst_120 = arith.constant 1.600000e+01 : f32
    %333 = vector.broadcast %cst_120 : f32 to vector<16x1xf32>
    %334 = arith.divf %332, %333 : vector<16x1xf32>
    %cst_121 = arith.constant 9.99999974E-6 : f32
    %335 = vector.broadcast %cst_121 : f32 to vector<16x1xf32>
    %336 = arith.addf %334, %335 : vector<16x1xf32>
    %337 = math.rsqrt %336 : vector<16x1xf32>
    %338 = vector.broadcast %337 : vector<16x1xf32> to vector<16x16xf32>
    %339 = arith.mulf %329, %338 : vector<16x16xf32>
    %340 = vector.broadcast %185 : vector<1x16xf32> to vector<16x16xf32>
    %341 = arith.mulf %339, %340 : vector<16x16xf32>
    %342 = vector.broadcast %186 : vector<1x16xf32> to vector<16x16xf32>
    %343 = arith.addf %341, %342 : vector<16x16xf32>
    %344 = tpu.concatenate %174, %343 in 1 : vector<16x16xf32>, vector<16x16xf32> -> vector<16x32xf32>
    %c0_122 = arith.constant 0 : index
    %c0_123 = arith.constant 0 : index
    %345 = vector.load %arg26[%c0_122, %c0_123] : memref<32x96xbf16, #tpu.memory_space<vmem>>, vector<32x96xbf16>
    %c0_124 = arith.constant 0 : index
    %c0_125 = arith.constant 0 : index
    %346 = vector.load %arg27[%c0_124, %c0_125] : memref<1x96xf32, #tpu.memory_space<vmem>>, vector<1x96xf32>
    %c0_126 = arith.constant 0 : index
    %c0_127 = arith.constant 0 : index
    %347 = vector.load %arg28[%c0_126, %c0_127] : memref<32x32xbf16, #tpu.memory_space<vmem>>, vector<32x32xbf16>
    %c0_128 = arith.constant 0 : index
    %c0_129 = arith.constant 0 : index
    %348 = vector.load %arg29[%c0_128, %c0_129] : memref<1x32xf32, #tpu.memory_space<vmem>>, vector<1x32xf32>
    %c0_130 = arith.constant 0 : index
    %c0_131 = arith.constant 0 : index
    %349 = vector.load %arg30[%c0_130, %c0_131] : memref<32x64xbf16, #tpu.memory_space<vmem>>, vector<32x64xbf16>
    %c0_132 = arith.constant 0 : index
    %c0_133 = arith.constant 0 : index
    %350 = vector.load %arg31[%c0_132, %c0_133] : memref<1x64xf32, #tpu.memory_space<vmem>>, vector<1x64xf32>
    %c0_134 = arith.constant 0 : index
    %c0_135 = arith.constant 0 : index
    %351 = vector.load %arg32[%c0_134, %c0_135] : memref<64x32xbf16, #tpu.memory_space<vmem>>, vector<64x32xbf16>
    %c0_136 = arith.constant 0 : index
    %c0_137 = arith.constant 0 : index
    %352 = vector.load %arg33[%c0_136, %c0_137] : memref<1x32xf32, #tpu.memory_space<vmem>>, vector<1x32xf32>
    %c0_138 = arith.constant 0 : index
    %c0_139 = arith.constant 0 : index
    %353 = vector.load %arg34[%c0_138, %c0_139] : memref<1x32xf32, #tpu.memory_space<vmem>>, vector<1x32xf32>
    %c0_140 = arith.constant 0 : index
    %c0_141 = arith.constant 0 : index
    %354 = vector.load %arg35[%c0_140, %c0_141] : memref<1x32xf32, #tpu.memory_space<vmem>>, vector<1x32xf32>
    %c0_142 = arith.constant 0 : index
    %c0_143 = arith.constant 0 : index
    %355 = vector.load %arg36[%c0_142, %c0_143] : memref<1x32xf32, #tpu.memory_space<vmem>>, vector<1x32xf32>
    %c0_144 = arith.constant 0 : index
    %c0_145 = arith.constant 0 : index
    %356 = vector.load %arg37[%c0_144, %c0_145] : memref<1x32xf32, #tpu.memory_space<vmem>>, vector<1x32xf32>
    %357 = arith.truncf %344 : vector<16x32xf32> to vector<16x32xbf16>
    %cst_146 = arith.constant dense<0.000000e+00> : vector<16x96xf32>
    %358 = tpu.matmul %357, %345, %cst_146 {dimension_numbers = #tpu.dot_dimension_numbers<[1], [0], [0], [1], [0, 0, 1, 1], [], []>} : vector<16x32xbf16>, vector<32x96xbf16>, vector<16x96xf32> -> vector<16x96xf32>
    %359 = vector.broadcast %346 : vector<1x96xf32> to vector<16x96xf32>
    %360 = arith.addf %358, %359 : vector<16x96xf32>
    %361 = vector.extract_strided_slice %360 {offsets = [0, 0], sizes = [16, 32], strides = [1, 1]} : vector<16x96xf32> to vector<16x32xf32>
    %362 = vector.extract_strided_slice %360 {offsets = [0, 32], sizes = [16, 32], strides = [1, 1]} : vector<16x96xf32> to vector<16x32xf32>
    %363 = vector.extract_strided_slice %360 {offsets = [0, 64], sizes = [16, 32], strides = [1, 1]} : vector<16x96xf32> to vector<16x32xf32>
    %364 = vector.extract_strided_slice %361 {offsets = [0, 0], sizes = [8, 16], strides = [1, 1]} : vector<16x32xf32> to vector<8x16xf32>
    %365 = arith.truncf %364 : vector<8x16xf32> to vector<8x16xbf16>
    %366 = vector.extract_strided_slice %362 {offsets = [0, 0], sizes = [8, 16], strides = [1, 1]} : vector<16x32xf32> to vector<8x16xf32>
    %367 = arith.truncf %366 : vector<8x16xf32> to vector<8x16xbf16>
    %368 = vector.extract_strided_slice %363 {offsets = [0, 0], sizes = [8, 16], strides = [1, 1]} : vector<16x32xf32> to vector<8x16xf32>
    %369 = arith.truncf %368 : vector<8x16xf32> to vector<8x16xbf16>
    %cst_147 = arith.constant dense<0.000000e+00> : vector<8x8xf32>
    %370 = tpu.matmul %365, %367, %cst_147 {dimension_numbers = #tpu.dot_dimension_numbers<[1], [1], [0], [0], [0, 0, 1, 0], [], []>} : vector<8x16xbf16>, vector<8x16xbf16>, vector<8x8xf32> -> vector<8x8xf32>
    %cst_148 = arith.constant 2.500000e-01 : f32
    %371 = vector.broadcast %cst_148 : f32 to vector<8x8xf32>
    %372 = arith.mulf %370, %371 : vector<8x8xf32>
    %cst_149 = arith.constant dense<0xFF800000> : vector<8xf32>
    %373 = vector.multi_reduction <maximumf>, %372, %cst_149 [1] : vector<8x8xf32> to vector<8xf32>
    %374 = vector.shape_cast %373 : vector<8xf32> to vector<8x1xf32>
    %375 = vector.broadcast %374 : vector<8x1xf32> to vector<8x8xf32>
    %376 = arith.subf %372, %375 : vector<8x8xf32>
    %377 = math.exp %376 : vector<8x8xf32>
    %cst_150 = arith.constant dense<0.000000e+00> : vector<8xf32>
    %378 = vector.multi_reduction <add>, %377, %cst_150 [1] : vector<8x8xf32> to vector<8xf32>
    %379 = vector.shape_cast %378 : vector<8xf32> to vector<8x1xf32>
    %380 = tpu.reciprocal %379 {approx = true} : vector<8x1xf32> -> vector<8x1xf32>
    %381 = vector.broadcast %380 : vector<8x1xf32> to vector<8x8xf32>
    %382 = arith.mulf %377, %381 : vector<8x8xf32>
    %383 = arith.truncf %382 : vector<8x8xf32> to vector<8x8xbf16>
    %cst_151 = arith.constant dense<0.000000e+00> : vector<8x16xf32>
    %384 = tpu.matmul %383, %369, %cst_151 {dimension_numbers = #tpu.dot_dimension_numbers<[1], [0], [0], [1], [0, 0, 1, 1], [], []>} : vector<8x8xbf16>, vector<8x16xbf16>, vector<8x16xf32> -> vector<8x16xf32>
    %385 = vector.extract_strided_slice %361 {offsets = [0, 16], sizes = [8, 16], strides = [1, 1]} : vector<16x32xf32> to vector<8x16xf32>
    %386 = arith.truncf %385 : vector<8x16xf32> to vector<8x16xbf16>
    %387 = vector.extract_strided_slice %362 {offsets = [0, 16], sizes = [8, 16], strides = [1, 1]} : vector<16x32xf32> to vector<8x16xf32>
    %388 = arith.truncf %387 : vector<8x16xf32> to vector<8x16xbf16>
    %389 = vector.extract_strided_slice %363 {offsets = [0, 16], sizes = [8, 16], strides = [1, 1]} : vector<16x32xf32> to vector<8x16xf32>
    %390 = arith.truncf %389 : vector<8x16xf32> to vector<8x16xbf16>
    %cst_152 = arith.constant dense<0.000000e+00> : vector<8x8xf32>
    %391 = tpu.matmul %386, %388, %cst_152 {dimension_numbers = #tpu.dot_dimension_numbers<[1], [1], [0], [0], [0, 0, 1, 0], [], []>} : vector<8x16xbf16>, vector<8x16xbf16>, vector<8x8xf32> -> vector<8x8xf32>
    %cst_153 = arith.constant 2.500000e-01 : f32
    %392 = vector.broadcast %cst_153 : f32 to vector<8x8xf32>
    %393 = arith.mulf %391, %392 : vector<8x8xf32>
    %cst_154 = arith.constant dense<0xFF800000> : vector<8xf32>
    %394 = vector.multi_reduction <maximumf>, %393, %cst_154 [1] : vector<8x8xf32> to vector<8xf32>
    %395 = vector.shape_cast %394 : vector<8xf32> to vector<8x1xf32>
    %396 = vector.broadcast %395 : vector<8x1xf32> to vector<8x8xf32>
    %397 = arith.subf %393, %396 : vector<8x8xf32>
    %398 = math.exp %397 : vector<8x8xf32>
    %cst_155 = arith.constant dense<0.000000e+00> : vector<8xf32>
    %399 = vector.multi_reduction <add>, %398, %cst_155 [1] : vector<8x8xf32> to vector<8xf32>
    %400 = vector.shape_cast %399 : vector<8xf32> to vector<8x1xf32>
    %401 = tpu.reciprocal %400 {approx = true} : vector<8x1xf32> -> vector<8x1xf32>
    %402 = vector.broadcast %401 : vector<8x1xf32> to vector<8x8xf32>
    %403 = arith.mulf %398, %402 : vector<8x8xf32>
    %404 = arith.truncf %403 : vector<8x8xf32> to vector<8x8xbf16>
    %cst_156 = arith.constant dense<0.000000e+00> : vector<8x16xf32>
    %405 = tpu.matmul %404, %390, %cst_156 {dimension_numbers = #tpu.dot_dimension_numbers<[1], [0], [0], [1], [0, 0, 1, 1], [], []>} : vector<8x8xbf16>, vector<8x16xbf16>, vector<8x16xf32> -> vector<8x16xf32>
    %406 = tpu.concatenate %384, %405 in 1 : vector<8x16xf32>, vector<8x16xf32> -> vector<8x32xf32>
    %407 = vector.extract_strided_slice %361 {offsets = [8, 0], sizes = [8, 16], strides = [1, 1]} : vector<16x32xf32> to vector<8x16xf32>
    %408 = arith.truncf %407 : vector<8x16xf32> to vector<8x16xbf16>
    %409 = vector.extract_strided_slice %362 {offsets = [8, 0], sizes = [8, 16], strides = [1, 1]} : vector<16x32xf32> to vector<8x16xf32>
    %410 = arith.truncf %409 : vector<8x16xf32> to vector<8x16xbf16>
    %411 = vector.extract_strided_slice %363 {offsets = [8, 0], sizes = [8, 16], strides = [1, 1]} : vector<16x32xf32> to vector<8x16xf32>
    %412 = arith.truncf %411 : vector<8x16xf32> to vector<8x16xbf16>
    %cst_157 = arith.constant dense<0.000000e+00> : vector<8x8xf32>
    %413 = tpu.matmul %408, %410, %cst_157 {dimension_numbers = #tpu.dot_dimension_numbers<[1], [1], [0], [0], [0, 0, 1, 0], [], []>} : vector<8x16xbf16>, vector<8x16xbf16>, vector<8x8xf32> -> vector<8x8xf32>
    %cst_158 = arith.constant 2.500000e-01 : f32
    %414 = vector.broadcast %cst_158 : f32 to vector<8x8xf32>
    %415 = arith.mulf %413, %414 : vector<8x8xf32>
    %cst_159 = arith.constant dense<0xFF800000> : vector<8xf32>
    %416 = vector.multi_reduction <maximumf>, %415, %cst_159 [1] : vector<8x8xf32> to vector<8xf32>
    %417 = vector.shape_cast %416 : vector<8xf32> to vector<8x1xf32>
    %418 = vector.broadcast %417 : vector<8x1xf32> to vector<8x8xf32>
    %419 = arith.subf %415, %418 : vector<8x8xf32>
    %420 = math.exp %419 : vector<8x8xf32>
    %cst_160 = arith.constant dense<0.000000e+00> : vector<8xf32>
    %421 = vector.multi_reduction <add>, %420, %cst_160 [1] : vector<8x8xf32> to vector<8xf32>
    %422 = vector.shape_cast %421 : vector<8xf32> to vector<8x1xf32>
    %423 = tpu.reciprocal %422 {approx = true} : vector<8x1xf32> -> vector<8x1xf32>
    %424 = vector.broadcast %423 : vector<8x1xf32> to vector<8x8xf32>
    %425 = arith.mulf %420, %424 : vector<8x8xf32>
    %426 = arith.truncf %425 : vector<8x8xf32> to vector<8x8xbf16>
    %cst_161 = arith.constant dense<0.000000e+00> : vector<8x16xf32>
    %427 = tpu.matmul %426, %412, %cst_161 {dimension_numbers = #tpu.dot_dimension_numbers<[1], [0], [0], [1], [0, 0, 1, 1], [], []>} : vector<8x8xbf16>, vector<8x16xbf16>, vector<8x16xf32> -> vector<8x16xf32>
    %428 = vector.extract_strided_slice %361 {offsets = [8, 16], sizes = [8, 16], strides = [1, 1]} : vector<16x32xf32> to vector<8x16xf32>
    %429 = arith.truncf %428 : vector<8x16xf32> to vector<8x16xbf16>
    %430 = vector.extract_strided_slice %362 {offsets = [8, 16], sizes = [8, 16], strides = [1, 1]} : vector<16x32xf32> to vector<8x16xf32>
    %431 = arith.truncf %430 : vector<8x16xf32> to vector<8x16xbf16>
    %432 = vector.extract_strided_slice %363 {offsets = [8, 16], sizes = [8, 16], strides = [1, 1]} : vector<16x32xf32> to vector<8x16xf32>
    %433 = arith.truncf %432 : vector<8x16xf32> to vector<8x16xbf16>
    %cst_162 = arith.constant dense<0.000000e+00> : vector<8x8xf32>
    %434 = tpu.matmul %429, %431, %cst_162 {dimension_numbers = #tpu.dot_dimension_numbers<[1], [1], [0], [0], [0, 0, 1, 0], [], []>} : vector<8x16xbf16>, vector<8x16xbf16>, vector<8x8xf32> -> vector<8x8xf32>
    %cst_163 = arith.constant 2.500000e-01 : f32
    %435 = vector.broadcast %cst_163 : f32 to vector<8x8xf32>
    %436 = arith.mulf %434, %435 : vector<8x8xf32>
    %cst_164 = arith.constant dense<0xFF800000> : vector<8xf32>
    %437 = vector.multi_reduction <maximumf>, %436, %cst_164 [1] : vector<8x8xf32> to vector<8xf32>
    %438 = vector.shape_cast %437 : vector<8xf32> to vector<8x1xf32>
    %439 = vector.broadcast %438 : vector<8x1xf32> to vector<8x8xf32>
    %440 = arith.subf %436, %439 : vector<8x8xf32>
    %441 = math.exp %440 : vector<8x8xf32>
    %cst_165 = arith.constant dense<0.000000e+00> : vector<8xf32>
    %442 = vector.multi_reduction <add>, %441, %cst_165 [1] : vector<8x8xf32> to vector<8xf32>
    %443 = vector.shape_cast %442 : vector<8xf32> to vector<8x1xf32>
    %444 = tpu.reciprocal %443 {approx = true} : vector<8x1xf32> -> vector<8x1xf32>
    %445 = vector.broadcast %444 : vector<8x1xf32> to vector<8x8xf32>
    %446 = arith.mulf %441, %445 : vector<8x8xf32>
    %447 = arith.truncf %446 : vector<8x8xf32> to vector<8x8xbf16>
    %cst_166 = arith.constant dense<0.000000e+00> : vector<8x16xf32>
    %448 = tpu.matmul %447, %433, %cst_166 {dimension_numbers = #tpu.dot_dimension_numbers<[1], [0], [0], [1], [0, 0, 1, 1], [], []>} : vector<8x8xbf16>, vector<8x16xbf16>, vector<8x16xf32> -> vector<8x16xf32>
    %449 = tpu.concatenate %427, %448 in 1 : vector<8x16xf32>, vector<8x16xf32> -> vector<8x32xf32>
    %450 = tpu.concatenate %406, %449 in 0 : vector<8x32xf32>, vector<8x32xf32> -> vector<16x32xf32>
    %451 = arith.truncf %450 : vector<16x32xf32> to vector<16x32xbf16>
    %cst_167 = arith.constant dense<0.000000e+00> : vector<16x32xf32>
    %452 = tpu.matmul %451, %347, %cst_167 {dimension_numbers = #tpu.dot_dimension_numbers<[1], [0], [0], [1], [0, 0, 1, 1], [], []>} : vector<16x32xbf16>, vector<32x32xbf16>, vector<16x32xf32> -> vector<16x32xf32>
    %453 = vector.broadcast %348 : vector<1x32xf32> to vector<16x32xf32>
    %454 = arith.addf %452, %453 : vector<16x32xf32>
    %455 = arith.addf %344, %454 : vector<16x32xf32>
    %cst_168 = arith.constant dense<0.000000e+00> : vector<16xf32>
    %456 = vector.multi_reduction <add>, %455, %cst_168 [1] : vector<16x32xf32> to vector<16xf32>
    %457 = vector.shape_cast %456 : vector<16xf32> to vector<16x1xf32>
    %cst_169 = arith.constant 3.200000e+01 : f32
    %458 = vector.broadcast %cst_169 : f32 to vector<16x1xf32>
    %459 = arith.divf %457, %458 : vector<16x1xf32>
    %460 = vector.broadcast %459 : vector<16x1xf32> to vector<16x32xf32>
    %461 = arith.subf %455, %460 : vector<16x32xf32>
    %462 = arith.mulf %461, %461 : vector<16x32xf32>
    %cst_170 = arith.constant dense<0.000000e+00> : vector<16xf32>
    %463 = vector.multi_reduction <add>, %462, %cst_170 [1] : vector<16x32xf32> to vector<16xf32>
    %464 = vector.shape_cast %463 : vector<16xf32> to vector<16x1xf32>
    %cst_171 = arith.constant 3.200000e+01 : f32
    %465 = vector.broadcast %cst_171 : f32 to vector<16x1xf32>
    %466 = arith.divf %464, %465 : vector<16x1xf32>
    %cst_172 = arith.constant 9.99999974E-6 : f32
    %467 = vector.broadcast %cst_172 : f32 to vector<16x1xf32>
    %468 = arith.addf %466, %467 : vector<16x1xf32>
    %469 = math.rsqrt %468 : vector<16x1xf32>
    %470 = vector.broadcast %469 : vector<16x1xf32> to vector<16x32xf32>
    %471 = arith.mulf %461, %470 : vector<16x32xf32>
    %472 = vector.broadcast %353 : vector<1x32xf32> to vector<16x32xf32>
    %473 = arith.mulf %471, %472 : vector<16x32xf32>
    %474 = vector.broadcast %354 : vector<1x32xf32> to vector<16x32xf32>
    %475 = arith.addf %473, %474 : vector<16x32xf32>
    %476 = arith.truncf %475 : vector<16x32xf32> to vector<16x32xbf16>
    %cst_173 = arith.constant dense<0.000000e+00> : vector<16x64xf32>
    %477 = tpu.matmul %476, %349, %cst_173 {dimension_numbers = #tpu.dot_dimension_numbers<[1], [0], [0], [1], [0, 0, 1, 1], [], []>} : vector<16x32xbf16>, vector<32x64xbf16>, vector<16x64xf32> -> vector<16x64xf32>
    %478 = vector.broadcast %350 : vector<1x64xf32> to vector<16x64xf32>
    %479 = arith.addf %477, %478 : vector<16x64xf32>
    %cst_174 = arith.constant 0.000000e+00 : f32
    %480 = vector.broadcast %cst_174 : f32 to vector<16x64xf32>
    %481 = arith.maximumf %479, %480 : vector<16x64xf32>
    %482 = arith.truncf %481 : vector<16x64xf32> to vector<16x64xbf16>
    %cst_175 = arith.constant dense<0.000000e+00> : vector<16x32xf32>
    %483 = tpu.matmul %482, %351, %cst_175 {dimension_numbers = #tpu.dot_dimension_numbers<[1], [0], [0], [1], [0, 0, 1, 1], [], []>} : vector<16x64xbf16>, vector<64x32xbf16>, vector<16x32xf32> -> vector<16x32xf32>
    %484 = vector.broadcast %352 : vector<1x32xf32> to vector<16x32xf32>
    %485 = arith.addf %483, %484 : vector<16x32xf32>
    %486 = arith.addf %475, %485 : vector<16x32xf32>
    %cst_176 = arith.constant dense<0.000000e+00> : vector<16xf32>
    %487 = vector.multi_reduction <add>, %486, %cst_176 [1] : vector<16x32xf32> to vector<16xf32>
    %488 = vector.shape_cast %487 : vector<16xf32> to vector<16x1xf32>
    %cst_177 = arith.constant 3.200000e+01 : f32
    %489 = vector.broadcast %cst_177 : f32 to vector<16x1xf32>
    %490 = arith.divf %488, %489 : vector<16x1xf32>
    %491 = vector.broadcast %490 : vector<16x1xf32> to vector<16x32xf32>
    %492 = arith.subf %486, %491 : vector<16x32xf32>
    %493 = arith.mulf %492, %492 : vector<16x32xf32>
    %cst_178 = arith.constant dense<0.000000e+00> : vector<16xf32>
    %494 = vector.multi_reduction <add>, %493, %cst_178 [1] : vector<16x32xf32> to vector<16xf32>
    %495 = vector.shape_cast %494 : vector<16xf32> to vector<16x1xf32>
    %cst_179 = arith.constant 3.200000e+01 : f32
    %496 = vector.broadcast %cst_179 : f32 to vector<16x1xf32>
    %497 = arith.divf %495, %496 : vector<16x1xf32>
    %cst_180 = arith.constant 9.99999974E-6 : f32
    %498 = vector.broadcast %cst_180 : f32 to vector<16x1xf32>
    %499 = arith.addf %497, %498 : vector<16x1xf32>
    %500 = math.rsqrt %499 : vector<16x1xf32>
    %501 = vector.broadcast %500 : vector<16x1xf32> to vector<16x32xf32>
    %502 = arith.mulf %492, %501 : vector<16x32xf32>
    %503 = vector.broadcast %355 : vector<1x32xf32> to vector<16x32xf32>
    %504 = arith.mulf %502, %503 : vector<16x32xf32>
    %505 = vector.broadcast %356 : vector<1x32xf32> to vector<16x32xf32>
    %506 = arith.addf %504, %505 : vector<16x32xf32>
    %c0_181 = arith.constant 0 : index
    %c0_182 = arith.constant 0 : index
    %507 = vector.load %arg38[%c0_181, %c0_182] : memref<32x16xbf16, #tpu.memory_space<vmem>>, vector<32x16xbf16>
    %c0_183 = arith.constant 0 : index
    %c0_184 = arith.constant 0 : index
    %508 = vector.load %arg39[%c0_183, %c0_184] : memref<1x16xf32, #tpu.memory_space<vmem>>, vector<1x16xf32>
    %509 = arith.truncf %506 : vector<16x32xf32> to vector<16x32xbf16>
    %cst_185 = arith.constant dense<0.000000e+00> : vector<16x16xf32>
    %510 = tpu.matmul %509, %507, %cst_185 {dimension_numbers = #tpu.dot_dimension_numbers<[1], [0], [0], [1], [0, 0, 1, 1], [], []>} : vector<16x32xbf16>, vector<32x16xbf16>, vector<16x16xf32> -> vector<16x16xf32>
    %511 = vector.broadcast %508 : vector<1x16xf32> to vector<16x16xf32>
    %512 = arith.addf %510, %511 : vector<16x16xf32>
    %cst_186 = arith.constant 0.000000e+00 : f32
    %513 = vector.broadcast %cst_186 : f32 to vector<16x16xf32>
    %514 = arith.maximumf %512, %513 : vector<16x16xf32>
    %c0_187 = arith.constant 0 : index
    %c0_188 = arith.constant 0 : index
    %515 = vector.load %arg40[%c0_187, %c0_188] : memref<16x4xbf16, #tpu.memory_space<vmem>>, vector<16x4xbf16>
    %c0_189 = arith.constant 0 : index
    %c0_190 = arith.constant 0 : index
    %516 = vector.load %arg41[%c0_189, %c0_190] : memref<1x4xf32, #tpu.memory_space<vmem>>, vector<1x4xf32>
    %517 = arith.truncf %514 : vector<16x16xf32> to vector<16x16xbf16>
    %cst_191 = arith.constant dense<0.000000e+00> : vector<16x4xf32>
    %518 = tpu.matmul %517, %515, %cst_191 {dimension_numbers = #tpu.dot_dimension_numbers<[1], [0], [0], [1], [0, 0, 1, 1], [], []>} : vector<16x16xbf16>, vector<16x4xbf16>, vector<16x4xf32> -> vector<16x4xf32>
    %519 = vector.broadcast %516 : vector<1x4xf32> to vector<16x4xf32>
    %520 = arith.addf %518, %519 : vector<16x4xf32>
    %c0_192 = arith.constant 0 : index
    %c0_193 = arith.constant 0 : index
    %521 = vector.load %arg42[%c0_192, %c0_193] : memref<16x4xf32, #tpu.memory_space<vmem>>, vector<16x4xf32>
    tpu.vector_store %arg42[%c0_192, %c0_193], %520 {strides = array<i32>} : memref<16x4xf32, #tpu.memory_space<vmem>>, vector<16x4xf32>,
    return
  }
}

</mosaic_0001>

<llo_original>
// kernel: _lambda_.1
$region0: #{_lambda_.1}
  #allocation0 [shape = 'u32[]', space=smem, size = 0x4, offset = 0x4, fixed_abs, tag = 'smem constant byte address 0x4 - core index']
  #allocation1 [shape = 'u32[144,128]{1,0:T(1,128)}', space=vmem, size = 0x12000, scoped, tag = 'internal scratch']
  %s0 = inlined_call_operand.smem [shape: u32[43], index: -1, kind: input, shape index: {}]
  %s1 = sld [smem:[%s0]]
  %s2 = scalar_lea.smem %s0, 1
  %s3 = sld [smem:[%s2]]
  %s4 = scalar_lea.smem %s0, 2
  %s5 = sld [smem:[%s4]]
  %s6 = scalar_lea.smem %s0, 3
  %s7 = sld [smem:[%s6]]
  %s8 = scalar_lea.smem %s0, 4
  %s9 = sld [smem:[%s8]]
  %s10 = scalar_lea.smem %s0, 5
  %s11 = sld [smem:[%s10]]
  %s12 = scalar_lea.smem %s0, 6
  %s13 = sld [smem:[%s12]]
  %s14 = scalar_lea.smem %s0, 7
  %s15 = sld [smem:[%s14]]
  %s16 = scalar_lea.smem %s0, 8
  %s17 = sld [smem:[%s16]]
  %s18 = scalar_lea.smem %s0, 9
  %s19 = sld [smem:[%s18]]
  %s20 = scalar_lea.smem %s0, 10
  %s21 = sld [smem:[%s20]]
  %s22 = scalar_lea.smem %s0, 11
  %s23 = sld [smem:[%s22]]
  %s24 = scalar_lea.smem %s0, 12
  %s25 = sld [smem:[%s24]]
  %s26 = scalar_lea.smem %s0, 13
  %s27 = sld [smem:[%s26]]
  %s28 = scalar_lea.smem %s0, 14
  %s29 = sld [smem:[%s28]]
  %s30 = scalar_lea.smem %s0, 15
  %s31 = sld [smem:[%s30]]
  %s32 = scalar_lea.smem %s0, 16
  %s33 = sld [smem:[%s32]]
  %s34 = scalar_lea.smem %s0, 17
  %s35 = sld [smem:[%s34]]
  %s36 = scalar_lea.smem %s0, 18
  %s37 = sld [smem:[%s36]]
  %s38 = scalar_lea.smem %s0, 19
  %s39 = sld [smem:[%s38]]
  %s40 = scalar_lea.smem %s0, 20
  %s41 = sld [smem:[%s40]]
  %s42 = scalar_lea.smem %s0, 21
  %s43 = sld [smem:[%s42]]
  %s44 = scalar_lea.smem %s0, 22
  %s45 = sld [smem:[%s44]]
  %s46 = scalar_lea.smem %s0, 23
  %s47 = sld [smem:[%s46]]
  %s48 = scalar_lea.smem %s0, 24
  %s49 = sld [smem:[%s48]]
  %s50 = scalar_lea.smem %s0, 25
  %s51 = sld [smem:[%s50]]
  %s52 = scalar_lea.smem %s0, 26
  %s53 = sld [smem:[%s52]]
  %s54 = scalar_lea.smem %s0, 27
  %s55 = sld [smem:[%s54]]
  %s56 = scalar_lea.smem %s0, 28
  %s57 = sld [smem:[%s56]]
  %s58 = scalar_lea.smem %s0, 29
  %s59 = sld [smem:[%s58]]
  %s60 = scalar_lea.smem %s0, 30
  %s61 = sld [smem:[%s60]]
  %s62 = scalar_lea.smem %s0, 31
  %s63 = sld [smem:[%s62]]
  %s64 = scalar_lea.smem %s0, 32
  %s65 = sld [smem:[%s64]]
  %s66 = scalar_lea.smem %s0, 33
  %s67 = sld [smem:[%s66]]
  %s68 = scalar_lea.smem %s0, 34
  %s69 = sld [smem:[%s68]]
  %s70 = scalar_lea.smem %s0, 35
  %s71 = sld [smem:[%s70]]
  %s72 = scalar_lea.smem %s0, 36
  %s73 = sld [smem:[%s72]]
  %s74 = scalar_lea.smem %s0, 37
  %s75 = sld [smem:[%s74]]
  %s76 = scalar_lea.smem %s0, 38
  %s77 = sld [smem:[%s76]]
  %s78 = scalar_lea.smem %s0, 39
  %s79 = sld [smem:[%s78]]
  %s80 = scalar_lea.smem %s0, 40
  %s81 = sld [smem:[%s80]]
  %s82 = scalar_lea.smem %s0, 41
  %s83 = sld [smem:[%s82]]
  %s84 = scalar_lea.smem %s0, 42
  %s85 = sld [smem:[%s84]]
  %s86 = sld [smem:[#allocation0]]
  $region178: #{_lambda_.1} parent=0
    _
  %s88 = ssub.s32 1, %s86
  %s89 = scalar_select 0, %s88, %s86
  // Predicated region
  $region2: #{_lambda_.1} parent=0 // pred_check
    _
  $region3: #{_lambda_.1} parent=0 // pred_check_branch
    %91 = sbr.rel (0) target = $region5
  $region4: #{_lambda_.1} parent=0 // pred_region
    _
  $region5: #{_lambda_.1} parent=0 // pred_fallthru
    _
  // Predicated region
  $region6: #{_lambda_.1} parent=0 // pred_check
    _
  $region7: #{_lambda_.1} parent=0 // pred_check_branch
    %93 = sbr.rel (0) target = $region9
  $region8: #{_lambda_.1} parent=0 // pred_region
    _
  $region9: #{_lambda_.1} parent=0 // pred_fallthru
    _
  // Predicated region
  $region10: #{_lambda_.1} parent=0 // pred_check
    _
  $region11: #{_lambda_.1} parent=0 // pred_check_branch
    %95 = sbr.rel (0) target = $region13
  $region12: #{_lambda_.1} parent=0 // pred_region
    _
  $region13: #{_lambda_.1} parent=0 // pred_fallthru
    _
  // Predicated region
  $region14: #{_lambda_.1} parent=0 // pred_check
    _
  $region15: #{_lambda_.1} parent=0 // pred_check_branch
    %97 = sbr.rel (0) target = $region17
  $region16: #{_lambda_.1} parent=0 // pred_region
    _
  $region17: #{_lambda_.1} parent=0 // pred_fallthru
    _
  // Predicated region
  $region18: #{_lambda_.1} parent=0 // pred_check
    _
  $region19: #{_lambda_.1} parent=0 // pred_check_branch
    %99 = sbr.rel (0) target = $region21
  $region20: #{_lambda_.1} parent=0 // pred_region
    _
  $region21: #{_lambda_.1} parent=0 // pred_fallthru
    _
  // Predicated region
  $region22: #{_lambda_.1} parent=0 // pred_check
    _
  $region23: #{_lambda_.1} parent=0 // pred_check_branch
    %101 = sbr.rel (0) target = $region25
  $region24: #{_lambda_.1} parent=0 // pred_region
    _
  $region25: #{_lambda_.1} parent=0 // pred_fallthru
    _
  // Predicated region
  $region26: #{_lambda_.1} parent=0 // pred_check
    _
  $region27: #{_lambda_.1} parent=0 // pred_check_branch
    %103 = sbr.rel (0) target = $region29
  $region28: #{_lambda_.1} parent=0 // pred_region
    _
  $region29: #{_lambda_.1} parent=0 // pred_fallthru
    _
  // Predicated region
  $region30: #{_lambda_.1} parent=0 // pred_check
    _
  $region31: #{_lambda_.1} parent=0 // pred_check_branch
    %105 = sbr.rel (0) target = $region33
  $region32: #{_lambda_.1} parent=0 // pred_region
    _
  $region33: #{_lambda_.1} parent=0 // pred_fallthru
    _
  // Predicated region
  $region34: #{_lambda_.1} parent=0 // pred_check
    _
  $region35: #{_lambda_.1} parent=0 // pred_check_branch
    %107 = sbr.rel (0) target = $region37
  $region36: #{_lambda_.1} parent=0 // pred_region
    _
  $region37: #{_lambda_.1} parent=0 // pred_fallthru
    _
  // Predicated region
  $region38: #{_lambda_.1} parent=0 // pred_check
    _
  $region39: #{_lambda_.1} parent=0 // pred_check_branch
    %109 = sbr.rel (0) target = $region41
  $region40: #{_lambda_.1} parent=0 // pred_region
    _
  $region41: #{_lambda_.1} parent=0 // pred_fallthru
    _
  // Predicated region
  $region42: #{_lambda_.1} parent=0 // pred_check
    _
  $region43: #{_lambda_.1} parent=0 // pred_check_branch
    %111 = sbr.rel (0) target = $region45
  $region44: #{_lambda_.1} parent=0 // pred_region
    _
  $region45: #{_lambda_.1} parent=0 // pred_fallthru
    _
  // Predicated region
  $region46: #{_lambda_.1} parent=0 // pred_check
    _
  $region47: #{_lambda_.1} parent=0 // pred_check_branch
    %113 = sbr.rel (0) target = $region49
  $region48: #{_lambda_.1} parent=0 // pred_region
    _
  $region49: #{_lambda_.1} parent=0 // pred_fallthru
    _
  // Predicated region
  $region50: #{_lambda_.1} parent=0 // pred_check
    _
  $region51: #{_lambda_.1} parent=0 // pred_check_branch
    %115 = sbr.rel (0) target = $region53
  $region52: #{_lambda_.1} parent=0 // pred_region
    _
  $region53: #{_lambda_.1} parent=0 // pred_fallthru
    _
  // Predicated region
  $region54: #{_lambda_.1} parent=0 // pred_check
    _
  $region55: #{_lambda_.1} parent=0 // pred_check_branch
    %117 = sbr.rel (0) target = $region57
  $region56: #{_lambda_.1} parent=0 // pred_region
    _
  $region57: #{_lambda_.1} parent=0 // pred_fallthru
    _
  // Predicated region
  $region58: #{_lambda_.1} parent=0 // pred_check
    _
  $region59: #{_lambda_.1} parent=0 // pred_check_branch
    %119 = sbr.rel (0) target = $region61
  $region60: #{_lambda_.1} parent=0 // pred_region
    _
  $region61: #{_lambda_.1} parent=0 // pred_fallthru
    _
  // Predicated region
  $region62: #{_lambda_.1} parent=0 // pred_check
    _
  $region63: #{_lambda_.1} parent=0 // pred_check_branch
    %121 = sbr.rel (0) target = $region65
  $region64: #{_lambda_.1} parent=0 // pred_region
    _
  $region65: #{_lambda_.1} parent=0 // pred_fallthru
    _
  // Predicated region
  $region66: #{_lambda_.1} parent=0 // pred_check
    _
  $region67: #{_lambda_.1} parent=0 // pred_check_branch
    %123 = sbr.rel (0) target = $region69
  $region68: #{_lambda_.1} parent=0 // pred_region
    _
  $region69: #{_lambda_.1} parent=0 // pred_fallthru
    _
  // Predicated region
  $region70: #{_lambda_.1} parent=0 // pred_check
    _
  $region71: #{_lambda_.1} parent=0 // pred_check_branch
    %125 = sbr.rel (0) target = $region73
  $region72: #{_lambda_.1} parent=0 // pred_region
    _
  $region73: #{_lambda_.1} parent=0 // pred_fallthru
    _
  // Predicated region
  $region74: #{_lambda_.1} parent=0 // pred_check
    _
  $region75: #{_lambda_.1} parent=0 // pred_check_branch
    %127 = sbr.rel (0) target = $region77
  $region76: #{_lambda_.1} parent=0 // pred_region
    _
  $region77: #{_lambda_.1} parent=0 // pred_fallthru
    _
  // Predicated region
  $region78: #{_lambda_.1} parent=0 // pred_check
    _
  $region79: #{_lambda_.1} parent=0 // pred_check_branch
    %129 = sbr.rel (0) target = $region81
  $region80: #{_lambda_.1} parent=0 // pred_region
    _
  $region81: #{_lambda_.1} parent=0 // pred_fallthru
    _
  // Predicated region
  $region82: #{_lambda_.1} parent=0 // pred_check
    _
  $region83: #{_lambda_.1} parent=0 // pred_check_branch
    %131 = sbr.rel (0) target = $region85
  $region84: #{_lambda_.1} parent=0 // pred_region
    _
  $region85: #{_lambda_.1} parent=0 // pred_fallthru
    _
  // Predicated region
  $region86: #{_lambda_.1} parent=0 // pred_check
    _
  $region87: #{_lambda_.1} parent=0 // pred_check_branch
    %133 = sbr.rel (0) target = $region89
  $region88: #{_lambda_.1} parent=0 // pred_region
    _
  $region89: #{_lambda_.1} parent=0 // pred_fallthru
    _
  // Predicated region
  $region90: #{_lambda_.1} parent=0 // pred_check
    _
  $region91: #{_lambda_.1} parent=0 // pred_check_branch
    %135 = sbr.rel (0) target = $region93
  $region92: #{_lambda_.1} parent=0 // pred_region
    _
  $region93: #{_lambda_.1} parent=0 // pred_fallthru
    _
  // Predicated region
  $region94: #{_lambda_.1} parent=0 // pred_check
    _
  $region95: #{_lambda_.1} parent=0 // pred_check_branch
    %137 = sbr.rel (0) target = $region97
  $region96: #{_lambda_.1} parent=0 // pred_region
    _
  $region97: #{_lambda_.1} parent=0 // pred_fallthru
    _
  // Predicated region
  $region98: #{_lambda_.1} parent=0 // pred_check
    _
  $region99: #{_lambda_.1} parent=0 // pred_check_branch
    %139 = sbr.rel (0) target = $region101
  $region100: #{_lambda_.1} parent=0 // pred_region
    _
  $region101: #{_lambda_.1} parent=0 // pred_fallthru
    _
  // Predicated region
  $region102: #{_lambda_.1} parent=0 // pred_check
    _
  $region103: #{_lambda_.1} parent=0 // pred_check_branch
    %141 = sbr.rel (0) target = $region105
  $region104: #{_lambda_.1} parent=0 // pred_region
    _
  $region105: #{_lambda_.1} parent=0 // pred_fallthru
    _
  // Predicated region
  $region106: #{_lambda_.1} parent=0 // pred_check
    _
  $region107: #{_lambda_.1} parent=0 // pred_check_branch
    %143 = sbr.rel (0) target = $region109
  $region108: #{_lambda_.1} parent=0 // pred_region
    _
  $region109: #{_lambda_.1} parent=0 // pred_fallthru
    _
  // Predicated region
  $region110: #{_lambda_.1} parent=0 // pred_check
    _
  $region111: #{_lambda_.1} parent=0 // pred_check_branch
    %145 = sbr.rel (0) target = $region113
  $region112: #{_lambda_.1} parent=0 // pred_region
    _
  $region113: #{_lambda_.1} parent=0 // pred_fallthru
    _
  // Predicated region
  $region114: #{_lambda_.1} parent=0 // pred_check
    _
  $region115: #{_lambda_.1} parent=0 // pred_check_branch
    %147 = sbr.rel (0) target = $region117
  $region116: #{_lambda_.1} parent=0 // pred_region
    _
  $region117: #{_lambda_.1} parent=0 // pred_fallthru
    _
  // Predicated region
  $region118: #{_lambda_.1} parent=0 // pred_check
    _
  $region119: #{_lambda_.1} parent=0 // pred_check_branch
    %149 = sbr.rel (0) target = $region121
  $region120: #{_lambda_.1} parent=0 // pred_region
    _
  $region121: #{_lambda_.1} parent=0 // pred_fallthru
    _
  // Predicated region
  $region122: #{_lambda_.1} parent=0 // pred_check
    _
  $region123: #{_lambda_.1} parent=0 // pred_check_branch
    %151 = sbr.rel (0) target = $region125
  $region124: #{_lambda_.1} parent=0 // pred_region
    _
  $region125: #{_lambda_.1} parent=0 // pred_fallthru
    _
  // Predicated region
  $region126: #{_lambda_.1} parent=0 // pred_check
    _
  $region127: #{_lambda_.1} parent=0 // pred_check_branch
    %153 = sbr.rel (0) target = $region129
  $region128: #{_lambda_.1} parent=0 // pred_region
    _
  $region129: #{_lambda_.1} parent=0 // pred_fallthru
    _
  // Predicated region
  $region130: #{_lambda_.1} parent=0 // pred_check
    _
  $region131: #{_lambda_.1} parent=0 // pred_check_branch
    %155 = sbr.rel (0) target = $region133
  $region132: #{_lambda_.1} parent=0 // pred_region
    _
  $region133: #{_lambda_.1} parent=0 // pred_fallthru
    _
  // Predicated region
  $region134: #{_lambda_.1} parent=0 // pred_check
    _
  $region135: #{_lambda_.1} parent=0 // pred_check_branch
    %157 = sbr.rel (0) target = $region137
  $region136: #{_lambda_.1} parent=0 // pred_region
    _
  $region137: #{_lambda_.1} parent=0 // pred_fallthru
    _
  // Predicated region
  $region138: #{_lambda_.1} parent=0 // pred_check
    _
  $region139: #{_lambda_.1} parent=0 // pred_check_branch
    %159 = sbr.rel (0) target = $region141
  $region140: #{_lambda_.1} parent=0 // pred_region
    _
  $region141: #{_lambda_.1} parent=0 // pred_fallthru
    _
  // Predicated region
  $region142: #{_lambda_.1} parent=0 // pred_check
    _
  $region143: #{_lambda_.1} parent=0 // pred_check_branch
    %161 = sbr.rel (0) target = $region145
  $region144: #{_lambda_.1} parent=0 // pred_region
    _
  $region145: #{_lambda_.1} parent=0 // pred_fallthru
    _
  // Predicated region
  $region146: #{_lambda_.1} parent=0 // pred_check
    _
  $region147: #{_lambda_.1} parent=0 // pred_check_branch
    %163 = sbr.rel (0) target = $region149
  $region148: #{_lambda_.1} parent=0 // pred_region
    _
  $region149: #{_lambda_.1} parent=0 // pred_fallthru
    _
  // Predicated region
  $region150: #{_lambda_.1} parent=0 // pred_check
    _
  $region151: #{_lambda_.1} parent=0 // pred_check_branch
    %165 = sbr.rel (0) target = $region153
  $region152: #{_lambda_.1} parent=0 // pred_region
    _
  $region153: #{_lambda_.1} parent=0 // pred_fallthru
    _
  // Predicated region
  $region154: #{_lambda_.1} parent=0 // pred_check
    _
  $region155: #{_lambda_.1} parent=0 // pred_check_branch
    %167 = sbr.rel (0) target = $region157
  $region156: #{_lambda_.1} parent=0 // pred_region
    _
  $region157: #{_lambda_.1} parent=0 // pred_fallthru
    _
  // Predicated region
  $region158: #{_lambda_.1} parent=0 // pred_check
    _
  $region159: #{_lambda_.1} parent=0 // pred_check_branch
    %169 = sbr.rel (0) target = $region161
  $region160: #{_lambda_.1} parent=0 // pred_region
    _
  $region161: #{_lambda_.1} parent=0 // pred_fallthru
    _
  // Predicated region
  $region162: #{_lambda_.1} parent=0 // pred_check
    _
  $region163: #{_lambda_.1} parent=0 // pred_check_branch
    %171 = sbr.rel (0) target = $region165
  $region164: #{_lambda_.1} parent=0 // pred_region
    _
  $region165: #{_lambda_.1} parent=0 // pred_fallthru
    _
  // Predicated region
  $region166: #{_lambda_.1} parent=0 // pred_check
    _
  $region167: #{_lambda_.1} parent=0 // pred_check_branch
    %173 = sbr.rel (0) target = $region169
  $region168: #{_lambda_.1} parent=0 // pred_region
    _
  $region169: #{_lambda_.1} parent=0 // pred_fallthru
    _
  %v175 = vld [vmem:[%s1] sm:$0xff]
  %v176 = vld [vmem:[%s1 + $0x8] sm:$0xff]
  %v177 = vld [vmem:[%s3] sm:$0xff]
  %v178 = vld [vmem:[%s3 + $0x8] sm:$0xff]
  %v179 = vadd.f32 %v175, %v177
  %v180 = vadd.f32 %v176, %v178
  %183 = vrot.lane.b32.xlu0 %v177, 16
  %v184 = vpop.permute.xlu0 %183
  %185 = vrot.lane.b32.xlu0 %v178, 16
  %v186 = vpop.permute.xlu0 %185
  %v189 = vadd.f32 %v175, %v184
  %v190 = vadd.f32 %v176, %v186
  %v191 = vld [vmem:[%s5] sm:$0xf]
  %v192 = vld [vmem:[%s5 + $0x4] sm:$0xf]
  %v193 = vld [vmem:[%s7] sm:$0x1]
  %v194 = vld [vmem:[%s9] sm:$0xf]
  %v195 = vld [vmem:[%s9 + $0x4] sm:$0xf]
  %v196 = vld [vmem:[%s11] sm:$0x1]
  %v197 = vld [vmem:[%s13] sm:$0xf]
  %v198 = vld [vmem:[%s13 + $0x4] sm:$0xf]
  %v199 = vld [vmem:[%s15] sm:$0x1]
  %v200 = vld [vmem:[%s17] sm:$0xf]
  %v201 = vld [vmem:[%s17 + $0x4] sm:$0xf]
  %v202 = vld [vmem:[%s17 + $0x8] sm:$0xf]
  %v203 = vld [vmem:[%s17 + $0xc] sm:$0xf]
  %v204 = vld [vmem:[%s17 + $0x10] sm:$0xf]
  %v205 = vld [vmem:[%s17 + $0x14] sm:$0xf]
  %v206 = vld [vmem:[%s17 + $0x18] sm:$0xf]
  %v207 = vld [vmem:[%s17 + $0x1c] sm:$0xf]
  %v208 = vld [vmem:[%s19] sm:$0x1]
  %v209 = vld [vmem:[%s21] sm:$0x1]
  %v210 = vld [vmem:[%s23] sm:$0x1]
  %v211 = vld [vmem:[%s25] sm:$0x1]
  %v212 = vld [vmem:[%s27] sm:$0x1]
  %v213 = vpack.c.bf16 %v190, %v189
  %v215 = vlaneseq
  %v216 = vshrl.u32 %v215, 7
  %v217 = vsub.s32 0, %v216
  %v218 = vrot.slane %v193, %v217
  %221 = vrot.lane.b32.xlu0 %v213, 112
  %v222 = vpop.permute.xlu0 %221
  %v225 = vunpack.c.l.b16 %v191
  %v226 = vunpack.c.l.b16 %v192
  %v227 = vpack.c.b16 %v226, %v225
  %vm229 = vcmask 130048
  %v231 = vsel %vm229, %v222, 0
  %233 = vmatprep.subr.bf16.mxu0 0
  %234 = vmatpush1.bf16.msra.mxu0 %v227
  %235 = vmatprep.subr.bf16.mxu0 0
  %236 = vmatpush1.bf16.msra.mxu0 0
  %237 = vmatprep.subr.bf16.mxu0 0
  %238 = vmatpush1.bf16.msra.mxu0 0
  %239 = vmatprep.subr.bf16.mxu0 0
  %240 = vmatpush1.bf16.msra.mxu0 0
  %241 = vmatprep.subr.bf16.mxu0 0
  %242 = vmatpush1.bf16.msra.mxu0 0
  %243 = vmatprep.subr.bf16.mxu0 0
  %244 = vmatpush1.bf16.msra.mxu0 0
  %245 = vmatprep.subr.bf16.mxu0 0
  %246 = vmatpush1.bf16.msra.mxu0 0
  %247 = vmatprep.subr.bf16.mxu0 0
  %248 = vmatpush1.bf16.msra.mxu0 0
  %249 = vmatprep.subr.bf16.mxu0 0
  %250 = vmatpush1.bf16.msra.mxu0 0
  %251 = vmatprep.subr.bf16.mxu0 0
  %252 = vmatpush1.bf16.msra.mxu0 0
  %253 = vmatprep.subr.bf16.mxu0 0
  %254 = vmatpush1.bf16.msra.mxu0 0
  %255 = vmatprep.subr.bf16.mxu0 0
  %256 = vmatpush1.bf16.msra.mxu0 0
  %257 = vmatprep.subr.bf16.mxu0 0
  %258 = vmatpush1.bf16.msra.mxu0 0
  %259 = vmatprep.subr.bf16.mxu0 0
  %260 = vmatpush1.bf16.msra.mxu0 0
  %261 = vmatprep.subr.bf16.mxu0 0
  %262 = vmatpush1.bf16.msra.mxu0 0
  %263 = vmatprep.subr.bf16.mxu0 0
  %264 = vmatpush1.bf16.msra.mxu0 0
  %265 = vmatprep.mubr.bf16.mxu0 0
  %266 = vmatmul.mubr.bf16.gmra.mrb[0].mxu0 %v231
  %v267 = vpop.f32.mrb[0].mxu0
  %v268 = vadd.f32 %v218, %v267
  %v269 = vpop.f32.mrb[0].mxu0
  %v270 = vpop.f32.mrb[0].mxu0
  %v271 = vadd.f32 %v218, %v270
  %v272 = vpop.f32.mrb[0].mxu0
  %273 = vdwg.mxu0
  %v274 = vpack.c.bf16 %v180, %v179
  %275 = vrot.lane.b32.xlu0 %v227, 112
  %v276 = vpop.permute.xlu0 %275
  %278 = vrot.lane.b32.xlu0 %v218, 112
  %v279 = vpop.permute.xlu0 %278
  %v282 = vsel %vm229, %v274, 0
  %284 = vmatprep.subr.bf16.mxu0 0
  %285 = vmatpush1.bf16.msra.mxu0 %v276
  %286 = vmatprep.subr.bf16.mxu0 0
  %287 = vmatpush1.bf16.msra.mxu0 0
  %288 = vmatprep.subr.bf16.mxu0 0
  %289 = vmatpush1.bf16.msra.mxu0 0
  %290 = vmatprep.subr.bf16.mxu0 0
  %291 = vmatpush1.bf16.msra.mxu0 0
  %292 = vmatprep.subr.bf16.mxu0 0
  %293 = vmatpush1.bf16.msra.mxu0 0
  %294 = vmatprep.subr.bf16.mxu0 0
  %295 = vmatpush1.bf16.msra.mxu0 0
  %296 = vmatprep.subr.bf16.mxu0 0
  %297 = vmatpush1.bf16.msra.mxu0 0
  %298 = vmatprep.subr.bf16.mxu0 0
  %299 = vmatpush1.bf16.msra.mxu0 0
  %300 = vmatprep.subr.bf16.mxu0 0
  %301 = vmatpush1.bf16.msra.mxu0 0
  %302 = vmatprep.subr.bf16.mxu0 0
  %303 = vmatpush1.bf16.msra.mxu0 0
  %304 = vmatprep.subr.bf16.mxu0 0
  %305 = vmatpush1.bf16.msra.mxu0 0
  %306 = vmatprep.subr.bf16.mxu0 0
  %307 = vmatpush1.bf16.msra.mxu0 0
  %308 = vmatprep.subr.bf16.mxu0 0
  %309 = vmatpush1.bf16.msra.mxu0 0
  %310 = vmatprep.subr.bf16.mxu0 0
  %311 = vmatpush1.bf16.msra.mxu0 0
  %312 = vmatprep.subr.bf16.mxu0 0
  %313 = vmatpush1.bf16.msra.mxu0 0
  %314 = vmatprep.subr.bf16.mxu0 0
  %315 = vmatpush1.bf16.msra.mxu0 0
  %316 = vmatprep.mubr.bf16.mxu0 0
  %317 = vmatmul.mubr.bf16.gmra.mrb[0].mxu0 %v282
  %v318 = vpop.f32.mrb[0].mxu0
  %v319 = vadd.f32 %v279, %v318
  %v320 = vpop.f32.mrb[0].mxu0
  %v321 = vpop.f32.mrb[0].mxu0
  %v322 = vadd.f32 %v279, %v321
  %v323 = vpop.f32.mrb[0].mxu0
  %324 = vdwg.mxu0
  %v325 = vpack.c.bf16 %v268, %v268
  %v326 = vpack.c.bf16 %v319, %v319
  %vm327 = vcmask 64512
  %v329 = vsel %vm327, %v325, 0
  %v332 = vsel %vm327, %v326, 0
  %334 = vmatprep.subr.bf16.mxu0 0
  %335 = vmatpush1.bf16.xpose.msra.mxu0 %v332
  %336 = vmatprep.subr.bf16.mxu0 0
  %337 = vmatpush1.bf16.xpose.msra.mxu0 0
  %338 = vmatprep.subr.bf16.mxu0 0
  %339 = vmatpush1.bf16.xpose.msra.mxu0 0
  %340 = vmatprep.subr.bf16.mxu0 0
  %341 = vmatpush1.bf16.xpose.msra.mxu0 0
  %342 = vmatprep.subr.bf16.mxu0 0
  %343 = vmatpush1.bf16.xpose.msra.mxu0 0
  %344 = vmatprep.subr.bf16.mxu0 0
  %345 = vmatpush1.bf16.xpose.msra.mxu0 0
  %346 = vmatprep.subr.bf16.mxu0 0
  %347 = vmatpush1.bf16.xpose.msra.mxu0 0
  %348 = vmatprep.subr.bf16.mxu0 0
  %349 = vmatpush1.bf16.xpose.msra.mxu0 0
  %350 = vmatprep.subr.bf16.mxu0 0
  %351 = vmatpush1.bf16.xpose.msra.mxu0 0
  %352 = vmatprep.subr.bf16.mxu0 0
  %353 = vmatpush1.bf16.xpose.msra.mxu0 0
  %354 = vmatprep.subr.bf16.mxu0 0
  %355 = vmatpush1.bf16.xpose.msra.mxu0 0
  %356 = vmatprep.subr.bf16.mxu0 0
  %357 = vmatpush1.bf16.xpose.msra.mxu0 0
  %358 = vmatprep.subr.bf16.mxu0 0
  %359 = vmatpush1.bf16.xpose.msra.mxu0 0
  %360 = vmatprep.subr.bf16.mxu0 0
  %361 = vmatpush1.bf16.xpose.msra.mxu0 0
  %362 = vmatprep.subr.bf16.mxu0 0
  %363 = vmatpush1.bf16.xpose.msra.mxu0 0
  %364 = vmatprep.subr.bf16.mxu0 0
  %365 = vmatpush1.bf16.xpose.msra.mxu0 0
  %366 = vmatprep.mubr.bf16.mxu0 0
  %367 = vmatmul.mubr.bf16.gmra.mrb[0].mxu0 %v329
  %v368 = vpop.f32.mrb[0].mxu0
  %v369 = vadd.f32 0.0, %v368
  %v370 = vpop.f32.mrb[0].mxu0
  %v371 = vpop.f32.mrb[0].mxu0
  %v372 = vpop.f32.mrb[0].mxu0
  %373 = vdwg.mxu0
  %v374 = vmul.f32 %v369, 0.35355338
  %v375 = vsel %vm327, %v374, -inf
  %376 = vmax.xlane.f32.xlu0 %v375
  %v377 = vpop.xlane.xlu0 %376
  %v378 = vsub.f32 %v374, %v377
  %v379 = vmul.f32 %v378, 1.442695
  %v380 = vpow.pop %v379
  %v381 = vsel %vm327, %v380, 0.0
  %382 = vadd.xlane.f32.xlu0 %v381
  %v383 = vpop.xlane.xlu0 %382
  %v384 = vrcp.pop %v383
  %v385 = vmul.f32 %v380, %v384
  %v386 = vpack.c.bf16 %v385, %v385
  %388 = vrot.lane.b32.xlu0 %v326, 112
  %v389 = vpop.permute.xlu0 %388
  %v391 = vsel %vm327, %v386, 0
  %vm393 = vcmask 1043456
  %v395 = vsel %vm393, %v389, 0
  %397 = vmatprep.subr.bf16.mxu0 0
  %398 = vmatpush1.bf16.msra.mxu0 %v395
  %399 = vmatprep.subr.bf16.mxu0 0
  %400 = vmatpush1.bf16.msra.mxu0 0
  %401 = vmatprep.subr.bf16.mxu0 0
  %402 = vmatpush1.bf16.msra.mxu0 0
  %403 = vmatprep.subr.bf16.mxu0 0
  %404 = vmatpush1.bf16.msra.mxu0 0
  %405 = vmatprep.subr.bf16.mxu0 0
  %406 = vmatpush1.bf16.msra.mxu0 0
  %407 = vmatprep.subr.bf16.mxu0 0
  %408 = vmatpush1.bf16.msra.mxu0 0
  %409 = vmatprep.subr.bf16.mxu0 0
  %410 = vmatpush1.bf16.msra.mxu0 0
  %411 = vmatprep.subr.bf16.mxu0 0
  %412 = vmatpush1.bf16.msra.mxu0 0
  %413 = vmatprep.subr.bf16.mxu0 0
  %414 = vmatpush1.bf16.msra.mxu0 0
  %415 = vmatprep.subr.bf16.mxu0 0
  %416 = vmatpush1.bf16.msra.mxu0 0
  %417 = vmatprep.subr.bf16.mxu0 0
  %418 = vmatpush1.bf16.msra.mxu0 0
  %419 = vmatprep.subr.bf16.mxu0 0
  %420 = vmatpush1.bf16.msra.mxu0 0
  %421 = vmatprep.subr.bf16.mxu0 0
  %422 = vmatpush1.bf16.msra.mxu0 0
  %423 = vmatprep.subr.bf16.mxu0 0
  %424 = vmatpush1.bf16.msra.mxu0 0
  %425 = vmatprep.subr.bf16.mxu0 0
  %426 = vmatpush1.bf16.msra.mxu0 0
  %427 = vmatprep.subr.bf16.mxu0 0
  %428 = vmatpush1.bf16.msra.mxu0 0
  %429 = vmatprep.mubr.bf16.mxu0 0
  %430 = vmatmul.mubr.bf16.gmra.mrb[0].mxu0 %v391
  %v431 = vpop.f32.mrb[0].mxu0
  %v432 = vadd.f32 0.0, %v431
  %v433 = vpop.f32.mrb[0].mxu0
  %v434 = vpop.f32.mrb[0].mxu0
  %v435 = vpop.f32.mrb[0].mxu0
  %436 = vdwg.mxu0
  %438 = vrot.lane.b32.xlu0 %v325, 120
  %v439 = vpop.permute.xlu0 %438
  %440 = vrot.lane.b32.xlu0 %v326, 120
  %v441 = vpop.permute.xlu0 %440
  %v443 = vsel %vm327, %v439, 0
  %v446 = vsel %vm327, %v441, 0
  %448 = vmatprep.subr.bf16.mxu0 0
  %449 = vmatpush1.bf16.xpose.msra.mxu0 %v446
  %450 = vmatprep.subr.bf16.mxu0 0
  %451 = vmatpush1.bf16.xpose.msra.mxu0 0
  %452 = vmatprep.subr.bf16.mxu0 0
  %453 = vmatpush1.bf16.xpose.msra.mxu0 0
  %454 = vmatprep.subr.bf16.mxu0 0
  %455 = vmatpush1.bf16.xpose.msra.mxu0 0
  %456 = vmatprep.subr.bf16.mxu0 0
  %457 = vmatpush1.bf16.xpose.msra.mxu0 0
  %458 = vmatprep.subr.bf16.mxu0 0
  %459 = vmatpush1.bf16.xpose.msra.mxu0 0
  %460 = vmatprep.subr.bf16.mxu0 0
  %461 = vmatpush1.bf16.xpose.msra.mxu0 0
  %462 = vmatprep.subr.bf16.mxu0 0
  %463 = vmatpush1.bf16.xpose.msra.mxu0 0
  %464 = vmatprep.subr.bf16.mxu0 0
  %465 = vmatpush1.bf16.xpose.msra.mxu0 0
  %466 = vmatprep.subr.bf16.mxu0 0
  %467 = vmatpush1.bf16.xpose.msra.mxu0 0
  %468 = vmatprep.subr.bf16.mxu0 0
  %469 = vmatpush1.bf16.xpose.msra.mxu0 0
  %470 = vmatprep.subr.bf16.mxu0 0
  %471 = vmatpush1.bf16.xpose.msra.mxu0 0
  %472 = vmatprep.subr.bf16.mxu0 0
  %473 = vmatpush1.bf16.xpose.msra.mxu0 0
  %474 = vmatprep.subr.bf16.mxu0 0
  %475 = vmatpush1.bf16.xpose.msra.mxu0 0
  %476 = vmatprep.subr.bf16.mxu0 0
  %477 = vmatpush1.bf16.xpose.msra.mxu0 0
  %478 = vmatprep.subr.bf16.mxu0 0
  %479 = vmatpush1.bf16.xpose.msra.mxu0 0
  %480 = vmatprep.mubr.bf16.mxu0 0
  %481 = vmatmul.mubr.bf16.gmra.mrb[0].mxu0 %v443
  %v482 = vpop.f32.mrb[0].mxu0
  %v483 = vadd.f32 0.0, %v482
  %v484 = vpop.f32.mrb[0].mxu0
  %v485 = vpop.f32.mrb[0].mxu0
  %v486 = vpop.f32.mrb[0].mxu0
  %487 = vdwg.mxu0
  %v488 = vmul.f32 %v483, 0.35355338
  %v489 = vsel %vm327, %v488, -inf
  %490 = vmax.xlane.f32.xlu0 %v489
  %v491 = vpop.xlane.xlu0 %490
  %v492 = vsub.f32 %v488, %v491
  %v493 = vmul.f32 %v492, 1.442695
  %v494 = vpow.pop %v493
  %v495 = vsel %vm327, %v494, 0.0
  %496 = vadd.xlane.f32.xlu0 %v495
  %v497 = vpop.xlane.xlu0 %496
  %v498 = vrcp.pop %v497
  %v499 = vmul.f32 %v494, %v498
  %v500 = vpack.c.bf16 %v499, %v499
  %501 = vrot.lane.b32.xlu0 %v326, 104
  %v502 = vpop.permute.xlu0 %501
  %v504 = vsel %vm327, %v500, 0
  %v507 = vsel %vm393, %v502, 0
  %509 = vmatprep.subr.bf16.mxu0 0
  %510 = vmatpush1.bf16.msra.mxu0 %v507
  %511 = vmatprep.subr.bf16.mxu0 0
  %512 = vmatpush1.bf16.msra.mxu0 0
  %513 = vmatprep.subr.bf16.mxu0 0
  %514 = vmatpush1.bf16.msra.mxu0 0
  %515 = vmatprep.subr.bf16.mxu0 0
  %516 = vmatpush1.bf16.msra.mxu0 0
  %517 = vmatprep.subr.bf16.mxu0 0
  %518 = vmatpush1.bf16.msra.mxu0 0
  %519 = vmatprep.subr.bf16.mxu0 0
  %520 = vmatpush1.bf16.msra.mxu0 0
  %521 = vmatprep.subr.bf16.mxu0 0
  %522 = vmatpush1.bf16.msra.mxu0 0
  %523 = vmatprep.subr.bf16.mxu0 0
  %524 = vmatpush1.bf16.msra.mxu0 0
  %525 = vmatprep.subr.bf16.mxu0 0
  %526 = vmatpush1.bf16.msra.mxu0 0
  %527 = vmatprep.subr.bf16.mxu0 0
  %528 = vmatpush1.bf16.msra.mxu0 0
  %529 = vmatprep.subr.bf16.mxu0 0
  %530 = vmatpush1.bf16.msra.mxu0 0
  %531 = vmatprep.subr.bf16.mxu0 0
  %532 = vmatpush1.bf16.msra.mxu0 0
  %533 = vmatprep.subr.bf16.mxu0 0
  %534 = vmatpush1.bf16.msra.mxu0 0
  %535 = vmatprep.subr.bf16.mxu0 0
  %536 = vmatpush1.bf16.msra.mxu0 0
  %537 = vmatprep.subr.bf16.mxu0 0
  %538 = vmatpush1.bf16.msra.mxu0 0
  %539 = vmatprep.subr.bf16.mxu0 0
  %540 = vmatpush1.bf16.msra.mxu0 0
  %541 = vmatprep.mubr.bf16.mxu0 0
  %542 = vmatmul.mubr.bf16.gmra.mrb[0].mxu0 %v504
  %v543 = vpop.f32.mrb[0].mxu0
  %v544 = vadd.f32 0.0, %v543
  %v545 = vpop.f32.mrb[0].mxu0
  %v546 = vpop.f32.mrb[0].mxu0
  %v547 = vpop.f32.mrb[0].mxu0
  %548 = vdwg.mxu0
  %550 = vrot.lane.b32.xlu0 %v544, 8
  %v551 = vpop.permute.xlu0 %550
  %v553 = vsel %vm327, %v432, %v551
  %v554 = vpack.c.bf16 %v271, %v271
  %v555 = vpack.c.bf16 %v322, %v322
  %v557 = vsel %vm327, %v554, 0
  %v560 = vsel %vm327, %v555, 0
  %562 = vmatprep.subr.bf16.mxu0 0
  %563 = vmatpush1.bf16.xpose.msra.mxu0 %v560
  %564 = vmatprep.subr.bf16.mxu0 0
  %565 = vmatpush1.bf16.xpose.msra.mxu0 0
  %566 = vmatprep.subr.bf16.mxu0 0
  %567 = vmatpush1.bf16.xpose.msra.mxu0 0
  %568 = vmatprep.subr.bf16.mxu0 0
  %569 = vmatpush1.bf16.xpose.msra.mxu0 0
  %570 = vmatprep.subr.bf16.mxu0 0
  %571 = vmatpush1.bf16.xpose.msra.mxu0 0
  %572 = vmatprep.subr.bf16.mxu0 0
  %573 = vmatpush1.bf16.xpose.msra.mxu0 0
  %574 = vmatprep.subr.bf16.mxu0 0
  %575 = vmatpush1.bf16.xpose.msra.mxu0 0
  %576 = vmatprep.subr.bf16.mxu0 0
  %577 = vmatpush1.bf16.xpose.msra.mxu0 0
  %578 = vmatprep.subr.bf16.mxu0 0
  %579 = vmatpush1.bf16.xpose.msra.mxu0 0
  %580 = vmatprep.subr.bf16.mxu0 0
  %581 = vmatpush1.bf16.xpose.msra.mxu0 0
  %582 = vmatprep.subr.bf16.mxu0 0
  %583 = vmatpush1.bf16.xpose.msra.mxu0 0
  %584 = vmatprep.subr.bf16.mxu0 0
  %585 = vmatpush1.bf16.xpose.msra.mxu0 0
  %586 = vmatprep.subr.bf16.mxu0 0
  %587 = vmatpush1.bf16.xpose.msra.mxu0 0
  %588 = vmatprep.subr.bf16.mxu0 0
  %589 = vmatpush1.bf16.xpose.msra.mxu0 0
  %590 = vmatprep.subr.bf16.mxu0 0
  %591 = vmatpush1.bf16.xpose.msra.mxu0 0
  %592 = vmatprep.subr.bf16.mxu0 0
  %593 = vmatpush1.bf16.xpose.msra.mxu0 0
  %594 = vmatprep.mubr.bf16.mxu0 0
  %595 = vmatmul.mubr.bf16.gmra.mrb[0].mxu0 %v557
  %v596 = vpop.f32.mrb[0].mxu0
  %v597 = vadd.f32 0.0, %v596
  %v598 = vpop.f32.mrb[0].mxu0
  %v599 = vpop.f32.mrb[0].mxu0
  %v600 = vpop.f32.mrb[0].mxu0
  %601 = vdwg.mxu0
  %v602 = vmul.f32 %v597, 0.35355338
  %v603 = vsel %vm327, %v602, -inf
  %604 = vmax.xlane.f32.xlu0 %v603
  %v605 = vpop.xlane.xlu0 %604
  %v606 = vsub.f32 %v602, %v605
  %v607 = vmul.f32 %v606, 1.442695
  %v608 = vpow.pop %v607
  %v609 = vsel %vm327, %v608, 0.0
  %610 = vadd.xlane.f32.xlu0 %v609
  %v611 = vpop.xlane.xlu0 %610
  %v612 = vrcp.pop %v611
  %v613 = vmul.f32 %v608, %v612
  %v614 = vpack.c.bf16 %v613, %v613
  %616 = vrot.lane.b32.xlu0 %v555, 112
  %v617 = vpop.permute.xlu0 %616
  %v619 = vsel %vm327, %v614, 0
  %v622 = vsel %vm393, %v617, 0
  %624 = vmatprep.subr.bf16.mxu0 0
  %625 = vmatpush1.bf16.msra.mxu0 %v622
  %626 = vmatprep.subr.bf16.mxu0 0
  %627 = vmatpush1.bf16.msra.mxu0 0
  %628 = vmatprep.subr.bf16.mxu0 0
  %629 = vmatpush1.bf16.msra.mxu0 0
  %630 = vmatprep.subr.bf16.mxu0 0
  %631 = vmatpush1.bf16.msra.mxu0 0
  %632 = vmatprep.subr.bf16.mxu0 0
  %633 = vmatpush1.bf16.msra.mxu0 0
  %634 = vmatprep.subr.bf16.mxu0 0
  %635 = vmatpush1.bf16.msra.mxu0 0
  %636 = vmatprep.subr.bf16.mxu0 0
  %637 = vmatpush1.bf16.msra.mxu0 0
  %638 = vmatprep.subr.bf16.mxu0 0
  %639 = vmatpush1.bf16.msra.mxu0 0
  %640 = vmatprep.subr.bf16.mxu0 0
  %641 = vmatpush1.bf16.msra.mxu0 0
  %642 = vmatprep.subr.bf16.mxu0 0
  %643 = vmatpush1.bf16.msra.mxu0 0
  %644 = vmatprep.subr.bf16.mxu0 0
  %645 = vmatpush1.bf16.msra.mxu0 0
  %646 = vmatprep.subr.bf16.mxu0 0
  %647 = vmatpush1.bf16.msra.mxu0 0
  %648 = vmatprep.subr.bf16.mxu0 0
  %649 = vmatpush1.bf16.msra.mxu0 0
  %650 = vmatprep.subr.bf16.mxu0 0
  %651 = vmatpush1.bf16.msra.mxu0 0
  %652 = vmatprep.subr.bf16.mxu0 0
  %653 = vmatpush1.bf16.msra.mxu0 0
  %654 = vmatprep.subr.bf16.mxu0 0
  %655 = vmatpush1.bf16.msra.mxu0 0
  %656 = vmatprep.mubr.bf16.mxu0 0
  %657 = vmatmul.mubr.bf16.gmra.mrb[0].mxu0 %v619
  %v658 = vpop.f32.mrb[0].mxu0
  %v659 = vadd.f32 0.0, %v658
  %v660 = vpop.f32.mrb[0].mxu0
  %v661 = vpop.f32.mrb[0].mxu0
  %v662 = vpop.f32.mrb[0].mxu0
  %663 = vdwg.mxu0
  %665 = vrot.lane.b32.xlu0 %v554, 120
  %v666 = vpop.permute.xlu0 %665
  %667 = vrot.lane.b32.xlu0 %v555, 120
  %v668 = vpop.permute.xlu0 %667
  %v670 = vsel %vm327, %v666, 0
  %v673 = vsel %vm327, %v668, 0
  %675 = vmatprep.subr.bf16.mxu0 0
  %676 = vmatpush1.bf16.xpose.msra.mxu0 %v673
  %677 = vmatprep.subr.bf16.mxu0 0
  %678 = vmatpush1.bf16.xpose.msra.mxu0 0
  %679 = vmatprep.subr.bf16.mxu0 0
  %680 = vmatpush1.bf16.xpose.msra.mxu0 0
  %681 = vmatprep.subr.bf16.mxu0 0
  %682 = vmatpush1.bf16.xpose.msra.mxu0 0
  %683 = vmatprep.subr.bf16.mxu0 0
  %684 = vmatpush1.bf16.xpose.msra.mxu0 0
  %685 = vmatprep.subr.bf16.mxu0 0
  %686 = vmatpush1.bf16.xpose.msra.mxu0 0
  %687 = vmatprep.subr.bf16.mxu0 0
  %688 = vmatpush1.bf16.xpose.msra.mxu0 0
  %689 = vmatprep.subr.bf16.mxu0 0
  %690 = vmatpush1.bf16.xpose.msra.mxu0 0
  %691 = vmatprep.subr.bf16.mxu0 0
  %692 = vmatpush1.bf16.xpose.msra.mxu0 0
  %693 = vmatprep.subr.bf16.mxu0 0
  %694 = vmatpush1.bf16.xpose.msra.mxu0 0
  %695 = vmatprep.subr.bf16.mxu0 0
  %696 = vmatpush1.bf16.xpose.msra.mxu0 0
  %697 = vmatprep.subr.bf16.mxu0 0
  %698 = vmatpush1.bf16.xpose.msra.mxu0 0
  %699 = vmatprep.subr.bf16.mxu0 0
  %700 = vmatpush1.bf16.xpose.msra.mxu0 0
  %701 = vmatprep.subr.bf16.mxu0 0
  %702 = vmatpush1.bf16.xpose.msra.mxu0 0
  %703 = vmatprep.subr.bf16.mxu0 0
  %704 = vmatpush1.bf16.xpose.msra.mxu0 0
  %705 = vmatprep.subr.bf16.mxu0 0
  %706 = vmatpush1.bf16.xpose.msra.mxu0 0
  %707 = vmatprep.mubr.bf16.mxu0 0
  %708 = vmatmul.mubr.bf16.gmra.mrb[0].mxu0 %v670
  %v709 = vpop.f32.mrb[0].mxu0
  %v710 = vadd.f32 0.0, %v709
  %v711 = vpop.f32.mrb[0].mxu0
  %v712 = vpop.f32.mrb[0].mxu0
  %v713 = vpop.f32.mrb[0].mxu0
  %714 = vdwg.mxu0
  %v715 = vmul.f32 %v710, 0.35355338
  %v716 = vsel %vm327, %v715, -inf
  %717 = vmax.xlane.f32.xlu0 %v716
  %v718 = vpop.xlane.xlu0 %717
  %v719 = vsub.f32 %v715, %v718
  %v720 = vmul.f32 %v719, 1.442695
  %v721 = vpow.pop %v720
  %v722 = vsel %vm327, %v721, 0.0
  %723 = vadd.xlane.f32.xlu0 %v722
  %v724 = vpop.xlane.xlu0 %723
  %v725 = vrcp.pop %v724
  %v726 = vmul.f32 %v721, %v725
  %v727 = vpack.c.bf16 %v726, %v726
  %728 = vrot.lane.b32.xlu0 %v555, 104
  %v729 = vpop.permute.xlu0 %728
  %v731 = vsel %vm327, %v727, 0
  %v734 = vsel %vm393, %v729, 0
  %736 = vmatprep.subr.bf16.mxu0 0
  %737 = vmatpush1.bf16.msra.mxu0 %v734
  %738 = vmatprep.subr.bf16.mxu0 0
  %739 = vmatpush1.bf16.msra.mxu0 0
  %740 = vmatprep.subr.bf16.mxu0 0
  %741 = vmatpush1.bf16.msra.mxu0 0
  %742 = vmatprep.subr.bf16.mxu0 0
  %743 = vmatpush1.bf16.msra.mxu0 0
  %744 = vmatprep.subr.bf16.mxu0 0
  %745 = vmatpush1.bf16.msra.mxu0 0
  %746 = vmatprep.subr.bf16.mxu0 0
  %747 = vmatpush1.bf16.msra.mxu0 0
  %748 = vmatprep.subr.bf16.mxu0 0
  %749 = vmatpush1.bf16.msra.mxu0 0
  %750 = vmatprep.subr.bf16.mxu0 0
  %751 = vmatpush1.bf16.msra.mxu0 0
  %752 = vmatprep.subr.bf16.mxu0 0
  %753 = vmatpush1.bf16.msra.mxu0 0
  %754 = vmatprep.subr.bf16.mxu0 0
  %755 = vmatpush1.bf16.msra.mxu0 0
  %756 = vmatprep.subr.bf16.mxu0 0
  %757 = vmatpush1.bf16.msra.mxu0 0
  %758 = vmatprep.subr.bf16.mxu0 0
  %759 = vmatpush1.bf16.msra.mxu0 0
  %760 = vmatprep.subr.bf16.mxu0 0
  %761 = vmatpush1.bf16.msra.mxu0 0
  %762 = vmatprep.subr.bf16.mxu0 0
  %763 = vmatpush1.bf16.msra.mxu0 0
  %764 = vmatprep.subr.bf16.mxu0 0
  %765 = vmatpush1.bf16.msra.mxu0 0
  %766 = vmatprep.subr.bf16.mxu0 0
  %767 = vmatpush1.bf16.msra.mxu0 0
  %768 = vmatprep.mubr.bf16.mxu0 0
  %769 = vmatmul.mubr.bf16.gmra.mrb[0].mxu0 %v731
  %v770 = vpop.f32.mrb[0].mxu0
  %v771 = vadd.f32 0.0, %v770
  %v772 = vpop.f32.mrb[0].mxu0
  %v773 = vpop.f32.mrb[0].mxu0
  %v774 = vpop.f32.mrb[0].mxu0
  %775 = vdwg.mxu0
  %777 = vrot.lane.b32.xlu0 %v771, 8
  %v778 = vpop.permute.xlu0 %777
  %v780 = vsel %vm327, %v659, %v778
  %v781 = vpack.c.bf16 %v780, %v553
  %v783 = vlaneseq
  %v784 = vshrl.u32 %v783, 7
  %v785 = vsub.s32 0, %v784
  %v786 = vrot.slane %v196, %v785
  %v790 = vunpack.c.l.b16 %v194
  %v791 = vunpack.c.l.b16 %v195
  %v792 = vpack.c.b16 %v791, %v790
  %v795 = vsel %vm229, %v781, 0
  %797 = vmatprep.subr.bf16.mxu0 0
  %798 = vmatpush1.bf16.msra.mxu0 %v792
  %799 = vmatprep.subr.bf16.mxu0 0
  %800 = vmatpush1.bf16.msra.mxu0 0
  %801 = vmatprep.subr.bf16.mxu0 0
  %802 = vmatpush1.bf16.msra.mxu0 0
  %803 = vmatprep.subr.bf16.mxu0 0
  %804 = vmatpush1.bf16.msra.mxu0 0
  %805 = vmatprep.subr.bf16.mxu0 0
  %806 = vmatpush1.bf16.msra.mxu0 0
  %807 = vmatprep.subr.bf16.mxu0 0
  %808 = vmatpush1.bf16.msra.mxu0 0
  %809 = vmatprep.subr.bf16.mxu0 0
  %810 = vmatpush1.bf16.msra.mxu0 0
  %811 = vmatprep.subr.bf16.mxu0 0
  %812 = vmatpush1.bf16.msra.mxu0 0
  %813 = vmatprep.subr.bf16.mxu0 0
  %814 = vmatpush1.bf16.msra.mxu0 0
  %815 = vmatprep.subr.bf16.mxu0 0
  %816 = vmatpush1.bf16.msra.mxu0 0
  %817 = vmatprep.subr.bf16.mxu0 0
  %818 = vmatpush1.bf16.msra.mxu0 0
  %819 = vmatprep.subr.bf16.mxu0 0
  %820 = vmatpush1.bf16.msra.mxu0 0
  %821 = vmatprep.subr.bf16.mxu0 0
  %822 = vmatpush1.bf16.msra.mxu0 0
  %823 = vmatprep.subr.bf16.mxu0 0
  %824 = vmatpush1.bf16.msra.mxu0 0
  %825 = vmatprep.subr.bf16.mxu0 0
  %826 = vmatpush1.bf16.msra.mxu0 0
  %827 = vmatprep.subr.bf16.mxu0 0
  %828 = vmatpush1.bf16.msra.mxu0 0
  %829 = vmatprep.mubr.bf16.mxu0 0
  %830 = vmatmul.mubr.bf16.gmra.mrb[0].mxu0 %v795
  %v831 = vpop.f32.mrb[0].mxu0
  %v832 = vadd.f32 %v786, %v831
  %v833 = vpop.f32.mrb[0].mxu0
  %v834 = vpop.f32.mrb[0].mxu0
  %v835 = vadd.f32 %v786, %v834
  %v836 = vpop.f32.mrb[0].mxu0
  %837 = vdwg.mxu0
  %v838 = vadd.f32 %v179, %v832
  %v839 = vadd.f32 %v180, %v835
  %v840 = vsel %vm229, %v838, 0.0
  %841 = vadd.xlane.f32.xlu0 %v840
  %v842 = vpop.xlane.xlu0 %841
  %v843 = vsel %vm229, %v839, 0.0
  %844 = vadd.xlane.f32.xlu0 %v843
  %v845 = vpop.xlane.xlu0 %844
  %v846 = vrcp.pop 16.0
  %v847 = vmul.f32 %v842, %v846
  %v848 = vmul.f32 %v845, %v846
  %v849 = vsub.f32 %v838, %v847
  %v850 = vsub.f32 %v839, %v848
  %v851 = vmul.f32 %v849, %v849
  %v852 = vmul.f32 %v850, %v850
  %v853 = vsel %vm229, %v851, 0.0
  %854 = vadd.xlane.f32.xlu0 %v853
  %v855 = vpop.xlane.xlu0 %854
  %v856 = vsel %vm229, %v852, 0.0
  %857 = vadd.xlane.f32.xlu0 %v856
  %v858 = vpop.xlane.xlu0 %857
  %v859 = vmul.f32 %v855, %v846
  %v860 = vmul.f32 %v858, %v846
  %v861 = vadd.f32 %v859, 1e-05
  %v862 = vadd.f32 %v860, 1e-05
  %v863 = vrsqrt.pop %v861
  %v864 = vrsqrt.pop %v862
  %v865 = vmul.f32 %v849, %v863
  %v866 = vmul.f32 %v850, %v864
  %v868 = vlaneseq
  %v869 = vshrl.u32 %v868, 7
  %v870 = vsub.s32 0, %v869
  %v871 = vrot.slane %v209, %v870
  %v873 = vmul.f32 %v865, %v871
  %v874 = vmul.f32 %v866, %v871
  %v876 = vlaneseq
  %v877 = vshrl.u32 %v876, 7
  %v878 = vsub.s32 0, %v877
  %v879 = vrot.slane %v210, %v878
  %v881 = vadd.f32 %v873, %v879
  %v882 = vadd.f32 %v874, %v879
  %v883 = vpack.c.bf16 %v882, %v881
  %v885 = vlaneseq
  %v886 = vshrl.u32 %v885, 7
  %v887 = vsub.s32 0, %v886
  %v888 = vrot.slane %v199, %v887
  %v892 = vunpack.c.l.b16 %v197
  %v893 = vunpack.c.l.b16 %v198
  %v894 = vpack.c.b16 %v893, %v892
  %v897 = vsel %vm229, %v883, 0
  %899 = vmatprep.subr.bf16.mxu0 0
  %900 = vmatpush1.bf16.msra.mxu0 %v894
  %901 = vmatprep.subr.bf16.mxu0 0
  %902 = vmatpush1.bf16.msra.mxu0 0
  %903 = vmatprep.subr.bf16.mxu0 0
  %904 = vmatpush1.bf16.msra.mxu0 0
  %905 = vmatprep.subr.bf16.mxu0 0
  %906 = vmatpush1.bf16.msra.mxu0 0
  %907 = vmatprep.subr.bf16.mxu0 0
  %908 = vmatpush1.bf16.msra.mxu0 0
  %909 = vmatprep.subr.bf16.mxu0 0
  %910 = vmatpush1.bf16.msra.mxu0 0
  %911 = vmatprep.subr.bf16.mxu0 0
  %912 = vmatpush1.bf16.msra.mxu0 0
  %913 = vmatprep.subr.bf16.mxu0 0
  %914 = vmatpush1.bf16.msra.mxu0 0
  %915 = vmatprep.subr.bf16.mxu0 0
  %916 = vmatpush1.bf16.msra.mxu0 0
  %917 = vmatprep.subr.bf16.mxu0 0
  %918 = vmatpush1.bf16.msra.mxu0 0
  %919 = vmatprep.subr.bf16.mxu0 0
  %920 = vmatpush1.bf16.msra.mxu0 0
  %921 = vmatprep.subr.bf16.mxu0 0
  %922 = vmatpush1.bf16.msra.mxu0 0
  %923 = vmatprep.subr.bf16.mxu0 0
  %924 = vmatpush1.bf16.msra.mxu0 0
  %925 = vmatprep.subr.bf16.mxu0 0
  %926 = vmatpush1.bf16.msra.mxu0 0
  %927 = vmatprep.subr.bf16.mxu0 0
  %928 = vmatpush1.bf16.msra.mxu0 0
  %929 = vmatprep.subr.bf16.mxu0 0
  %930 = vmatpush1.bf16.msra.mxu0 0
  %931 = vmatprep.mubr.bf16.mxu0 0
  %932 = vmatmul.mubr.bf16.gmra.mrb[0].mxu0 %v897
  %v933 = vpop.f32.mrb[0].mxu0
  %v934 = vadd.f32 %v888, %v933
  %v935 = vpop.f32.mrb[0].mxu0
  %v936 = vpop.f32.mrb[0].mxu0
  %v937 = vadd.f32 %v888, %v936
  %v938 = vpop.f32.mrb[0].mxu0
  %939 = vdwg.mxu0
  %v940 = vmax.f32 %v934, 0.0
  %v941 = vmax.f32 %v937, 0.0
  %v942 = vpack.c.bf16 %v941, %v940
  %v944 = vlaneseq
  %v945 = vshrl.u32 %v944, 7
  %v946 = vsub.s32 0, %v945
  %v947 = vrot.slane %v208, %v946
  %v957 = vunpack.c.l.b16 %v200
  %v958 = vunpack.c.l.b16 %v201
  %v959 = vunpack.c.l.b16 %v202
  %v960 = vunpack.c.l.b16 %v203
  %v961 = vunpack.c.l.b16 %v204
  %v962 = vunpack.c.l.b16 %v205
  %v963 = vunpack.c.l.b16 %v206
  %v964 = vunpack.c.l.b16 %v207
  %v965 = vpack.c.b16 %v958, %v957
  %v966 = vpack.c.b16 %v960, %v959
  %v967 = vpack.c.b16 %v962, %v961
  %v968 = vpack.c.b16 %v964, %v963
  %vm973 = vcmask 523264
  %v975 = vsel %vm973, %v942, 0
  %977 = vmatprep.subr.bf16.mxu0 0
  %978 = vmatpush1.bf16.msra.mxu0 %v965
  %979 = vmatprep.subr.bf16.mxu0 0
  %980 = vmatpush1.bf16.msra.mxu0 %v966
  %981 = vmatprep.subr.bf16.mxu0 0
  %982 = vmatpush1.bf16.msra.mxu0 %v967
  %983 = vmatprep.subr.bf16.mxu0 0
  %984 = vmatpush1.bf16.msra.mxu0 %v968
  %985 = vmatprep.subr.bf16.mxu0 0
  %986 = vmatpush1.bf16.msra.mxu0 0
  %987 = vmatprep.subr.bf16.mxu0 0
  %988 = vmatpush1.bf16.msra.mxu0 0
  %989 = vmatprep.subr.bf16.mxu0 0
  %990 = vmatpush1.bf16.msra.mxu0 0
  %991 = vmatprep.subr.bf16.mxu0 0
  %992 = vmatpush1.bf16.msra.mxu0 0
  %993 = vmatprep.subr.bf16.mxu0 0
  %994 = vmatpush1.bf16.msra.mxu0 0
  %995 = vmatprep.subr.bf16.mxu0 0
  %996 = vmatpush1.bf16.msra.mxu0 0
  %997 = vmatprep.subr.bf16.mxu0 0
  %998 = vmatpush1.bf16.msra.mxu0 0
  %999 = vmatprep.subr.bf16.mxu0 0
  %1000 = vmatpush1.bf16.msra.mxu0 0
  %1001 = vmatprep.subr.bf16.mxu0 0
  %1002 = vmatpush1.bf16.msra.mxu0 0
  %1003 = vmatprep.subr.bf16.mxu0 0
  %1004 = vmatpush1.bf16.msra.mxu0 0
  %1005 = vmatprep.subr.bf16.mxu0 0
  %1006 = vmatpush1.bf16.msra.mxu0 0
  %1007 = vmatprep.subr.bf16.mxu0 0
  %1008 = vmatpush1.bf16.msra.mxu0 0
  %1009 = vmatprep.mubr.bf16.mxu0 0
  %1010 = vmatmul.mubr.bf16.gmra.mrb[0].mxu0 %v975
  %v1011 = vpop.f32.mrb[0].mxu0
  %v1012 = vadd.f32 %v947, %v1011
  %v1013 = vpop.f32.mrb[0].mxu0
  %v1014 = vpop.f32.mrb[0].mxu0
  %v1015 = vadd.f32 %v947, %v1014
  %v1016 = vpop.f32.mrb[0].mxu0
  %1017 = vdwg.mxu0
  %v1018 = vadd.f32 %v881, %v1012
  %v1019 = vadd.f32 %v882, %v1015
  %v1020 = vsel %vm229, %v1018, 0.0
  %1021 = vadd.xlane.f32.xlu0 %v1020
  %v1022 = vpop.xlane.xlu0 %1021
  %v1023 = vsel %vm229, %v1019, 0.0
  %1024 = vadd.xlane.f32.xlu0 %v1023
  %v1025 = vpop.xlane.xlu0 %1024
  %v1026 = vmul.f32 %v1022, %v846
  %v1027 = vmul.f32 %v1025, %v846
  %v1028 = vsub.f32 %v1018, %v1026
  %v1029 = vsub.f32 %v1019, %v1027
  %v1030 = vmul.f32 %v1028, %v1028
  %v1031 = vmul.f32 %v1029, %v1029
  %v1032 = vsel %vm229, %v1030, 0.0
  %1033 = vadd.xlane.f32.xlu0 %v1032
  %v1034 = vpop.xlane.xlu0 %1033
  %v1035 = vsel %vm229, %v1031, 0.0
  %1036 = vadd.xlane.f32.xlu0 %v1035
  %v1037 = vpop.xlane.xlu0 %1036
  %v1038 = vmul.f32 %v1034, %v846
  %v1039 = vmul.f32 %v1037, %v846
  %v1040 = vadd.f32 %v1038, 1e-05
  %v1041 = vadd.f32 %v1039, 1e-05
  %v1042 = vrsqrt.pop %v1040
  %v1043 = vrsqrt.pop %v1041
  %v1044 = vmul.f32 %v1028, %v1042
  %v1045 = vmul.f32 %v1029, %v1043
  %v1047 = vlaneseq
  %v1048 = vshrl.u32 %v1047, 7
  %v1049 = vsub.s32 0, %v1048
  %v1050 = vrot.slane %v211, %v1049
  %v1052 = vmul.f32 %v1044, %v1050
  %v1053 = vmul.f32 %v1045, %v1050
  %v1055 = vlaneseq
  %v1056 = vshrl.u32 %v1055, 7
  %v1057 = vsub.s32 0, %v1056
  %v1058 = vrot.slane %v212, %v1057
  %v1060 = vadd.f32 %v1052, %v1058
  %v1061 = vadd.f32 %v1053, %v1058
  %v1062 = vld [vmem:[%s29] sm:$0xf]
  %v1063 = vld [vmem:[%s29 + $0x4] sm:$0xf]
  %v1064 = vld [vmem:[%s31] sm:$0x1]
  %v1065 = vld [vmem:[%s33] sm:$0xf]
  %v1066 = vld [vmem:[%s33 + $0x4] sm:$0xf]
  %v1067 = vld [vmem:[%s35] sm:$0x1]
  %v1068 = vld [vmem:[%s37] sm:$0xf]
  %v1069 = vld [vmem:[%s37 + $0x4] sm:$0xf]
  %v1070 = vld [vmem:[%s39] sm:$0x1]
  %v1071 = vld [vmem:[%s41] sm:$0xf]
  %v1072 = vld [vmem:[%s41 + $0x4] sm:$0xf]
  %v1073 = vld [vmem:[%s41 + $0x8] sm:$0xf]
  %v1074 = vld [vmem:[%s41 + $0xc] sm:$0xf]
  %v1075 = vld [vmem:[%s41 + $0x10] sm:$0xf]
  %v1076 = vld [vmem:[%s41 + $0x14] sm:$0xf]
  %v1077 = vld [vmem:[%s41 + $0x18] sm:$0xf]
  %v1078 = vld [vmem:[%s41 + $0x1c] sm:$0xf]
  %v1079 = vld [vmem:[%s43] sm:$0x1]
  %v1080 = vld [vmem:[%s45] sm:$0x1]
  %v1081 = vld [vmem:[%s47] sm:$0x1]
  %v1082 = vld [vmem:[%s49] sm:$0x1]
  %v1083 = vld [vmem:[%s51] sm:$0x1]
  %v1084 = vpack.c.bf16 %v1061, %v1060
  %v1086 = vlaneseq
  %v1087 = vshrl.u32 %v1086, 7
  %v1088 = vsub.s32 0, %v1087
  %v1089 = vrot.slane %v1064, %v1088
  %v1093 = vunpack.c.l.b16 %v1062
  %v1094 = vunpack.c.l.b16 %v1063
  %v1095 = vpack.c.b16 %v1094, %v1093
  %v1098 = vsel %vm229, %v1084, 0
  %1100 = vmatprep.subr.bf16.mxu0 0
  %1101 = vmatpush1.bf16.msra.mxu0 %v1095
  %1102 = vmatprep.subr.bf16.mxu0 0
  %1103 = vmatpush1.bf16.msra.mxu0 0
  %1104 = vmatprep.subr.bf16.mxu0 0
  %1105 = vmatpush1.bf16.msra.mxu0 0
  %1106 = vmatprep.subr.bf16.mxu0 0
  %1107 = vmatpush1.bf16.msra.mxu0 0
  %1108 = vmatprep.subr.bf16.mxu0 0
  %1109 = vmatpush1.bf16.msra.mxu0 0
  %1110 = vmatprep.subr.bf16.mxu0 0
  %1111 = vmatpush1.bf16.msra.mxu0 0
  %1112 = vmatprep.subr.bf16.mxu0 0
  %1113 = vmatpush1.bf16.msra.mxu0 0
  %1114 = vmatprep.subr.bf16.mxu0 0
  %1115 = vmatpush1.bf16.msra.mxu0 0
  %1116 = vmatprep.subr.bf16.mxu0 0
  %1117 = vmatpush1.bf16.msra.mxu0 0
  %1118 = vmatprep.subr.bf16.mxu0 0
  %1119 = vmatpush1.bf16.msra.mxu0 0
  %1120 = vmatprep.subr.bf16.mxu0 0
  %1121 = vmatpush1.bf16.msra.mxu0 0
  %1122 = vmatprep.subr.bf16.mxu0 0
  %1123 = vmatpush1.bf16.msra.mxu0 0
  %1124 = vmatprep.subr.bf16.mxu0 0
  %1125 = vmatpush1.bf16.msra.mxu0 0
  %1126 = vmatprep.subr.bf16.mxu0 0
  %1127 = vmatpush1.bf16.msra.mxu0 0
  %1128 = vmatprep.subr.bf16.mxu0 0
  %1129 = vmatpush1.bf16.msra.mxu0 0
  %1130 = vmatprep.subr.bf16.mxu0 0
  %1131 = vmatpush1.bf16.msra.mxu0 0
  %1132 = vmatprep.mubr.bf16.mxu0 0
  %1133 = vmatmul.mubr.bf16.gmra.mrb[0].mxu0 %v1098
  %v1134 = vpop.f32.mrb[0].mxu0
  %v1135 = vadd.f32 %v1089, %v1134
  %v1136 = vpop.f32.mrb[0].mxu0
  %v1137 = vpop.f32.mrb[0].mxu0
  %v1138 = vadd.f32 %v1089, %v1137
  %v1139 = vpop.f32.mrb[0].mxu0
  %1140 = vdwg.mxu0
  %1141 = vrot.lane.b32.xlu0 %v1095, 112
  %v1142 = vpop.permute.xlu0 %1141
  %1144 = vrot.lane.b32.xlu0 %v1089, 112
  %v1145 = vpop.permute.xlu0 %1144
  %1147 = vmatprep.subr.bf16.mxu0 0
  %1148 = vmatpush1.bf16.msra.mxu0 %v1142
  %1149 = vmatprep.subr.bf16.mxu0 0
  %1150 = vmatpush1.bf16.msra.mxu0 0
  %1151 = vmatprep.subr.bf16.mxu0 0
  %1152 = vmatpush1.bf16.msra.mxu0 0
  %1153 = vmatprep.subr.bf16.mxu0 0
  %1154 = vmatpush1.bf16.msra.mxu0 0
  %1155 = vmatprep.subr.bf16.mxu0 0
  %1156 = vmatpush1.bf16.msra.mxu0 0
  %1157 = vmatprep.subr.bf16.mxu0 0
  %1158 = vmatpush1.bf16.msra.mxu0 0
  %1159 = vmatprep.subr.bf16.mxu0 0
  %1160 = vmatpush1.bf16.msra.mxu0 0
  %1161 = vmatprep.subr.bf16.mxu0 0
  %1162 = vmatpush1.bf16.msra.mxu0 0
  %1163 = vmatprep.subr.bf16.mxu0 0
  %1164 = vmatpush1.bf16.msra.mxu0 0
  %1165 = vmatprep.subr.bf16.mxu0 0
  %1166 = vmatpush1.bf16.msra.mxu0 0
  %1167 = vmatprep.subr.bf16.mxu0 0
  %1168 = vmatpush1.bf16.msra.mxu0 0
  %1169 = vmatprep.subr.bf16.mxu0 0
  %1170 = vmatpush1.bf16.msra.mxu0 0
  %1171 = vmatprep.subr.bf16.mxu0 0
  %1172 = vmatpush1.bf16.msra.mxu0 0
  %1173 = vmatprep.subr.bf16.mxu0 0
  %1174 = vmatpush1.bf16.msra.mxu0 0
  %1175 = vmatprep.subr.bf16.mxu0 0
  %1176 = vmatpush1.bf16.msra.mxu0 0
  %1177 = vmatprep.subr.bf16.mxu0 0
  %1178 = vmatpush1.bf16.msra.mxu0 0
  %1179 = vmatprep.mubr.bf16.mxu0 0
  %1180 = vmatmul.mubr.bf16.gmra.mrb[0].mxu0 %v231
  %v1181 = vpop.f32.mrb[0].mxu0
  %v1182 = vadd.f32 %v1145, %v1181
  %v1183 = vpop.f32.mrb[0].mxu0
  %v1184 = vpop.f32.mrb[0].mxu0
  %v1185 = vadd.f32 %v1145, %v1184
  %v1186 = vpop.f32.mrb[0].mxu0
  %1187 = vdwg.mxu0
  %v1188 = vpack.c.bf16 %v1135, %v1135
  %v1189 = vpack.c.bf16 %v1182, %v1182
  %v1191 = vsel %vm327, %v1188, 0
  %v1194 = vsel %vm327, %v1189, 0
  %1196 = vmatprep.subr.bf16.mxu0 0
  %1197 = vmatpush1.bf16.xpose.msra.mxu0 %v1194
  %1198 = vmatprep.subr.bf16.mxu0 0
  %1199 = vmatpush1.bf16.xpose.msra.mxu0 0
  %1200 = vmatprep.subr.bf16.mxu0 0
  %1201 = vmatpush1.bf16.xpose.msra.mxu0 0
  %1202 = vmatprep.subr.bf16.mxu0 0
  %1203 = vmatpush1.bf16.xpose.msra.mxu0 0
  %1204 = vmatprep.subr.bf16.mxu0 0
  %1205 = vmatpush1.bf16.xpose.msra.mxu0 0
  %1206 = vmatprep.subr.bf16.mxu0 0
  %1207 = vmatpush1.bf16.xpose.msra.mxu0 0
  %1208 = vmatprep.subr.bf16.mxu0 0
  %1209 = vmatpush1.bf16.xpose.msra.mxu0 0
  %1210 = vmatprep.subr.bf16.mxu0 0
  %1211 = vmatpush1.bf16.xpose.msra.mxu0 0
  %1212 = vmatprep.subr.bf16.mxu0 0
  %1213 = vmatpush1.bf16.xpose.msra.mxu0 0
  %1214 = vmatprep.subr.bf16.mxu0 0
  %1215 = vmatpush1.bf16.xpose.msra.mxu0 0
  %1216 = vmatprep.subr.bf16.mxu0 0
  %1217 = vmatpush1.bf16.xpose.msra.mxu0 0
  %1218 = vmatprep.subr.bf16.mxu0 0
  %1219 = vmatpush1.bf16.xpose.msra.mxu0 0
  %1220 = vmatprep.subr.bf16.mxu0 0
  %1221 = vmatpush1.bf16.xpose.msra.mxu0 0
  %1222 = vmatprep.subr.bf16.mxu0 0
  %1223 = vmatpush1.bf16.xpose.msra.mxu0 0
  %1224 = vmatprep.subr.bf16.mxu0 0
  %1225 = vmatpush1.bf16.xpose.msra.mxu0 0
  %1226 = vmatprep.subr.bf16.mxu0 0
  %1227 = vmatpush1.bf16.xpose.msra.mxu0 0
  %1228 = vmatprep.mubr.bf16.mxu0 0
  %1229 = vmatmul.mubr.bf16.gmra.mrb[0].mxu0 %v1191
  %v1230 = vpop.f32.mrb[0].mxu0
  %v1231 = vadd.f32 0.0, %v1230
  %v1232 = vpop.f32.mrb[0].mxu0
  %v1233 = vpop.f32.mrb[0].mxu0
  %v1234 = vpop.f32.mrb[0].mxu0
  %1235 = vdwg.mxu0
  %v1236 = vmul.f32 %v1231, 0.35355338
  %v1237 = vsel %vm327, %v1236, -inf
  %1238 = vmax.xlane.f32.xlu0 %v1237
  %v1239 = vpop.xlane.xlu0 %1238
  %v1240 = vsub.f32 %v1236, %v1239
  %v1241 = vmul.f32 %v1240, 1.442695
  %v1242 = vpow.pop %v1241
  %v1243 = vsel %vm327, %v1242, 0.0
  %1244 = vadd.xlane.f32.xlu0 %v1243
  %v1245 = vpop.xlane.xlu0 %1244
  %v1246 = vrcp.pop %v1245
  %v1247 = vmul.f32 %v1242, %v1246
  %v1248 = vpack.c.bf16 %v1247, %v1247
  %1250 = vrot.lane.b32.xlu0 %v1189, 112
  %v1251 = vpop.permute.xlu0 %1250
  %v1253 = vsel %vm327, %v1248, 0
  %v1256 = vsel %vm393, %v1251, 0
  %1258 = vmatprep.subr.bf16.mxu0 0
  %1259 = vmatpush1.bf16.msra.mxu0 %v1256
  %1260 = vmatprep.subr.bf16.mxu0 0
  %1261 = vmatpush1.bf16.msra.mxu0 0
  %1262 = vmatprep.subr.bf16.mxu0 0
  %1263 = vmatpush1.bf16.msra.mxu0 0
  %1264 = vmatprep.subr.bf16.mxu0 0
  %1265 = vmatpush1.bf16.msra.mxu0 0
  %1266 = vmatprep.subr.bf16.mxu0 0
  %1267 = vmatpush1.bf16.msra.mxu0 0
  %1268 = vmatprep.subr.bf16.mxu0 0
  %1269 = vmatpush1.bf16.msra.mxu0 0
  %1270 = vmatprep.subr.bf16.mxu0 0
  %1271 = vmatpush1.bf16.msra.mxu0 0
  %1272 = vmatprep.subr.bf16.mxu0 0
  %1273 = vmatpush1.bf16.msra.mxu0 0
  %1274 = vmatprep.subr.bf16.mxu0 0
  %1275 = vmatpush1.bf16.msra.mxu0 0
  %1276 = vmatprep.subr.bf16.mxu0 0
  %1277 = vmatpush1.bf16.msra.mxu0 0
  %1278 = vmatprep.subr.bf16.mxu0 0
  %1279 = vmatpush1.bf16.msra.mxu0 0
  %1280 = vmatprep.subr.bf16.mxu0 0
  %1281 = vmatpush1.bf16.msra.mxu0 0
  %1282 = vmatprep.subr.bf16.mxu0 0
  %1283 = vmatpush1.bf16.msra.mxu0 0
  %1284 = vmatprep.subr.bf16.mxu0 0
  %1285 = vmatpush1.bf16.msra.mxu0 0
  %1286 = vmatprep.subr.bf16.mxu0 0
  %1287 = vmatpush1.bf16.msra.mxu0 0
  %1288 = vmatprep.subr.bf16.mxu0 0
  %1289 = vmatpush1.bf16.msra.mxu0 0
  %1290 = vmatprep.mubr.bf16.mxu0 0
  %1291 = vmatmul.mubr.bf16.gmra.mrb[0].mxu0 %v1253
  %v1292 = vpop.f32.mrb[0].mxu0
  %v1293 = vadd.f32 0.0, %v1292
  %v1294 = vpop.f32.mrb[0].mxu0
  %v1295 = vpop.f32.mrb[0].mxu0
  %v1296 = vpop.f32.mrb[0].mxu0
  %1297 = vdwg.mxu0
  %1299 = vrot.lane.b32.xlu0 %v1188, 120
  %v1300 = vpop.permute.xlu0 %1299
  %1301 = vrot.lane.b32.xlu0 %v1189, 120
  %v1302 = vpop.permute.xlu0 %1301
  %v1304 = vsel %vm327, %v1300, 0
  %v1307 = vsel %vm327, %v1302, 0
  %1309 = vmatprep.subr.bf16.mxu0 0
  %1310 = vmatpush1.bf16.xpose.msra.mxu0 %v1307
  %1311 = vmatprep.subr.bf16.mxu0 0
  %1312 = vmatpush1.bf16.xpose.msra.mxu0 0
  %1313 = vmatprep.subr.bf16.mxu0 0
  %1314 = vmatpush1.bf16.xpose.msra.mxu0 0
  %1315 = vmatprep.subr.bf16.mxu0 0
  %1316 = vmatpush1.bf16.xpose.msra.mxu0 0
  %1317 = vmatprep.subr.bf16.mxu0 0
  %1318 = vmatpush1.bf16.xpose.msra.mxu0 0
  %1319 = vmatprep.subr.bf16.mxu0 0
  %1320 = vmatpush1.bf16.xpose.msra.mxu0 0
  %1321 = vmatprep.subr.bf16.mxu0 0
  %1322 = vmatpush1.bf16.xpose.msra.mxu0 0
  %1323 = vmatprep.subr.bf16.mxu0 0
  %1324 = vmatpush1.bf16.xpose.msra.mxu0 0
  %1325 = vmatprep.subr.bf16.mxu0 0
  %1326 = vmatpush1.bf16.xpose.msra.mxu0 0
  %1327 = vmatprep.subr.bf16.mxu0 0
  %1328 = vmatpush1.bf16.xpose.msra.mxu0 0
  %1329 = vmatprep.subr.bf16.mxu0 0
  %1330 = vmatpush1.bf16.xpose.msra.mxu0 0
  %1331 = vmatprep.subr.bf16.mxu0 0
  %1332 = vmatpush1.bf16.xpose.msra.mxu0 0
  %1333 = vmatprep.subr.bf16.mxu0 0
  %1334 = vmatpush1.bf16.xpose.msra.mxu0 0
  %1335 = vmatprep.subr.bf16.mxu0 0
  %1336 = vmatpush1.bf16.xpose.msra.mxu0 0
  %1337 = vmatprep.subr.bf16.mxu0 0
  %1338 = vmatpush1.bf16.xpose.msra.mxu0 0
  %1339 = vmatprep.subr.bf16.mxu0 0
  %1340 = vmatpush1.bf16.xpose.msra.mxu0 0
  %1341 = vmatprep.mubr.bf16.mxu0 0
  %1342 = vmatmul.mubr.bf16.gmra.mrb[0].mxu0 %v1304
  %v1343 = vpop.f32.mrb[0].mxu0
  %v1344 = vadd.f32 0.0, %v1343
  %v1345 = vpop.f32.mrb[0].mxu0
  %v1346 = vpop.f32.mrb[0].mxu0
  %v1347 = vpop.f32.mrb[0].mxu0
  %1348 = vdwg.mxu0
  %v1349 = vmul.f32 %v1344, 0.35355338
  %v1350 = vsel %vm327, %v1349, -inf
  %1351 = vmax.xlane.f32.xlu0 %v1350
  %v1352 = vpop.xlane.xlu0 %1351
  %v1353 = vsub.f32 %v1349, %v1352
  %v1354 = vmul.f32 %v1353, 1.442695
  %v1355 = vpow.pop %v1354
  %v1356 = vsel %vm327, %v1355, 0.0
  %1357 = vadd.xlane.f32.xlu0 %v1356
  %v1358 = vpop.xlane.xlu0 %1357
  %v1359 = vrcp.pop %v1358
  %v1360 = vmul.f32 %v1355, %v1359
  %v1361 = vpack.c.bf16 %v1360, %v1360
  %1362 = vrot.lane.b32.xlu0 %v1189, 104
  %v1363 = vpop.permute.xlu0 %1362
  %v1365 = vsel %vm327, %v1361, 0
  %v1368 = vsel %vm393, %v1363, 0
  %1370 = vmatprep.subr.bf16.mxu0 0
  %1371 = vmatpush1.bf16.msra.mxu0 %v1368
  %1372 = vmatprep.subr.bf16.mxu0 0
  %1373 = vmatpush1.bf16.msra.mxu0 0
  %1374 = vmatprep.subr.bf16.mxu0 0
  %1375 = vmatpush1.bf16.msra.mxu0 0
  %1376 = vmatprep.subr.bf16.mxu0 0
  %1377 = vmatpush1.bf16.msra.mxu0 0
  %1378 = vmatprep.subr.bf16.mxu0 0
  %1379 = vmatpush1.bf16.msra.mxu0 0
  %1380 = vmatprep.subr.bf16.mxu0 0
  %1381 = vmatpush1.bf16.msra.mxu0 0
  %1382 = vmatprep.subr.bf16.mxu0 0
  %1383 = vmatpush1.bf16.msra.mxu0 0
  %1384 = vmatprep.subr.bf16.mxu0 0
  %1385 = vmatpush1.bf16.msra.mxu0 0
  %1386 = vmatprep.subr.bf16.mxu0 0
  %1387 = vmatpush1.bf16.msra.mxu0 0
  %1388 = vmatprep.subr.bf16.mxu0 0
  %1389 = vmatpush1.bf16.msra.mxu0 0
  %1390 = vmatprep.subr.bf16.mxu0 0
  %1391 = vmatpush1.bf16.msra.mxu0 0
  %1392 = vmatprep.subr.bf16.mxu0 0
  %1393 = vmatpush1.bf16.msra.mxu0 0
  %1394 = vmatprep.subr.bf16.mxu0 0
  %1395 = vmatpush1.bf16.msra.mxu0 0
  %1396 = vmatprep.subr.bf16.mxu0 0
  %1397 = vmatpush1.bf16.msra.mxu0 0
  %1398 = vmatprep.subr.bf16.mxu0 0
  %1399 = vmatpush1.bf16.msra.mxu0 0
  %1400 = vmatprep.subr.bf16.mxu0 0
  %1401 = vmatpush1.bf16.msra.mxu0 0
  %1402 = vmatprep.mubr.bf16.mxu0 0
  %1403 = vmatmul.mubr.bf16.gmra.mrb[0].mxu0 %v1365
  %v1404 = vpop.f32.mrb[0].mxu0
  %v1405 = vadd.f32 0.0, %v1404
  %v1406 = vpop.f32.mrb[0].mxu0
  %v1407 = vpop.f32.mrb[0].mxu0
  %v1408 = vpop.f32.mrb[0].mxu0
  %1409 = vdwg.mxu0
  %1411 = vrot.lane.b32.xlu0 %v1405, 8
  %v1412 = vpop.permute.xlu0 %1411
  %v1414 = vsel %vm327, %v1293, %v1412
  %v1415 = vpack.c.bf16 %v1138, %v1138
  %v1416 = vpack.c.bf16 %v1185, %v1185
  %v1418 = vsel %vm327, %v1415, 0
  %v1421 = vsel %vm327, %v1416, 0
  %1423 = vmatprep.subr.bf16.mxu0 0
  %1424 = vmatpush1.bf16.xpose.msra.mxu0 %v1421
  %1425 = vmatprep.subr.bf16.mxu0 0
  %1426 = vmatpush1.bf16.xpose.msra.mxu0 0
  %1427 = vmatprep.subr.bf16.mxu0 0
  %1428 = vmatpush1.bf16.xpose.msra.mxu0 0
  %1429 = vmatprep.subr.bf16.mxu0 0
  %1430 = vmatpush1.bf16.xpose.msra.mxu0 0
  %1431 = vmatprep.subr.bf16.mxu0 0
  %1432 = vmatpush1.bf16.xpose.msra.mxu0 0
  %1433 = vmatprep.subr.bf16.mxu0 0
  %1434 = vmatpush1.bf16.xpose.msra.mxu0 0
  %1435 = vmatprep.subr.bf16.mxu0 0
  %1436 = vmatpush1.bf16.xpose.msra.mxu0 0
  %1437 = vmatprep.subr.bf16.mxu0 0
  %1438 = vmatpush1.bf16.xpose.msra.mxu0 0
  %1439 = vmatprep.subr.bf16.mxu0 0
  %1440 = vmatpush1.bf16.xpose.msra.mxu0 0
  %1441 = vmatprep.subr.bf16.mxu0 0
  %1442 = vmatpush1.bf16.xpose.msra.mxu0 0
  %1443 = vmatprep.subr.bf16.mxu0 0
  %1444 = vmatpush1.bf16.xpose.msra.mxu0 0
  %1445 = vmatprep.subr.bf16.mxu0 0
  %1446 = vmatpush1.bf16.xpose.msra.mxu0 0
  %1447 = vmatprep.subr.bf16.mxu0 0
  %1448 = vmatpush1.bf16.xpose.msra.mxu0 0
  %1449 = vmatprep.subr.bf16.mxu0 0
  %1450 = vmatpush1.bf16.xpose.msra.mxu0 0
  %1451 = vmatprep.subr.bf16.mxu0 0
  %1452 = vmatpush1.bf16.xpose.msra.mxu0 0
  %1453 = vmatprep.subr.bf16.mxu0 0
  %1454 = vmatpush1.bf16.xpose.msra.mxu0 0
  %1455 = vmatprep.mubr.bf16.mxu0 0
  %1456 = vmatmul.mubr.bf16.gmra.mrb[0].mxu0 %v1418
  %v1457 = vpop.f32.mrb[0].mxu0
  %v1458 = vadd.f32 0.0, %v1457
  %v1459 = vpop.f32.mrb[0].mxu0
  %v1460 = vpop.f32.mrb[0].mxu0
  %v1461 = vpop.f32.mrb[0].mxu0
  %1462 = vdwg.mxu0
  %v1463 = vmul.f32 %v1458, 0.35355338
  %v1464 = vsel %vm327, %v1463, -inf
  %1465 = vmax.xlane.f32.xlu0 %v1464
  %v1466 = vpop.xlane.xlu0 %1465
  %v1467 = vsub.f32 %v1463, %v1466
  %v1468 = vmul.f32 %v1467, 1.442695
  %v1469 = vpow.pop %v1468
  %v1470 = vsel %vm327, %v1469, 0.0
  %1471 = vadd.xlane.f32.xlu0 %v1470
  %v1472 = vpop.xlane.xlu0 %1471
  %v1473 = vrcp.pop %v1472
  %v1474 = vmul.f32 %v1469, %v1473
  %v1475 = vpack.c.bf16 %v1474, %v1474
  %1477 = vrot.lane.b32.xlu0 %v1416, 112
  %v1478 = vpop.permute.xlu0 %1477
  %v1480 = vsel %vm327, %v1475, 0
  %v1483 = vsel %vm393, %v1478, 0
  %1485 = vmatprep.subr.bf16.mxu0 0
  %1486 = vmatpush1.bf16.msra.mxu0 %v1483
  %1487 = vmatprep.subr.bf16.mxu0 0
  %1488 = vmatpush1.bf16.msra.mxu0 0
  %1489 = vmatprep.subr.bf16.mxu0 0
  %1490 = vmatpush1.bf16.msra.mxu0 0
  %1491 = vmatprep.subr.bf16.mxu0 0
  %1492 = vmatpush1.bf16.msra.mxu0 0
  %1493 = vmatprep.subr.bf16.mxu0 0
  %1494 = vmatpush1.bf16.msra.mxu0 0
  %1495 = vmatprep.subr.bf16.mxu0 0
  %1496 = vmatpush1.bf16.msra.mxu0 0
  %1497 = vmatprep.subr.bf16.mxu0 0
  %1498 = vmatpush1.bf16.msra.mxu0 0
  %1499 = vmatprep.subr.bf16.mxu0 0
  %1500 = vmatpush1.bf16.msra.mxu0 0
  %1501 = vmatprep.subr.bf16.mxu0 0
  %1502 = vmatpush1.bf16.msra.mxu0 0
  %1503 = vmatprep.subr.bf16.mxu0 0
  %1504 = vmatpush1.bf16.msra.mxu0 0
  %1505 = vmatprep.subr.bf16.mxu0 0
  %1506 = vmatpush1.bf16.msra.mxu0 0
  %1507 = vmatprep.subr.bf16.mxu0 0
  %1508 = vmatpush1.bf16.msra.mxu0 0
  %1509 = vmatprep.subr.bf16.mxu0 0
  %1510 = vmatpush1.bf16.msra.mxu0 0
  %1511 = vmatprep.subr.bf16.mxu0 0
  %1512 = vmatpush1.bf16.msra.mxu0 0
  %1513 = vmatprep.subr.bf16.mxu0 0
  %1514 = vmatpush1.bf16.msra.mxu0 0
  %1515 = vmatprep.subr.bf16.mxu0 0
  %1516 = vmatpush1.bf16.msra.mxu0 0
  %1517 = vmatprep.mubr.bf16.mxu0 0
  %1518 = vmatmul.mubr.bf16.gmra.mrb[0].mxu0 %v1480
  %v1519 = vpop.f32.mrb[0].mxu0
  %v1520 = vadd.f32 0.0, %v1519
  %v1521 = vpop.f32.mrb[0].mxu0
  %v1522 = vpop.f32.mrb[0].mxu0
  %v1523 = vpop.f32.mrb[0].mxu0
  %1524 = vdwg.mxu0
  %1526 = vrot.lane.b32.xlu0 %v1415, 120
  %v1527 = vpop.permute.xlu0 %1526
  %1528 = vrot.lane.b32.xlu0 %v1416, 120
  %v1529 = vpop.permute.xlu0 %1528
  %v1531 = vsel %vm327, %v1527, 0
  %v1534 = vsel %vm327, %v1529, 0
  %1536 = vmatprep.subr.bf16.mxu0 0
  %1537 = vmatpush1.bf16.xpose.msra.mxu0 %v1534
  %1538 = vmatprep.subr.bf16.mxu0 0
  %1539 = vmatpush1.bf16.xpose.msra.mxu0 0
  %1540 = vmatprep.subr.bf16.mxu0 0
  %1541 = vmatpush1.bf16.xpose.msra.mxu0 0
  %1542 = vmatprep.subr.bf16.mxu0 0
  %1543 = vmatpush1.bf16.xpose.msra.mxu0 0
  %1544 = vmatprep.subr.bf16.mxu0 0
  %1545 = vmatpush1.bf16.xpose.msra.mxu0 0
  %1546 = vmatprep.subr.bf16.mxu0 0
  %1547 = vmatpush1.bf16.xpose.msra.mxu0 0
  %1548 = vmatprep.subr.bf16.mxu0 0
  %1549 = vmatpush1.bf16.xpose.msra.mxu0 0
  %1550 = vmatprep.subr.bf16.mxu0 0
  %1551 = vmatpush1.bf16.xpose.msra.mxu0 0
  %1552 = vmatprep.subr.bf16.mxu0 0
  %1553 = vmatpush1.bf16.xpose.msra.mxu0 0
  %1554 = vmatprep.subr.bf16.mxu0 0
  %1555 = vmatpush1.bf16.xpose.msra.mxu0 0
  %1556 = vmatprep.subr.bf16.mxu0 0
  %1557 = vmatpush1.bf16.xpose.msra.mxu0 0
  %1558 = vmatprep.subr.bf16.mxu0 0
  %1559 = vmatpush1.bf16.xpose.msra.mxu0 0
  %1560 = vmatprep.subr.bf16.mxu0 0
  %1561 = vmatpush1.bf16.xpose.msra.mxu0 0
  %1562 = vmatprep.subr.bf16.mxu0 0
  %1563 = vmatpush1.bf16.xpose.msra.mxu0 0
  %1564 = vmatprep.subr.bf16.mxu0 0
  %1565 = vmatpush1.bf16.xpose.msra.mxu0 0
  %1566 = vmatprep.subr.bf16.mxu0 0
  %1567 = vmatpush1.bf16.xpose.msra.mxu0 0
  %1568 = vmatprep.mubr.bf16.mxu0 0
  %1569 = vmatmul.mubr.bf16.gmra.mrb[0].mxu0 %v1531
  %v1570 = vpop.f32.mrb[0].mxu0
  %v1571 = vadd.f32 0.0, %v1570
  %v1572 = vpop.f32.mrb[0].mxu0
  %v1573 = vpop.f32.mrb[0].mxu0
  %v1574 = vpop.f32.mrb[0].mxu0
  %1575 = vdwg.mxu0
  %v1576 = vmul.f32 %v1571, 0.35355338
  %v1577 = vsel %vm327, %v1576, -inf
  %1578 = vmax.xlane.f32.xlu0 %v1577
  %v1579 = vpop.xlane.xlu0 %1578
  %v1580 = vsub.f32 %v1576, %v1579
  %v1581 = vmul.f32 %v1580, 1.442695
  %v1582 = vpow.pop %v1581
  %v1583 = vsel %vm327, %v1582, 0.0
  %1584 = vadd.xlane.f32.xlu0 %v1583
  %v1585 = vpop.xlane.xlu0 %1584
  %v1586 = vrcp.pop %v1585
  %v1587 = vmul.f32 %v1582, %v1586
  %v1588 = vpack.c.bf16 %v1587, %v1587
  %1589 = vrot.lane.b32.xlu0 %v1416, 104
  %v1590 = vpop.permute.xlu0 %1589
  %v1592 = vsel %vm327, %v1588, 0
  %v1595 = vsel %vm393, %v1590, 0
  %1597 = vmatprep.subr.bf16.mxu0 0
  %1598 = vmatpush1.bf16.msra.mxu0 %v1595
  %1599 = vmatprep.subr.bf16.mxu0 0
  %1600 = vmatpush1.bf16.msra.mxu0 0
  %1601 = vmatprep.subr.bf16.mxu0 0
  %1602 = vmatpush1.bf16.msra.mxu0 0
  %1603 = vmatprep.subr.bf16.mxu0 0
  %1604 = vmatpush1.bf16.msra.mxu0 0
  %1605 = vmatprep.subr.bf16.mxu0 0
  %1606 = vmatpush1.bf16.msra.mxu0 0
  %1607 = vmatprep.subr.bf16.mxu0 0
  %1608 = vmatpush1.bf16.msra.mxu0 0
  %1609 = vmatprep.subr.bf16.mxu0 0
  %1610 = vmatpush1.bf16.msra.mxu0 0
  %1611 = vmatprep.subr.bf16.mxu0 0
  %1612 = vmatpush1.bf16.msra.mxu0 0
  %1613 = vmatprep.subr.bf16.mxu0 0
  %1614 = vmatpush1.bf16.msra.mxu0 0
  %1615 = vmatprep.subr.bf16.mxu0 0
  %1616 = vmatpush1.bf16.msra.mxu0 0
  %1617 = vmatprep.subr.bf16.mxu0 0
  %1618 = vmatpush1.bf16.msra.mxu0 0
  %1619 = vmatprep.subr.bf16.mxu0 0
  %1620 = vmatpush1.bf16.msra.mxu0 0
  %1621 = vmatprep.subr.bf16.mxu0 0
  %1622 = vmatpush1.bf16.msra.mxu0 0
  %1623 = vmatprep.subr.bf16.mxu0 0
  %1624 = vmatpush1.bf16.msra.mxu0 0
  %1625 = vmatprep.subr.bf16.mxu0 0
  %1626 = vmatpush1.bf16.msra.mxu0 0
  %1627 = vmatprep.subr.bf16.mxu0 0
  %1628 = vmatpush1.bf16.msra.mxu0 0
  %1629 = vmatprep.mubr.bf16.mxu0 0
  %1630 = vmatmul.mubr.bf16.gmra.mrb[0].mxu0 %v1592
  %v1631 = vpop.f32.mrb[0].mxu0
  %v1632 = vadd.f32 0.0, %v1631
  %v1633 = vpop.f32.mrb[0].mxu0
  %v1634 = vpop.f32.mrb[0].mxu0
  %v1635 = vpop.f32.mrb[0].mxu0
  %1636 = vdwg.mxu0
  %1638 = vrot.lane.b32.xlu0 %v1632, 8
  %v1639 = vpop.permute.xlu0 %1638
  %v1641 = vsel %vm327, %v1520, %v1639
  %v1642 = vpack.c.bf16 %v1641, %v1414
  %v1644 = vlaneseq
  %v1645 = vshrl.u32 %v1644, 7
  %v1646 = vsub.s32 0, %v1645
  %v1647 = vrot.slane %v1067, %v1646
  %v1651 = vunpack.c.l.b16 %v1065
  %v1652 = vunpack.c.l.b16 %v1066
  %v1653 = vpack.c.b16 %v1652, %v1651
  %v1656 = vsel %vm229, %v1642, 0
  %1658 = vmatprep.subr.bf16.mxu0 0
  %1659 = vmatpush1.bf16.msra.mxu0 %v1653
  %1660 = vmatprep.subr.bf16.mxu0 0
  %1661 = vmatpush1.bf16.msra.mxu0 0
  %1662 = vmatprep.subr.bf16.mxu0 0
  %1663 = vmatpush1.bf16.msra.mxu0 0
  %1664 = vmatprep.subr.bf16.mxu0 0
  %1665 = vmatpush1.bf16.msra.mxu0 0
  %1666 = vmatprep.subr.bf16.mxu0 0
  %1667 = vmatpush1.bf16.msra.mxu0 0
  %1668 = vmatprep.subr.bf16.mxu0 0
  %1669 = vmatpush1.bf16.msra.mxu0 0
  %1670 = vmatprep.subr.bf16.mxu0 0
  %1671 = vmatpush1.bf16.msra.mxu0 0
  %1672 = vmatprep.subr.bf16.mxu0 0
  %1673 = vmatpush1.bf16.msra.mxu0 0
  %1674 = vmatprep.subr.bf16.mxu0 0
  %1675 = vmatpush1.bf16.msra.mxu0 0
  %1676 = vmatprep.subr.bf16.mxu0 0
  %1677 = vmatpush1.bf16.msra.mxu0 0
  %1678 = vmatprep.subr.bf16.mxu0 0
  %1679 = vmatpush1.bf16.msra.mxu0 0
  %1680 = vmatprep.subr.bf16.mxu0 0
  %1681 = vmatpush1.bf16.msra.mxu0 0
  %1682 = vmatprep.subr.bf16.mxu0 0
  %1683 = vmatpush1.bf16.msra.mxu0 0
  %1684 = vmatprep.subr.bf16.mxu0 0
  %1685 = vmatpush1.bf16.msra.mxu0 0
  %1686 = vmatprep.subr.bf16.mxu0 0
  %1687 = vmatpush1.bf16.msra.mxu0 0
  %1688 = vmatprep.subr.bf16.mxu0 0
  %1689 = vmatpush1.bf16.msra.mxu0 0
  %1690 = vmatprep.mubr.bf16.mxu0 0
  %1691 = vmatmul.mubr.bf16.gmra.mrb[0].mxu0 %v1656
  %v1692 = vpop.f32.mrb[0].mxu0
  %v1693 = vadd.f32 %v1647, %v1692
  %v1694 = vpop.f32.mrb[0].mxu0
  %v1695 = vpop.f32.mrb[0].mxu0
  %v1696 = vadd.f32 %v1647, %v1695
  %v1697 = vpop.f32.mrb[0].mxu0
  %1698 = vdwg.mxu0
  %1701 = vrot.lane.b32.xlu0 %v1693, 16
  %v1702 = vpop.permute.xlu0 %1701
  %1703 = vrot.lane.b32.xlu0 %v1696, 16
  %v1704 = vpop.permute.xlu0 %1703
  %v1707 = vadd.f32 %v189, %v1702
  %v1708 = vadd.f32 %v190, %v1704
  %1711 = vrot.lane.b32.xlu0 %v1707, 112
  %v1712 = vpop.permute.xlu0 %1711
  %1713 = vrot.lane.b32.xlu0 %v1708, 112
  %v1714 = vpop.permute.xlu0 %1713
  %v1717 = vsel %vm229, %v1712, 0.0
  %1718 = vadd.xlane.f32.xlu0 %v1717
  %v1719 = vpop.xlane.xlu0 %1718
  %v1720 = vsel %vm229, %v1714, 0.0
  %1721 = vadd.xlane.f32.xlu0 %v1720
  %v1722 = vpop.xlane.xlu0 %1721
  %v1723 = vmul.f32 %v1719, %v846
  %v1724 = vmul.f32 %v1722, %v846
  %v1725 = vsub.f32 %v1707, %v1723
  %v1726 = vsub.f32 %v1708, %v1724
  %v1727 = vmul.f32 %v1725, %v1725
  %v1728 = vmul.f32 %v1726, %v1726
  %1731 = vrot.lane.b32.xlu0 %v1727, 112
  %v1732 = vpop.permute.xlu0 %1731
  %1733 = vrot.lane.b32.xlu0 %v1728, 112
  %v1734 = vpop.permute.xlu0 %1733
  %v1737 = vsel %vm229, %v1732, 0.0
  %1738 = vadd.xlane.f32.xlu0 %v1737
  %v1739 = vpop.xlane.xlu0 %1738
  %v1740 = vsel %vm229, %v1734, 0.0
  %1741 = vadd.xlane.f32.xlu0 %v1740
  %v1742 = vpop.xlane.xlu0 %1741
  %v1743 = vmul.f32 %v1739, %v846
  %v1744 = vmul.f32 %v1742, %v846
  %v1745 = vadd.f32 %v1743, 1e-05
  %v1746 = vadd.f32 %v1744, 1e-05
  %v1747 = vrsqrt.pop %v1745
  %v1748 = vrsqrt.pop %v1746
  %v1749 = vmul.f32 %v1725, %v1747
  %v1750 = vmul.f32 %v1726, %v1748
  %v1752 = vlaneseq
  %v1753 = vshrl.u32 %v1752, 7
  %v1754 = vsub.s32 0, %v1753
  %v1755 = vrot.slane %v1080, %v1754
  %1756 = vrot.lane.b32.xlu0 %v1755, 16
  %v1757 = vpop.permute.xlu0 %1756
  %v1759 = vmul.f32 %v1749, %v1757
  %v1760 = vmul.f32 %v1750, %v1757
  %v1762 = vlaneseq
  %v1763 = vshrl.u32 %v1762, 7
  %v1764 = vsub.s32 0, %v1763
  %v1765 = vrot.slane %v1081, %v1764
  %1766 = vrot.lane.b32.xlu0 %v1765, 16
  %v1767 = vpop.permute.xlu0 %1766
  %v1769 = vadd.f32 %v1759, %v1767
  %v1770 = vadd.f32 %v1760, %v1767
  %v1771 = vpack.c.bf16 %v1770, %v1769
  %v1773 = vlaneseq
  %v1774 = vshrl.u32 %v1773, 7
  %v1775 = vsub.s32 0, %v1774
  %v1776 = vrot.slane %v1070, %v1775
  %1779 = vrot.lane.b32.xlu0 %v1771, 112
  %v1780 = vpop.permute.xlu0 %1779
  %v1783 = vunpack.c.l.b16 %v1068
  %v1784 = vunpack.c.l.b16 %v1069
  %v1785 = vpack.c.b16 %v1784, %v1783
  %v1788 = vsel %vm229, %v1780, 0
  %1790 = vmatprep.subr.bf16.mxu0 0
  %1791 = vmatpush1.bf16.msra.mxu0 %v1785
  %1792 = vmatprep.subr.bf16.mxu0 0
  %1793 = vmatpush1.bf16.msra.mxu0 0
  %1794 = vmatprep.subr.bf16.mxu0 0
  %1795 = vmatpush1.bf16.msra.mxu0 0
  %1796 = vmatprep.subr.bf16.mxu0 0
  %1797 = vmatpush1.bf16.msra.mxu0 0
  %1798 = vmatprep.subr.bf16.mxu0 0
  %1799 = vmatpush1.bf16.msra.mxu0 0
  %1800 = vmatprep.subr.bf16.mxu0 0
  %1801 = vmatpush1.bf16.msra.mxu0 0
  %1802 = vmatprep.subr.bf16.mxu0 0
  %1803 = vmatpush1.bf16.msra.mxu0 0
  %1804 = vmatprep.subr.bf16.mxu0 0
  %1805 = vmatpush1.bf16.msra.mxu0 0
  %1806 = vmatprep.subr.bf16.mxu0 0
  %1807 = vmatpush1.bf16.msra.mxu0 0
  %1808 = vmatprep.subr.bf16.mxu0 0
  %1809 = vmatpush1.bf16.msra.mxu0 0
  %1810 = vmatprep.subr.bf16.mxu0 0
  %1811 = vmatpush1.bf16.msra.mxu0 0
  %1812 = vmatprep.subr.bf16.mxu0 0
  %1813 = vmatpush1.bf16.msra.mxu0 0
  %1814 = vmatprep.subr.bf16.mxu0 0
  %1815 = vmatpush1.bf16.msra.mxu0 0
  %1816 = vmatprep.subr.bf16.mxu0 0
  %1817 = vmatpush1.bf16.msra.mxu0 0
  %1818 = vmatprep.subr.bf16.mxu0 0
  %1819 = vmatpush1.bf16.msra.mxu0 0
  %1820 = vmatprep.subr.bf16.mxu0 0
  %1821 = vmatpush1.bf16.msra.mxu0 0
  %1822 = vmatprep.mubr.bf16.mxu0 0
  %1823 = vmatmul.mubr.bf16.gmra.mrb[0].mxu0 %v1788
  %v1824 = vpop.f32.mrb[0].mxu0
  %v1825 = vadd.f32 %v1776, %v1824
  %v1826 = vpop.f32.mrb[0].mxu0
  %v1827 = vpop.f32.mrb[0].mxu0
  %v1828 = vadd.f32 %v1776, %v1827
  %v1829 = vpop.f32.mrb[0].mxu0
  %1830 = vdwg.mxu0
  %v1831 = vmax.f32 %v1825, 0.0
  %v1832 = vmax.f32 %v1828, 0.0
  %v1833 = vpack.c.bf16 %v1832, %v1831
  %v1835 = vlaneseq
  %v1836 = vshrl.u32 %v1835, 7
  %v1837 = vsub.s32 0, %v1836
  %v1838 = vrot.slane %v1079, %v1837
  %v1848 = vunpack.c.l.b16 %v1071
  %v1849 = vunpack.c.l.b16 %v1072
  %v1850 = vunpack.c.l.b16 %v1073
  %v1851 = vunpack.c.l.b16 %v1074
  %v1852 = vunpack.c.l.b16 %v1075
  %v1853 = vunpack.c.l.b16 %v1076
  %v1854 = vunpack.c.l.b16 %v1077
  %v1855 = vunpack.c.l.b16 %v1078
  %v1856 = vpack.c.b16 %v1849, %v1848
  %v1857 = vpack.c.b16 %v1851, %v1850
  %v1858 = vpack.c.b16 %v1853, %v1852
  %v1859 = vpack.c.b16 %v1855, %v1854
  %v1865 = vsel %vm973, %v1833, 0
  %1867 = vmatprep.subr.bf16.mxu0 0
  %1868 = vmatpush1.bf16.msra.mxu0 %v1856
  %1869 = vmatprep.subr.bf16.mxu0 0
  %1870 = vmatpush1.bf16.msra.mxu0 %v1857
  %1871 = vmatprep.subr.bf16.mxu0 0
  %1872 = vmatpush1.bf16.msra.mxu0 %v1858
  %1873 = vmatprep.subr.bf16.mxu0 0
  %1874 = vmatpush1.bf16.msra.mxu0 %v1859
  %1875 = vmatprep.subr.bf16.mxu0 0
  %1876 = vmatpush1.bf16.msra.mxu0 0
  %1877 = vmatprep.subr.bf16.mxu0 0
  %1878 = vmatpush1.bf16.msra.mxu0 0
  %1879 = vmatprep.subr.bf16.mxu0 0
  %1880 = vmatpush1.bf16.msra.mxu0 0
  %1881 = vmatprep.subr.bf16.mxu0 0
  %1882 = vmatpush1.bf16.msra.mxu0 0
  %1883 = vmatprep.subr.bf16.mxu0 0
  %1884 = vmatpush1.bf16.msra.mxu0 0
  %1885 = vmatprep.subr.bf16.mxu0 0
  %1886 = vmatpush1.bf16.msra.mxu0 0
  %1887 = vmatprep.subr.bf16.mxu0 0
  %1888 = vmatpush1.bf16.msra.mxu0 0
  %1889 = vmatprep.subr.bf16.mxu0 0
  %1890 = vmatpush1.bf16.msra.mxu0 0
  %1891 = vmatprep.subr.bf16.mxu0 0
  %1892 = vmatpush1.bf16.msra.mxu0 0
  %1893 = vmatprep.subr.bf16.mxu0 0
  %1894 = vmatpush1.bf16.msra.mxu0 0
  %1895 = vmatprep.subr.bf16.mxu0 0
  %1896 = vmatpush1.bf16.msra.mxu0 0
  %1897 = vmatprep.subr.bf16.mxu0 0
  %1898 = vmatpush1.bf16.msra.mxu0 0
  %1899 = vmatprep.mubr.bf16.mxu0 0
  %1900 = vmatmul.mubr.bf16.gmra.mrb[0].mxu0 %v1865
  %v1901 = vpop.f32.mrb[0].mxu0
  %v1902 = vadd.f32 %v1838, %v1901
  %v1903 = vpop.f32.mrb[0].mxu0
  %v1904 = vpop.f32.mrb[0].mxu0
  %v1905 = vadd.f32 %v1838, %v1904
  %v1906 = vpop.f32.mrb[0].mxu0
  %1907 = vdwg.mxu0
  %1910 = vrot.lane.b32.xlu0 %v1902, 16
  %v1911 = vpop.permute.xlu0 %1910
  %1912 = vrot.lane.b32.xlu0 %v1905, 16
  %v1913 = vpop.permute.xlu0 %1912
  %v1916 = vadd.f32 %v1769, %v1911
  %v1917 = vadd.f32 %v1770, %v1913
  %1920 = vrot.lane.b32.xlu0 %v1916, 112
  %v1921 = vpop.permute.xlu0 %1920
  %1922 = vrot.lane.b32.xlu0 %v1917, 112
  %v1923 = vpop.permute.xlu0 %1922
  %v1926 = vsel %vm229, %v1921, 0.0
  %1927 = vadd.xlane.f32.xlu0 %v1926
  %v1928 = vpop.xlane.xlu0 %1927
  %v1929 = vsel %vm229, %v1923, 0.0
  %1930 = vadd.xlane.f32.xlu0 %v1929
  %v1931 = vpop.xlane.xlu0 %1930
  %v1932 = vmul.f32 %v1928, %v846
  %v1933 = vmul.f32 %v1931, %v846
  %v1934 = vsub.f32 %v1916, %v1932
  %v1935 = vsub.f32 %v1917, %v1933
  %v1936 = vmul.f32 %v1934, %v1934
  %v1937 = vmul.f32 %v1935, %v1935
  %1940 = vrot.lane.b32.xlu0 %v1936, 112
  %v1941 = vpop.permute.xlu0 %1940
  %1942 = vrot.lane.b32.xlu0 %v1937, 112
  %v1943 = vpop.permute.xlu0 %1942
  %v1946 = vsel %vm229, %v1941, 0.0
  %1947 = vadd.xlane.f32.xlu0 %v1946
  %v1948 = vpop.xlane.xlu0 %1947
  %v1949 = vsel %vm229, %v1943, 0.0
  %1950 = vadd.xlane.f32.xlu0 %v1949
  %v1951 = vpop.xlane.xlu0 %1950
  %v1952 = vmul.f32 %v1948, %v846
  %v1953 = vmul.f32 %v1951, %v846
  %v1954 = vadd.f32 %v1952, 1e-05
  %v1955 = vadd.f32 %v1953, 1e-05
  %v1956 = vrsqrt.pop %v1954
  %v1957 = vrsqrt.pop %v1955
  %v1958 = vmul.f32 %v1934, %v1956
  %v1959 = vmul.f32 %v1935, %v1957
  %v1961 = vlaneseq
  %v1962 = vshrl.u32 %v1961, 7
  %v1963 = vsub.s32 0, %v1962
  %v1964 = vrot.slane %v1082, %v1963
  %1965 = vrot.lane.b32.xlu0 %v1964, 16
  %v1966 = vpop.permute.xlu0 %1965
  %v1968 = vmul.f32 %v1958, %v1966
  %v1969 = vmul.f32 %v1959, %v1966
  %v1971 = vlaneseq
  %v1972 = vshrl.u32 %v1971, 7
  %v1973 = vsub.s32 0, %v1972
  %v1974 = vrot.slane %v1083, %v1973
  %1975 = vrot.lane.b32.xlu0 %v1974, 16
  %v1976 = vpop.permute.xlu0 %1975
  %v1978 = vadd.f32 %v1968, %v1976
  %v1979 = vadd.f32 %v1969, %v1976
  %v1980 = vsel %vm229, %v1060, %v1978
  %v1981 = vsel %vm229, %v1061, %v1979
  %v1982 = vld [vmem:[%s53] sm:$0xf]
  %v1983 = vld [vmem:[%s53 + $0x4] sm:$0xf]
  %v1984 = vld [vmem:[%s53 + $0x8] sm:$0xf]
  %v1985 = vld [vmem:[%s53 + $0xc] sm:$0xf]
  %v1986 = vld [vmem:[%s55] sm:$0x1]
  %v1987 = vld [vmem:[%s57] sm:$0xf]
  %v1988 = vld [vmem:[%s57 + $0x4] sm:$0xf]
  %v1989 = vld [vmem:[%s57 + $0x8] sm:$0xf]
  %v1990 = vld [vmem:[%s57 + $0xc] sm:$0xf]
  %v1991 = vld [vmem:[%s59] sm:$0x1]
  %v1992 = vld [vmem:[%s61] sm:$0xf]
  %v1993 = vld [vmem:[%s61 + $0x4] sm:$0xf]
  %v1994 = vld [vmem:[%s61 + $0x8] sm:$0xf]
  %v1995 = vld [vmem:[%s61 + $0xc] sm:$0xf]
  %v1996 = vld [vmem:[%s63] sm:$0x1]
  %v1997 = vld [vmem:[%s65] sm:$0xf]
  %v1998 = vld [vmem:[%s65 + $0x4] sm:$0xf]
  %v1999 = vld [vmem:[%s65 + $0x8] sm:$0xf]
  %v2000 = vld [vmem:[%s65 + $0xc] sm:$0xf]
  %v2001 = vld [vmem:[%s65 + $0x10] sm:$0xf]
  %v2002 = vld [vmem:[%s65 + $0x14] sm:$0xf]
  %v2003 = vld [vmem:[%s65 + $0x18] sm:$0xf]
  %v2004 = vld [vmem:[%s65 + $0x1c] sm:$0xf]
  %v2005 = vld [vmem:[%s67] sm:$0x1]
  %v2006 = vld [vmem:[%s69] sm:$0x1]
  %v2007 = vld [vmem:[%s71] sm:$0x1]
  %v2008 = vld [vmem:[%s73] sm:$0x1]
  %v2009 = vld [vmem:[%s75] sm:$0x1]
  %v2010 = vpack.c.bf16 %v1981, %v1980
  %v2012 = vlaneseq
  %v2013 = vshrl.u32 %v2012, 7
  %v2014 = vsub.s32 0, %v2013
  %v2015 = vrot.slane %v1986, %v2014
  %v2021 = vunpack.c.l.b16 %v1982
  %v2022 = vunpack.c.l.b16 %v1983
  %v2023 = vunpack.c.l.b16 %v1984
  %v2024 = vunpack.c.l.b16 %v1985
  %v2025 = vpack.c.b16 %v2022, %v2021
  %v2026 = vpack.c.b16 %v2024, %v2023
  %vm2029 = vcmask 261120
  %v2031 = vsel %vm2029, %v2010, 0
  %2033 = vmatprep.subr.bf16.mxu0 0
  %2034 = vmatpush1.bf16.msra.mxu0 %v2025
  %2035 = vmatprep.subr.bf16.mxu0 0
  %2036 = vmatpush1.bf16.msra.mxu0 %v2026
  %2037 = vmatprep.subr.bf16.mxu0 0
  %2038 = vmatpush1.bf16.msra.mxu0 0
  %2039 = vmatprep.subr.bf16.mxu0 0
  %2040 = vmatpush1.bf16.msra.mxu0 0
  %2041 = vmatprep.subr.bf16.mxu0 0
  %2042 = vmatpush1.bf16.msra.mxu0 0
  %2043 = vmatprep.subr.bf16.mxu0 0
  %2044 = vmatpush1.bf16.msra.mxu0 0
  %2045 = vmatprep.subr.bf16.mxu0 0
  %2046 = vmatpush1.bf16.msra.mxu0 0
  %2047 = vmatprep.subr.bf16.mxu0 0
  %2048 = vmatpush1.bf16.msra.mxu0 0
  %2049 = vmatprep.subr.bf16.mxu0 0
  %2050 = vmatpush1.bf16.msra.mxu0 0
  %2051 = vmatprep.subr.bf16.mxu0 0
  %2052 = vmatpush1.bf16.msra.mxu0 0
  %2053 = vmatprep.subr.bf16.mxu0 0
  %2054 = vmatpush1.bf16.msra.mxu0 0
  %2055 = vmatprep.subr.bf16.mxu0 0
  %2056 = vmatpush1.bf16.msra.mxu0 0
  %2057 = vmatprep.subr.bf16.mxu0 0
  %2058 = vmatpush1.bf16.msra.mxu0 0
  %2059 = vmatprep.subr.bf16.mxu0 0
  %2060 = vmatpush1.bf16.msra.mxu0 0
  %2061 = vmatprep.subr.bf16.mxu0 0
  %2062 = vmatpush1.bf16.msra.mxu0 0
  %2063 = vmatprep.subr.bf16.mxu0 0
  %2064 = vmatpush1.bf16.msra.mxu0 0
  %2065 = vmatprep.mubr.bf16.mxu0 0
  %2066 = vmatmul.mubr.bf16.gmra.mrb[0].mxu0 %v2031
  %v2067 = vpop.f32.mrb[0].mxu0
  %v2068 = vadd.f32 %v2015, %v2067
  %v2069 = vpop.f32.mrb[0].mxu0
  %v2070 = vpop.f32.mrb[0].mxu0
  %v2071 = vadd.f32 %v2015, %v2070
  %v2072 = vpop.f32.mrb[0].mxu0
  %2073 = vdwg.mxu0
  %v2074 = vpack.c.bf16 %v2068, %v2068
  %2076 = vrot.lane.b32.xlu0 %v2074, 96
  %v2077 = vpop.permute.xlu0 %2076
  %v2079 = vsel %vm229, %v2074, 0
  %v2082 = vsel %vm229, %v2077, 0
  %2084 = vmatprep.subr.bf16.mxu0 0
  %2085 = vmatpush1.bf16.xpose.msra.mxu0 %v2082
  %2086 = vmatprep.subr.bf16.mxu0 0
  %2087 = vmatpush1.bf16.xpose.msra.mxu0 0
  %2088 = vmatprep.subr.bf16.mxu0 0
  %2089 = vmatpush1.bf16.xpose.msra.mxu0 0
  %2090 = vmatprep.subr.bf16.mxu0 0
  %2091 = vmatpush1.bf16.xpose.msra.mxu0 0
  %2092 = vmatprep.subr.bf16.mxu0 0
  %2093 = vmatpush1.bf16.xpose.msra.mxu0 0
  %2094 = vmatprep.subr.bf16.mxu0 0
  %2095 = vmatpush1.bf16.xpose.msra.mxu0 0
  %2096 = vmatprep.subr.bf16.mxu0 0
  %2097 = vmatpush1.bf16.xpose.msra.mxu0 0
  %2098 = vmatprep.subr.bf16.mxu0 0
  %2099 = vmatpush1.bf16.xpose.msra.mxu0 0
  %2100 = vmatprep.subr.bf16.mxu0 0
  %2101 = vmatpush1.bf16.xpose.msra.mxu0 0
  %2102 = vmatprep.subr.bf16.mxu0 0
  %2103 = vmatpush1.bf16.xpose.msra.mxu0 0
  %2104 = vmatprep.subr.bf16.mxu0 0
  %2105 = vmatpush1.bf16.xpose.msra.mxu0 0
  %2106 = vmatprep.subr.bf16.mxu0 0
  %2107 = vmatpush1.bf16.xpose.msra.mxu0 0
  %2108 = vmatprep.subr.bf16.mxu0 0
  %2109 = vmatpush1.bf16.xpose.msra.mxu0 0
  %2110 = vmatprep.subr.bf16.mxu0 0
  %2111 = vmatpush1.bf16.xpose.msra.mxu0 0
  %2112 = vmatprep.subr.bf16.mxu0 0
  %2113 = vmatpush1.bf16.xpose.msra.mxu0 0
  %2114 = vmatprep.subr.bf16.mxu0 0
  %2115 = vmatpush1.bf16.xpose.msra.mxu0 0
  %2116 = vmatprep.mubr.bf16.mxu0 0
  %2117 = vmatmul.mubr.bf16.gmra.mrb[0].mxu0 %v2079
  %v2118 = vpop.f32.mrb[0].mxu0
  %v2119 = vadd.f32 0.0, %v2118
  %v2120 = vpop.f32.mrb[0].mxu0
  %v2121 = vpop.f32.mrb[0].mxu0
  %v2122 = vpop.f32.mrb[0].mxu0
  %2123 = vdwg.mxu0
  %v2124 = vmul.f32 %v2119, 0.25
  %v2125 = vsel %vm327, %v2124, -inf
  %2126 = vmax.xlane.f32.xlu0 %v2125
  %v2127 = vpop.xlane.xlu0 %2126
  %v2128 = vsub.f32 %v2124, %v2127
  %v2129 = vmul.f32 %v2128, 1.442695
  %v2130 = vpow.pop %v2129
  %v2131 = vsel %vm327, %v2130, 0.0
  %2132 = vadd.xlane.f32.xlu0 %v2131
  %v2133 = vpop.xlane.xlu0 %2132
  %v2134 = vrcp.pop %v2133
  %v2135 = vmul.f32 %v2130, %v2134
  %v2136 = vpack.c.bf16 %v2135, %v2135
  %2137 = vrot.lane.b32.xlu0 %v2074, 64
  %v2138 = vpop.permute.xlu0 %2137
  %v2140 = vsel %vm327, %v2136, 0
  %v2143 = vsel %vm393, %v2138, 0
  %2145 = vmatprep.subr.bf16.mxu0 0
  %2146 = vmatpush1.bf16.msra.mxu0 %v2143
  %2147 = vmatprep.subr.bf16.mxu0 0
  %2148 = vmatpush1.bf16.msra.mxu0 0
  %2149 = vmatprep.subr.bf16.mxu0 0
  %2150 = vmatpush1.bf16.msra.mxu0 0
  %2151 = vmatprep.subr.bf16.mxu0 0
  %2152 = vmatpush1.bf16.msra.mxu0 0
  %2153 = vmatprep.subr.bf16.mxu0 0
  %2154 = vmatpush1.bf16.msra.mxu0 0
  %2155 = vmatprep.subr.bf16.mxu0 0
  %2156 = vmatpush1.bf16.msra.mxu0 0
  %2157 = vmatprep.subr.bf16.mxu0 0
  %2158 = vmatpush1.bf16.msra.mxu0 0
  %2159 = vmatprep.subr.bf16.mxu0 0
  %2160 = vmatpush1.bf16.msra.mxu0 0
  %2161 = vmatprep.subr.bf16.mxu0 0
  %2162 = vmatpush1.bf16.msra.mxu0 0
  %2163 = vmatprep.subr.bf16.mxu0 0
  %2164 = vmatpush1.bf16.msra.mxu0 0
  %2165 = vmatprep.subr.bf16.mxu0 0
  %2166 = vmatpush1.bf16.msra.mxu0 0
  %2167 = vmatprep.subr.bf16.mxu0 0
  %2168 = vmatpush1.bf16.msra.mxu0 0
  %2169 = vmatprep.subr.bf16.mxu0 0
  %2170 = vmatpush1.bf16.msra.mxu0 0
  %2171 = vmatprep.subr.bf16.mxu0 0
  %2172 = vmatpush1.bf16.msra.mxu0 0
  %2173 = vmatprep.subr.bf16.mxu0 0
  %2174 = vmatpush1.bf16.msra.mxu0 0
  %2175 = vmatprep.subr.bf16.mxu0 0
  %2176 = vmatpush1.bf16.msra.mxu0 0
  %2177 = vmatprep.mubr.bf16.mxu0 0
  %2178 = vmatmul.mubr.bf16.gmra.mrb[0].mxu0 %v2140
  %v2179 = vpop.f32.mrb[0].mxu0
  %v2180 = vadd.f32 0.0, %v2179
  %v2181 = vpop.f32.mrb[0].mxu0
  %v2182 = vpop.f32.mrb[0].mxu0
  %v2183 = vpop.f32.mrb[0].mxu0
  %2184 = vdwg.mxu0
  %2185 = vrot.lane.b32.xlu0 %v2074, 112
  %v2186 = vpop.permute.xlu0 %2185
  %2187 = vrot.lane.b32.xlu0 %v2074, 80
  %v2188 = vpop.permute.xlu0 %2187
  %v2190 = vsel %vm229, %v2186, 0
  %v2193 = vsel %vm229, %v2188, 0
  %2195 = vmatprep.subr.bf16.mxu0 0
  %2196 = vmatpush1.bf16.xpose.msra.mxu0 %v2193
  %2197 = vmatprep.subr.bf16.mxu0 0
  %2198 = vmatpush1.bf16.xpose.msra.mxu0 0
  %2199 = vmatprep.subr.bf16.mxu0 0
  %2200 = vmatpush1.bf16.xpose.msra.mxu0 0
  %2201 = vmatprep.subr.bf16.mxu0 0
  %2202 = vmatpush1.bf16.xpose.msra.mxu0 0
  %2203 = vmatprep.subr.bf16.mxu0 0
  %2204 = vmatpush1.bf16.xpose.msra.mxu0 0
  %2205 = vmatprep.subr.bf16.mxu0 0
  %2206 = vmatpush1.bf16.xpose.msra.mxu0 0
  %2207 = vmatprep.subr.bf16.mxu0 0
  %2208 = vmatpush1.bf16.xpose.msra.mxu0 0
  %2209 = vmatprep.subr.bf16.mxu0 0
  %2210 = vmatpush1.bf16.xpose.msra.mxu0 0
  %2211 = vmatprep.subr.bf16.mxu0 0
  %2212 = vmatpush1.bf16.xpose.msra.mxu0 0
  %2213 = vmatprep.subr.bf16.mxu0 0
  %2214 = vmatpush1.bf16.xpose.msra.mxu0 0
  %2215 = vmatprep.subr.bf16.mxu0 0
  %2216 = vmatpush1.bf16.xpose.msra.mxu0 0
  %2217 = vmatprep.subr.bf16.mxu0 0
  %2218 = vmatpush1.bf16.xpose.msra.mxu0 0
  %2219 = vmatprep.subr.bf16.mxu0 0
  %2220 = vmatpush1.bf16.xpose.msra.mxu0 0
  %2221 = vmatprep.subr.bf16.mxu0 0
  %2222 = vmatpush1.bf16.xpose.msra.mxu0 0
  %2223 = vmatprep.subr.bf16.mxu0 0
  %2224 = vmatpush1.bf16.xpose.msra.mxu0 0
  %2225 = vmatprep.subr.bf16.mxu0 0
  %2226 = vmatpush1.bf16.xpose.msra.mxu0 0
  %2227 = vmatprep.mubr.bf16.mxu0 0
  %2228 = vmatmul.mubr.bf16.gmra.mrb[0].mxu0 %v2190
  %v2229 = vpop.f32.mrb[0].mxu0
  %v2230 = vadd.f32 0.0, %v2229
  %v2231 = vpop.f32.mrb[0].mxu0
  %v2232 = vpop.f32.mrb[0].mxu0
  %v2233 = vpop.f32.mrb[0].mxu0
  %2234 = vdwg.mxu0
  %v2235 = vmul.f32 %v2230, 0.25
  %v2236 = vsel %vm327, %v2235, -inf
  %2237 = vmax.xlane.f32.xlu0 %v2236
  %v2238 = vpop.xlane.xlu0 %2237
  %v2239 = vsub.f32 %v2235, %v2238
  %v2240 = vmul.f32 %v2239, 1.442695
  %v2241 = vpow.pop %v2240
  %v2242 = vsel %vm327, %v2241, 0.0
  %2243 = vadd.xlane.f32.xlu0 %v2242
  %v2244 = vpop.xlane.xlu0 %2243
  %v2245 = vrcp.pop %v2244
  %v2246 = vmul.f32 %v2241, %v2245
  %v2247 = vpack.c.bf16 %v2246, %v2246
  %2248 = vrot.lane.b32.xlu0 %v2074, 48
  %v2249 = vpop.permute.xlu0 %2248
  %v2251 = vsel %vm327, %v2247, 0
  %v2254 = vsel %vm393, %v2249, 0
  %2256 = vmatprep.subr.bf16.mxu0 0
  %2257 = vmatpush1.bf16.msra.mxu0 %v2254
  %2258 = vmatprep.subr.bf16.mxu0 0
  %2259 = vmatpush1.bf16.msra.mxu0 0
  %2260 = vmatprep.subr.bf16.mxu0 0
  %2261 = vmatpush1.bf16.msra.mxu0 0
  %2262 = vmatprep.subr.bf16.mxu0 0
  %2263 = vmatpush1.bf16.msra.mxu0 0
  %2264 = vmatprep.subr.bf16.mxu0 0
  %2265 = vmatpush1.bf16.msra.mxu0 0
  %2266 = vmatprep.subr.bf16.mxu0 0
  %2267 = vmatpush1.bf16.msra.mxu0 0
  %2268 = vmatprep.subr.bf16.mxu0 0
  %2269 = vmatpush1.bf16.msra.mxu0 0
  %2270 = vmatprep.subr.bf16.mxu0 0
  %2271 = vmatpush1.bf16.msra.mxu0 0
  %2272 = vmatprep.subr.bf16.mxu0 0
  %2273 = vmatpush1.bf16.msra.mxu0 0
  %2274 = vmatprep.subr.bf16.mxu0 0
  %2275 = vmatpush1.bf16.msra.mxu0 0
  %2276 = vmatprep.subr.bf16.mxu0 0
  %2277 = vmatpush1.bf16.msra.mxu0 0
  %2278 = vmatprep.subr.bf16.mxu0 0
  %2279 = vmatpush1.bf16.msra.mxu0 0
  %2280 = vmatprep.subr.bf16.mxu0 0
  %2281 = vmatpush1.bf16.msra.mxu0 0
  %2282 = vmatprep.subr.bf16.mxu0 0
  %2283 = vmatpush1.bf16.msra.mxu0 0
  %2284 = vmatprep.subr.bf16.mxu0 0
  %2285 = vmatpush1.bf16.msra.mxu0 0
  %2286 = vmatprep.subr.bf16.mxu0 0
  %2287 = vmatpush1.bf16.msra.mxu0 0
  %2288 = vmatprep.mubr.bf16.mxu0 0
  %2289 = vmatmul.mubr.bf16.gmra.mrb[0].mxu0 %v2251
  %v2290 = vpop.f32.mrb[0].mxu0
  %v2291 = vadd.f32 0.0, %v2290
  %v2292 = vpop.f32.mrb[0].mxu0
  %v2293 = vpop.f32.mrb[0].mxu0
  %v2294 = vpop.f32.mrb[0].mxu0
  %2295 = vdwg.mxu0
  %2297 = vrot.lane.b32.xlu0 %v2291, 16
  %v2298 = vpop.permute.xlu0 %2297
  %v2300 = vsel %vm229, %v2180, %v2298
  %v2301 = vpack.c.bf16 %v2071, %v2071
  %2303 = vrot.lane.b32.xlu0 %v2301, 96
  %v2304 = vpop.permute.xlu0 %2303
  %v2306 = vsel %vm229, %v2301, 0
  %v2309 = vsel %vm229, %v2304, 0
  %2311 = vmatprep.subr.bf16.mxu0 0
  %2312 = vmatpush1.bf16.xpose.msra.mxu0 %v2309
  %2313 = vmatprep.subr.bf16.mxu0 0
  %2314 = vmatpush1.bf16.xpose.msra.mxu0 0
  %2315 = vmatprep.subr.bf16.mxu0 0
  %2316 = vmatpush1.bf16.xpose.msra.mxu0 0
  %2317 = vmatprep.subr.bf16.mxu0 0
  %2318 = vmatpush1.bf16.xpose.msra.mxu0 0
  %2319 = vmatprep.subr.bf16.mxu0 0
  %2320 = vmatpush1.bf16.xpose.msra.mxu0 0
  %2321 = vmatprep.subr.bf16.mxu0 0
  %2322 = vmatpush1.bf16.xpose.msra.mxu0 0
  %2323 = vmatprep.subr.bf16.mxu0 0
  %2324 = vmatpush1.bf16.xpose.msra.mxu0 0
  %2325 = vmatprep.subr.bf16.mxu0 0
  %2326 = vmatpush1.bf16.xpose.msra.mxu0 0
  %2327 = vmatprep.subr.bf16.mxu0 0
  %2328 = vmatpush1.bf16.xpose.msra.mxu0 0
  %2329 = vmatprep.subr.bf16.mxu0 0
  %2330 = vmatpush1.bf16.xpose.msra.mxu0 0
  %2331 = vmatprep.subr.bf16.mxu0 0
  %2332 = vmatpush1.bf16.xpose.msra.mxu0 0
  %2333 = vmatprep.subr.bf16.mxu0 0
  %2334 = vmatpush1.bf16.xpose.msra.mxu0 0
  %2335 = vmatprep.subr.bf16.mxu0 0
  %2336 = vmatpush1.bf16.xpose.msra.mxu0 0
  %2337 = vmatprep.subr.bf16.mxu0 0
  %2338 = vmatpush1.bf16.xpose.msra.mxu0 0
  %2339 = vmatprep.subr.bf16.mxu0 0
  %2340 = vmatpush1.bf16.xpose.msra.mxu0 0
  %2341 = vmatprep.subr.bf16.mxu0 0
  %2342 = vmatpush1.bf16.xpose.msra.mxu0 0
  %2343 = vmatprep.mubr.bf16.mxu0 0
  %2344 = vmatmul.mubr.bf16.gmra.mrb[0].mxu0 %v2306
  %v2345 = vpop.f32.mrb[0].mxu0
  %v2346 = vadd.f32 0.0, %v2345
  %v2347 = vpop.f32.mrb[0].mxu0
  %v2348 = vpop.f32.mrb[0].mxu0
  %v2349 = vpop.f32.mrb[0].mxu0
  %2350 = vdwg.mxu0
  %v2351 = vmul.f32 %v2346, 0.25
  %v2352 = vsel %vm327, %v2351, -inf
  %2353 = vmax.xlane.f32.xlu0 %v2352
  %v2354 = vpop.xlane.xlu0 %2353
  %v2355 = vsub.f32 %v2351, %v2354
  %v2356 = vmul.f32 %v2355, 1.442695
  %v2357 = vpow.pop %v2356
  %v2358 = vsel %vm327, %v2357, 0.0
  %2359 = vadd.xlane.f32.xlu0 %v2358
  %v2360 = vpop.xlane.xlu0 %2359
  %v2361 = vrcp.pop %v2360
  %v2362 = vmul.f32 %v2357, %v2361
  %v2363 = vpack.c.bf16 %v2362, %v2362
  %2364 = vrot.lane.b32.xlu0 %v2301, 64
  %v2365 = vpop.permute.xlu0 %2364
  %v2367 = vsel %vm327, %v2363, 0
  %v2370 = vsel %vm393, %v2365, 0
  %2372 = vmatprep.subr.bf16.mxu0 0
  %2373 = vmatpush1.bf16.msra.mxu0 %v2370
  %2374 = vmatprep.subr.bf16.mxu0 0
  %2375 = vmatpush1.bf16.msra.mxu0 0
  %2376 = vmatprep.subr.bf16.mxu0 0
  %2377 = vmatpush1.bf16.msra.mxu0 0
  %2378 = vmatprep.subr.bf16.mxu0 0
  %2379 = vmatpush1.bf16.msra.mxu0 0
  %2380 = vmatprep.subr.bf16.mxu0 0
  %2381 = vmatpush1.bf16.msra.mxu0 0
  %2382 = vmatprep.subr.bf16.mxu0 0
  %2383 = vmatpush1.bf16.msra.mxu0 0
  %2384 = vmatprep.subr.bf16.mxu0 0
  %2385 = vmatpush1.bf16.msra.mxu0 0
  %2386 = vmatprep.subr.bf16.mxu0 0
  %2387 = vmatpush1.bf16.msra.mxu0 0
  %2388 = vmatprep.subr.bf16.mxu0 0
  %2389 = vmatpush1.bf16.msra.mxu0 0
  %2390 = vmatprep.subr.bf16.mxu0 0
  %2391 = vmatpush1.bf16.msra.mxu0 0
  %2392 = vmatprep.subr.bf16.mxu0 0
  %2393 = vmatpush1.bf16.msra.mxu0 0
  %2394 = vmatprep.subr.bf16.mxu0 0
  %2395 = vmatpush1.bf16.msra.mxu0 0
  %2396 = vmatprep.subr.bf16.mxu0 0
  %2397 = vmatpush1.bf16.msra.mxu0 0
  %2398 = vmatprep.subr.bf16.mxu0 0
  %2399 = vmatpush1.bf16.msra.mxu0 0
  %2400 = vmatprep.subr.bf16.mxu0 0
  %2401 = vmatpush1.bf16.msra.mxu0 0
  %2402 = vmatprep.subr.bf16.mxu0 0
  %2403 = vmatpush1.bf16.msra.mxu0 0
  %2404 = vmatprep.mubr.bf16.mxu0 0
  %2405 = vmatmul.mubr.bf16.gmra.mrb[0].mxu0 %v2367
  %v2406 = vpop.f32.mrb[0].mxu0
  %v2407 = vadd.f32 0.0, %v2406
  %v2408 = vpop.f32.mrb[0].mxu0
  %v2409 = vpop.f32.mrb[0].mxu0
  %v2410 = vpop.f32.mrb[0].mxu0
  %2411 = vdwg.mxu0
  %2412 = vrot.lane.b32.xlu0 %v2301, 112
  %v2413 = vpop.permute.xlu0 %2412
  %2414 = vrot.lane.b32.xlu0 %v2301, 80
  %v2415 = vpop.permute.xlu0 %2414
  %v2417 = vsel %vm229, %v2413, 0
  %v2420 = vsel %vm229, %v2415, 0
  %2422 = vmatprep.subr.bf16.mxu0 0
  %2423 = vmatpush1.bf16.xpose.msra.mxu0 %v2420
  %2424 = vmatprep.subr.bf16.mxu0 0
  %2425 = vmatpush1.bf16.xpose.msra.mxu0 0
  %2426 = vmatprep.subr.bf16.mxu0 0
  %2427 = vmatpush1.bf16.xpose.msra.mxu0 0
  %2428 = vmatprep.subr.bf16.mxu0 0
  %2429 = vmatpush1.bf16.xpose.msra.mxu0 0
  %2430 = vmatprep.subr.bf16.mxu0 0
  %2431 = vmatpush1.bf16.xpose.msra.mxu0 0
  %2432 = vmatprep.subr.bf16.mxu0 0
  %2433 = vmatpush1.bf16.xpose.msra.mxu0 0
  %2434 = vmatprep.subr.bf16.mxu0 0
  %2435 = vmatpush1.bf16.xpose.msra.mxu0 0
  %2436 = vmatprep.subr.bf16.mxu0 0
  %2437 = vmatpush1.bf16.xpose.msra.mxu0 0
  %2438 = vmatprep.subr.bf16.mxu0 0
  %2439 = vmatpush1.bf16.xpose.msra.mxu0 0
  %2440 = vmatprep.subr.bf16.mxu0 0
  %2441 = vmatpush1.bf16.xpose.msra.mxu0 0
  %2442 = vmatprep.subr.bf16.mxu0 0
  %2443 = vmatpush1.bf16.xpose.msra.mxu0 0
  %2444 = vmatprep.subr.bf16.mxu0 0
  %2445 = vmatpush1.bf16.xpose.msra.mxu0 0
  %2446 = vmatprep.subr.bf16.mxu0 0
  %2447 = vmatpush1.bf16.xpose.msra.mxu0 0
  %2448 = vmatprep.subr.bf16.mxu0 0
  %2449 = vmatpush1.bf16.xpose.msra.mxu0 0
  %2450 = vmatprep.subr.bf16.mxu0 0
  %2451 = vmatpush1.bf16.xpose.msra.mxu0 0
  %2452 = vmatprep.subr.bf16.mxu0 0
  %2453 = vmatpush1.bf16.xpose.msra.mxu0 0
  %2454 = vmatprep.mubr.bf16.mxu0 0
  %2455 = vmatmul.mubr.bf16.gmra.mrb[0].mxu0 %v2417
  %v2456 = vpop.f32.mrb[0].mxu0
  %v2457 = vadd.f32 0.0, %v2456
  %v2458 = vpop.f32.mrb[0].mxu0
  %v2459 = vpop.f32.mrb[0].mxu0
  %v2460 = vpop.f32.mrb[0].mxu0
  %2461 = vdwg.mxu0
  %v2462 = vmul.f32 %v2457, 0.25
  %v2463 = vsel %vm327, %v2462, -inf
  %2464 = vmax.xlane.f32.xlu0 %v2463
  %v2465 = vpop.xlane.xlu0 %2464
  %v2466 = vsub.f32 %v2462, %v2465
  %v2467 = vmul.f32 %v2466, 1.442695
  %v2468 = vpow.pop %v2467
  %v2469 = vsel %vm327, %v2468, 0.0
  %2470 = vadd.xlane.f32.xlu0 %v2469
  %v2471 = vpop.xlane.xlu0 %2470
  %v2472 = vrcp.pop %v2471
  %v2473 = vmul.f32 %v2468, %v2472
  %v2474 = vpack.c.bf16 %v2473, %v2473
  %2475 = vrot.lane.b32.xlu0 %v2301, 48
  %v2476 = vpop.permute.xlu0 %2475
  %v2478 = vsel %vm327, %v2474, 0
  %v2481 = vsel %vm393, %v2476, 0
  %2483 = vmatprep.subr.bf16.mxu0 0
  %2484 = vmatpush1.bf16.msra.mxu0 %v2481
  %2485 = vmatprep.subr.bf16.mxu0 0
  %2486 = vmatpush1.bf16.msra.mxu0 0
  %2487 = vmatprep.subr.bf16.mxu0 0
  %2488 = vmatpush1.bf16.msra.mxu0 0
  %2489 = vmatprep.subr.bf16.mxu0 0
  %2490 = vmatpush1.bf16.msra.mxu0 0
  %2491 = vmatprep.subr.bf16.mxu0 0
  %2492 = vmatpush1.bf16.msra.mxu0 0
  %2493 = vmatprep.subr.bf16.mxu0 0
  %2494 = vmatpush1.bf16.msra.mxu0 0
  %2495 = vmatprep.subr.bf16.mxu0 0
  %2496 = vmatpush1.bf16.msra.mxu0 0
  %2497 = vmatprep.subr.bf16.mxu0 0
  %2498 = vmatpush1.bf16.msra.mxu0 0
  %2499 = vmatprep.subr.bf16.mxu0 0
  %2500 = vmatpush1.bf16.msra.mxu0 0
  %2501 = vmatprep.subr.bf16.mxu0 0
  %2502 = vmatpush1.bf16.msra.mxu0 0
  %2503 = vmatprep.subr.bf16.mxu0 0
  %2504 = vmatpush1.bf16.msra.mxu0 0
  %2505 = vmatprep.subr.bf16.mxu0 0
  %2506 = vmatpush1.bf16.msra.mxu0 0
  %2507 = vmatprep.subr.bf16.mxu0 0
  %2508 = vmatpush1.bf16.msra.mxu0 0
  %2509 = vmatprep.subr.bf16.mxu0 0
  %2510 = vmatpush1.bf16.msra.mxu0 0
  %2511 = vmatprep.subr.bf16.mxu0 0
  %2512 = vmatpush1.bf16.msra.mxu0 0
  %2513 = vmatprep.subr.bf16.mxu0 0
  %2514 = vmatpush1.bf16.msra.mxu0 0
  %2515 = vmatprep.mubr.bf16.mxu0 0
  %2516 = vmatmul.mubr.bf16.gmra.mrb[0].mxu0 %v2478
  %v2517 = vpop.f32.mrb[0].mxu0
  %v2518 = vadd.f32 0.0, %v2517
  %v2519 = vpop.f32.mrb[0].mxu0
  %v2520 = vpop.f32.mrb[0].mxu0
  %v2521 = vpop.f32.mrb[0].mxu0
  %2522 = vdwg.mxu0
  %2524 = vrot.lane.b32.xlu0 %v2518, 16
  %v2525 = vpop.permute.xlu0 %2524
  %v2527 = vsel %vm229, %v2407, %v2525
  %v2528 = vpack.c.bf16 %v2527, %v2300
  %v2530 = vlaneseq
  %v2531 = vshrl.u32 %v2530, 7
  %v2532 = vsub.s32 0, %v2531
  %v2533 = vrot.slane %v1991, %v2532
  %v2539 = vunpack.c.l.b16 %v1987
  %v2540 = vunpack.c.l.b16 %v1988
  %v2541 = vunpack.c.l.b16 %v1989
  %v2542 = vunpack.c.l.b16 %v1990
  %v2543 = vpack.c.b16 %v2540, %v2539
  %v2544 = vpack.c.b16 %v2542, %v2541
  %v2548 = vsel %vm2029, %v2528, 0
  %2550 = vmatprep.subr.bf16.mxu0 0
  %2551 = vmatpush1.bf16.msra.mxu0 %v2543
  %2552 = vmatprep.subr.bf16.mxu0 0
  %2553 = vmatpush1.bf16.msra.mxu0 %v2544
  %2554 = vmatprep.subr.bf16.mxu0 0
  %2555 = vmatpush1.bf16.msra.mxu0 0
  %2556 = vmatprep.subr.bf16.mxu0 0
  %2557 = vmatpush1.bf16.msra.mxu0 0
  %2558 = vmatprep.subr.bf16.mxu0 0
  %2559 = vmatpush1.bf16.msra.mxu0 0
  %2560 = vmatprep.subr.bf16.mxu0 0
  %2561 = vmatpush1.bf16.msra.mxu0 0
  %2562 = vmatprep.subr.bf16.mxu0 0
  %2563 = vmatpush1.bf16.msra.mxu0 0
  %2564 = vmatprep.subr.bf16.mxu0 0
  %2565 = vmatpush1.bf16.msra.mxu0 0
  %2566 = vmatprep.subr.bf16.mxu0 0
  %2567 = vmatpush1.bf16.msra.mxu0 0
  %2568 = vmatprep.subr.bf16.mxu0 0
  %2569 = vmatpush1.bf16.msra.mxu0 0
  %2570 = vmatprep.subr.bf16.mxu0 0
  %2571 = vmatpush1.bf16.msra.mxu0 0
  %2572 = vmatprep.subr.bf16.mxu0 0
  %2573 = vmatpush1.bf16.msra.mxu0 0
  %2574 = vmatprep.subr.bf16.mxu0 0
  %2575 = vmatpush1.bf16.msra.mxu0 0
  %2576 = vmatprep.subr.bf16.mxu0 0
  %2577 = vmatpush1.bf16.msra.mxu0 0
  %2578 = vmatprep.subr.bf16.mxu0 0
  %2579 = vmatpush1.bf16.msra.mxu0 0
  %2580 = vmatprep.subr.bf16.mxu0 0
  %2581 = vmatpush1.bf16.msra.mxu0 0
  %2582 = vmatprep.mubr.bf16.mxu0 0
  %2583 = vmatmul.mubr.bf16.gmra.mrb[0].mxu0 %v2548
  %v2584 = vpop.f32.mrb[0].mxu0
  %v2585 = vadd.f32 %v2533, %v2584
  %v2586 = vpop.f32.mrb[0].mxu0
  %v2587 = vpop.f32.mrb[0].mxu0
  %v2588 = vadd.f32 %v2533, %v2587
  %v2589 = vpop.f32.mrb[0].mxu0
  %2590 = vdwg.mxu0
  %v2591 = vadd.f32 %v1980, %v2585
  %v2592 = vadd.f32 %v1981, %v2588
  %v2593 = vsel %vm2029, %v2591, 0.0
  %2594 = vadd.xlane.f32.xlu0 %v2593
  %v2595 = vpop.xlane.xlu0 %2594
  %v2596 = vsel %vm2029, %v2592, 0.0
  %2597 = vadd.xlane.f32.xlu0 %v2596
  %v2598 = vpop.xlane.xlu0 %2597
  %v2599 = vrcp.pop 32.0
  %v2600 = vmul.f32 %v2595, %v2599
  %v2601 = vmul.f32 %v2598, %v2599
  %v2602 = vsub.f32 %v2591, %v2600
  %v2603 = vsub.f32 %v2592, %v2601
  %v2604 = vmul.f32 %v2602, %v2602
  %v2605 = vmul.f32 %v2603, %v2603
  %v2606 = vsel %vm2029, %v2604, 0.0
  %2607 = vadd.xlane.f32.xlu0 %v2606
  %v2608 = vpop.xlane.xlu0 %2607
  %v2609 = vsel %vm2029, %v2605, 0.0
  %2610 = vadd.xlane.f32.xlu0 %v2609
  %v2611 = vpop.xlane.xlu0 %2610
  %v2612 = vmul.f32 %v2608, %v2599
  %v2613 = vmul.f32 %v2611, %v2599
  %v2614 = vadd.f32 %v2612, 1e-05
  %v2615 = vadd.f32 %v2613, 1e-05
  %v2616 = vrsqrt.pop %v2614
  %v2617 = vrsqrt.pop %v2615
  %v2618 = vmul.f32 %v2602, %v2616
  %v2619 = vmul.f32 %v2603, %v2617
  %v2621 = vlaneseq
  %v2622 = vshrl.u32 %v2621, 7
  %v2623 = vsub.s32 0, %v2622
  %v2624 = vrot.slane %v2006, %v2623
  %v2626 = vmul.f32 %v2618, %v2624
  %v2627 = vmul.f32 %v2619, %v2624
  %v2629 = vlaneseq
  %v2630 = vshrl.u32 %v2629, 7
  %v2631 = vsub.s32 0, %v2630
  %v2632 = vrot.slane %v2007, %v2631
  %v2634 = vadd.f32 %v2626, %v2632
  %v2635 = vadd.f32 %v2627, %v2632
  %v2636 = vpack.c.bf16 %v2635, %v2634
  %v2638 = vlaneseq
  %v2639 = vshrl.u32 %v2638, 7
  %v2640 = vsub.s32 0, %v2639
  %v2641 = vrot.slane %v1996, %v2640
  %v2647 = vunpack.c.l.b16 %v1992
  %v2648 = vunpack.c.l.b16 %v1993
  %v2649 = vunpack.c.l.b16 %v1994
  %v2650 = vunpack.c.l.b16 %v1995
  %v2651 = vpack.c.b16 %v2648, %v2647
  %v2652 = vpack.c.b16 %v2650, %v2649
  %v2656 = vsel %vm2029, %v2636, 0
  %2658 = vmatprep.subr.bf16.mxu0 0
  %2659 = vmatpush1.bf16.msra.mxu0 %v2651
  %2660 = vmatprep.subr.bf16.mxu0 0
  %2661 = vmatpush1.bf16.msra.mxu0 %v2652
  %2662 = vmatprep.subr.bf16.mxu0 0
  %2663 = vmatpush1.bf16.msra.mxu0 0
  %2664 = vmatprep.subr.bf16.mxu0 0
  %2665 = vmatpush1.bf16.msra.mxu0 0
  %2666 = vmatprep.subr.bf16.mxu0 0
  %2667 = vmatpush1.bf16.msra.mxu0 0
  %2668 = vmatprep.subr.bf16.mxu0 0
  %2669 = vmatpush1.bf16.msra.mxu0 0
  %2670 = vmatprep.subr.bf16.mxu0 0
  %2671 = vmatpush1.bf16.msra.mxu0 0
  %2672 = vmatprep.subr.bf16.mxu0 0
  %2673 = vmatpush1.bf16.msra.mxu0 0
  %2674 = vmatprep.subr.bf16.mxu0 0
  %2675 = vmatpush1.bf16.msra.mxu0 0
  %2676 = vmatprep.subr.bf16.mxu0 0
  %2677 = vmatpush1.bf16.msra.mxu0 0
  %2678 = vmatprep.subr.bf16.mxu0 0
  %2679 = vmatpush1.bf16.msra.mxu0 0
  %2680 = vmatprep.subr.bf16.mxu0 0
  %2681 = vmatpush1.bf16.msra.mxu0 0
  %2682 = vmatprep.subr.bf16.mxu0 0
  %2683 = vmatpush1.bf16.msra.mxu0 0
  %2684 = vmatprep.subr.bf16.mxu0 0
  %2685 = vmatpush1.bf16.msra.mxu0 0
  %2686 = vmatprep.subr.bf16.mxu0 0
  %2687 = vmatpush1.bf16.msra.mxu0 0
  %2688 = vmatprep.subr.bf16.mxu0 0
  %2689 = vmatpush1.bf16.msra.mxu0 0
  %2690 = vmatprep.mubr.bf16.mxu0 0
  %2691 = vmatmul.mubr.bf16.gmra.mrb[0].mxu0 %v2656
  %v2692 = vpop.f32.mrb[0].mxu0
  %v2693 = vadd.f32 %v2641, %v2692
  %v2694 = vpop.f32.mrb[0].mxu0
  %v2695 = vpop.f32.mrb[0].mxu0
  %v2696 = vadd.f32 %v2641, %v2695
  %v2697 = vpop.f32.mrb[0].mxu0
  %2698 = vdwg.mxu0
  %v2699 = vmax.f32 %v2693, 0.0
  %v2700 = vmax.f32 %v2696, 0.0
  %v2701 = vpack.c.bf16 %v2700, %v2699
  %v2703 = vlaneseq
  %v2704 = vshrl.u32 %v2703, 7
  %v2705 = vsub.s32 0, %v2704
  %v2706 = vrot.slane %v2005, %v2705
  %v2716 = vunpack.c.l.b16 %v1997
  %v2717 = vunpack.c.l.b16 %v1998
  %v2718 = vunpack.c.l.b16 %v1999
  %v2719 = vunpack.c.l.b16 %v2000
  %v2720 = vunpack.c.l.b16 %v2001
  %v2721 = vunpack.c.l.b16 %v2002
  %v2722 = vunpack.c.l.b16 %v2003
  %v2723 = vunpack.c.l.b16 %v2004
  %v2724 = vpack.c.b16 %v2717, %v2716
  %v2725 = vpack.c.b16 %v2719, %v2718
  %v2726 = vpack.c.b16 %v2721, %v2720
  %v2727 = vpack.c.b16 %v2723, %v2722
  %v2733 = vsel %vm973, %v2701, 0
  %2735 = vmatprep.subr.bf16.mxu0 0
  %2736 = vmatpush1.bf16.msra.mxu0 %v2724
  %2737 = vmatprep.subr.bf16.mxu0 0
  %2738 = vmatpush1.bf16.msra.mxu0 %v2725
  %2739 = vmatprep.subr.bf16.mxu0 0
  %2740 = vmatpush1.bf16.msra.mxu0 %v2726
  %2741 = vmatprep.subr.bf16.mxu0 0
  %2742 = vmatpush1.bf16.msra.mxu0 %v2727
  %2743 = vmatprep.subr.bf16.mxu0 0
  %2744 = vmatpush1.bf16.msra.mxu0 0
  %2745 = vmatprep.subr.bf16.mxu0 0
  %2746 = vmatpush1.bf16.msra.mxu0 0
  %2747 = vmatprep.subr.bf16.mxu0 0
  %2748 = vmatpush1.bf16.msra.mxu0 0
  %2749 = vmatprep.subr.bf16.mxu0 0
  %2750 = vmatpush1.bf16.msra.mxu0 0
  %2751 = vmatprep.subr.bf16.mxu0 0
  %2752 = vmatpush1.bf16.msra.mxu0 0
  %2753 = vmatprep.subr.bf16.mxu0 0
  %2754 = vmatpush1.bf16.msra.mxu0 0
  %2755 = vmatprep.subr.bf16.mxu0 0
  %2756 = vmatpush1.bf16.msra.mxu0 0
  %2757 = vmatprep.subr.bf16.mxu0 0
  %2758 = vmatpush1.bf16.msra.mxu0 0
  %2759 = vmatprep.subr.bf16.mxu0 0
  %2760 = vmatpush1.bf16.msra.mxu0 0
  %2761 = vmatprep.subr.bf16.mxu0 0
  %2762 = vmatpush1.bf16.msra.mxu0 0
  %2763 = vmatprep.subr.bf16.mxu0 0
  %2764 = vmatpush1.bf16.msra.mxu0 0
  %2765 = vmatprep.subr.bf16.mxu0 0
  %2766 = vmatpush1.bf16.msra.mxu0 0
  %2767 = vmatprep.mubr.bf16.mxu0 0
  %2768 = vmatmul.mubr.bf16.gmra.mrb[0].mxu0 %v2733
  %v2769 = vpop.f32.mrb[0].mxu0
  %v2770 = vadd.f32 %v2706, %v2769
  %v2771 = vpop.f32.mrb[0].mxu0
  %v2772 = vpop.f32.mrb[0].mxu0
  %v2773 = vadd.f32 %v2706, %v2772
  %v2774 = vpop.f32.mrb[0].mxu0
  %2775 = vdwg.mxu0
  %v2776 = vadd.f32 %v2634, %v2770
  %v2777 = vadd.f32 %v2635, %v2773
  %v2778 = vsel %vm2029, %v2776, 0.0
  %2779 = vadd.xlane.f32.xlu0 %v2778
  %v2780 = vpop.xlane.xlu0 %2779
  %v2781 = vsel %vm2029, %v2777, 0.0
  %2782 = vadd.xlane.f32.xlu0 %v2781
  %v2783 = vpop.xlane.xlu0 %2782
  %v2784 = vmul.f32 %v2780, %v2599
  %v2785 = vmul.f32 %v2783, %v2599
  %v2786 = vsub.f32 %v2776, %v2784
  %v2787 = vsub.f32 %v2777, %v2785
  %v2788 = vmul.f32 %v2786, %v2786
  %v2789 = vmul.f32 %v2787, %v2787
  %v2790 = vsel %vm2029, %v2788, 0.0
  %2791 = vadd.xlane.f32.xlu0 %v2790
  %v2792 = vpop.xlane.xlu0 %2791
  %v2793 = vsel %vm2029, %v2789, 0.0
  %2794 = vadd.xlane.f32.xlu0 %v2793
  %v2795 = vpop.xlane.xlu0 %2794
  %v2796 = vmul.f32 %v2792, %v2599
  %v2797 = vmul.f32 %v2795, %v2599
  %v2798 = vadd.f32 %v2796, 1e-05
  %v2799 = vadd.f32 %v2797, 1e-05
  %v2800 = vrsqrt.pop %v2798
  %v2801 = vrsqrt.pop %v2799
  %v2802 = vmul.f32 %v2786, %v2800
  %v2803 = vmul.f32 %v2787, %v2801
  %v2805 = vlaneseq
  %v2806 = vshrl.u32 %v2805, 7
  %v2807 = vsub.s32 0, %v2806
  %v2808 = vrot.slane %v2008, %v2807
  %v2810 = vmul.f32 %v2802, %v2808
  %v2811 = vmul.f32 %v2803, %v2808
  %v2813 = vlaneseq
  %v2814 = vshrl.u32 %v2813, 7
  %v2815 = vsub.s32 0, %v2814
  %v2816 = vrot.slane %v2009, %v2815
  %v2818 = vadd.f32 %v2810, %v2816
  %v2819 = vadd.f32 %v2811, %v2816
  %v2820 = vld [vmem:[%s77] sm:$0xf]
  %v2821 = vld [vmem:[%s77 + $0x4] sm:$0xf]
  %v2822 = vld [vmem:[%s77 + $0x8] sm:$0xf]
  %v2823 = vld [vmem:[%s77 + $0xc] sm:$0xf]
  %v2824 = vld [vmem:[%s79] sm:$0x1]
  %v2825 = vpack.c.bf16 %v2819, %v2818
  %v2827 = vlaneseq
  %v2828 = vshrl.u32 %v2827, 7
  %v2829 = vsub.s32 0, %v2828
  %v2830 = vrot.slane %v2824, %v2829
  %v2836 = vunpack.c.l.b16 %v2820
  %v2837 = vunpack.c.l.b16 %v2821
  %v2838 = vunpack.c.l.b16 %v2822
  %v2839 = vunpack.c.l.b16 %v2823
  %v2840 = vpack.c.b16 %v2837, %v2836
  %v2841 = vpack.c.b16 %v2839, %v2838
  %v2845 = vsel %vm2029, %v2825, 0
  %2847 = vmatprep.subr.bf16.mxu0 0
  %2848 = vmatpush1.bf16.msra.mxu0 %v2840
  %2849 = vmatprep.subr.bf16.mxu0 0
  %2850 = vmatpush1.bf16.msra.mxu0 %v2841
  %2851 = vmatprep.subr.bf16.mxu0 0
  %2852 = vmatpush1.bf16.msra.mxu0 0
  %2853 = vmatprep.subr.bf16.mxu0 0
  %2854 = vmatpush1.bf16.msra.mxu0 0
  %2855 = vmatprep.subr.bf16.mxu0 0
  %2856 = vmatpush1.bf16.msra.mxu0 0
  %2857 = vmatprep.subr.bf16.mxu0 0
  %2858 = vmatpush1.bf16.msra.mxu0 0
  %2859 = vmatprep.subr.bf16.mxu0 0
  %2860 = vmatpush1.bf16.msra.mxu0 0
  %2861 = vmatprep.subr.bf16.mxu0 0
  %2862 = vmatpush1.bf16.msra.mxu0 0
  %2863 = vmatprep.subr.bf16.mxu0 0
  %2864 = vmatpush1.bf16.msra.mxu0 0
  %2865 = vmatprep.subr.bf16.mxu0 0
  %2866 = vmatpush1.bf16.msra.mxu0 0
  %2867 = vmatprep.subr.bf16.mxu0 0
  %2868 = vmatpush1.bf16.msra.mxu0 0
  %2869 = vmatprep.subr.bf16.mxu0 0
  %2870 = vmatpush1.bf16.msra.mxu0 0
  %2871 = vmatprep.subr.bf16.mxu0 0
  %2872 = vmatpush1.bf16.msra.mxu0 0
  %2873 = vmatprep.subr.bf16.mxu0 0
  %2874 = vmatpush1.bf16.msra.mxu0 0
  %2875 = vmatprep.subr.bf16.mxu0 0
  %2876 = vmatpush1.bf16.msra.mxu0 0
  %2877 = vmatprep.subr.bf16.mxu0 0
  %2878 = vmatpush1.bf16.msra.mxu0 0
  %2879 = vmatprep.mubr.bf16.mxu0 0
  %2880 = vmatmul.mubr.bf16.gmra.mrb[0].mxu0 %v2845
  %v2881 = vpop.f32.mrb[0].mxu0
  %v2882 = vadd.f32 %v2830, %v2881
  %v2883 = vpop.f32.mrb[0].mxu0
  %v2884 = vpop.f32.mrb[0].mxu0
  %v2885 = vadd.f32 %v2830, %v2884
  %v2886 = vpop.f32.mrb[0].mxu0
  %2887 = vdwg.mxu0
  %v2888 = vmax.f32 %v2882, 0.0
  %v2889 = vmax.f32 %v2885, 0.0
  %v2890 = vld [vmem:[%s81] sm:$0xf]
  %v2891 = vld [vmem:[%s81 + $0x4] sm:$0xf]
  %v2892 = vld [vmem:[%s83] sm:$0x1]
  %v2893 = vpack.c.bf16 %v2889, %v2888
  %v2895 = vlaneseq
  %v2896 = vshrl.u32 %v2895, 7
  %v2897 = vsub.s32 0, %v2896
  %v2898 = vrot.slane %v2892, %v2897
  %v2902 = vunpack.c.l.b16 %v2890
  %v2903 = vunpack.c.l.b16 %v2891
  %v2904 = vpack.c.b16 %v2903, %v2902
  %v2907 = vsel %vm229, %v2893, 0
  %2909 = vmatprep.subr.bf16.mxu0 0
  %2910 = vmatpush1.bf16.msra.mxu0 %v2904
  %2911 = vmatprep.subr.bf16.mxu0 0
  %2912 = vmatpush1.bf16.msra.mxu0 0
  %2913 = vmatprep.subr.bf16.mxu0 0
  %2914 = vmatpush1.bf16.msra.mxu0 0
  %2915 = vmatprep.subr.bf16.mxu0 0
  %2916 = vmatpush1.bf16.msra.mxu0 0
  %2917 = vmatprep.subr.bf16.mxu0 0
  %2918 = vmatpush1.bf16.msra.mxu0 0
  %2919 = vmatprep.subr.bf16.mxu0 0
  %2920 = vmatpush1.bf16.msra.mxu0 0
  %2921 = vmatprep.subr.bf16.mxu0 0
  %2922 = vmatpush1.bf16.msra.mxu0 0
  %2923 = vmatprep.subr.bf16.mxu0 0
  %2924 = vmatpush1.bf16.msra.mxu0 0
  %2925 = vmatprep.subr.bf16.mxu0 0
  %2926 = vmatpush1.bf16.msra.mxu0 0
  %2927 = vmatprep.subr.bf16.mxu0 0
  %2928 = vmatpush1.bf16.msra.mxu0 0
  %2929 = vmatprep.subr.bf16.mxu0 0
  %2930 = vmatpush1.bf16.msra.mxu0 0
  %2931 = vmatprep.subr.bf16.mxu0 0
  %2932 = vmatpush1.bf16.msra.mxu0 0
  %2933 = vmatprep.subr.bf16.mxu0 0
  %2934 = vmatpush1.bf16.msra.mxu0 0
  %2935 = vmatprep.subr.bf16.mxu0 0
  %2936 = vmatpush1.bf16.msra.mxu0 0
  %2937 = vmatprep.subr.bf16.mxu0 0
  %2938 = vmatpush1.bf16.msra.mxu0 0
  %2939 = vmatprep.subr.bf16.mxu0 0
  %2940 = vmatpush1.bf16.msra.mxu0 0
  %2941 = vmatprep.mubr.bf16.mxu0 0
  %2942 = vmatmul.mubr.bf16.gmra.mrb[0].mxu0 %v2907
  %v2943 = vpop.f32.mrb[0].mxu0
  %v2944 = vadd.f32 %v2898, %v2943
  %v2945 = vpop.f32.mrb[0].mxu0
  %v2946 = vpop.f32.mrb[0].mxu0
  %v2947 = vadd.f32 %v2898, %v2946
  %v2948 = vpop.f32.mrb[0].mxu0
  %2949 = vdwg.mxu0
  %vm2950 = vcmask 31744
  %2951 = vst.msk [vmem:[%s85] sm:$0xff] %vm2950, %v2944
  %2952 = vst.msk [vmem:[%s85 + $0x8] sm:$0xff] %vm2950, %v2947
  // Predicated region
  $region170: #{_lambda_.1} parent=0 // pred_check
    _
  $region171: #{_lambda_.1} parent=0 // pred_check_branch
    %2954 = sbr.rel (0) target = $region173
  $region172: #{_lambda_.1} parent=0 // pred_region
    _
  $region173: #{_lambda_.1} parent=0 // pred_fallthru
    _
  // Predicated region
  $region174: #{_lambda_.1} parent=0 // pred_check
    _
  $region175: #{_lambda_.1} parent=0 // pred_check_branch
    %2956 = sbr.rel (0) target = $region177
  $region176: #{_lambda_.1} parent=0 // pred_region
    _
  $region177: #{_lambda_.1} parent=0 // pred_fallthru
    _

</llo_original>
